<compile_context>
chip_gen: v7x
topology: tpu7x:2x2x1
jax: 0.10.0
libtpu: 0.0.40
codegen_flags: <defaults>
</compile_context>

<pallas_src>
import functools

import jax
import jax.numpy as jnp
from jax.experimental import pallas as pl
from jax.experimental.pallas import tpu as pltpu


# ---------------------------------------------------------------------------
# Fused trunk kernel: one grid step = one B_TILE-image batch tile.
# ---------------------------------------------------------------------------
def _kdfpn_trunk_kernel(x0_ref, w0_ref, w1a_ref, w1b_ref, w2a_ref, w2b_ref,
                        wd_ref, b_ref,
                        out0_ref, out1_ref,
                        pad0_ref, pad1_ref,
                        *, B, Hs, Q, C0, C1, Cs2d, K0, D0, D1, D2):
    f32 = jnp.float32
    bt = b_ref[...]                                     # (6, C1) folded-BN biases

    # ---- helpers -----------------------------------------------------------
    def im2col_dot(xp, K, S, Cin, w_ref, bias, D):
        """Stride-1 KxK conv over padded xp (B, S+K-1, S+K-1, Cin) as one deep
        MXU matmul; the (M, D) patch is built in registers by lane-concatenating
        the K*K taps (no narrow masked scratch stores)."""
        M = B * S * S
        taps = [xp[:, kh:kh + S, kw:kw + S, :].reshape(M, Cin)
                for kh in range(K) for kw in range(K)]
        used = K * K * Cin
        if D > used:                                    # pad contraction to 128k
            taps.append(jnp.zeros((M, D - used), f32))
        patch = jnp.concatenate(taps, axis=-1)          # (M, D)
        return jnp.dot(patch, w_ref[...], preferred_element_type=f32) + bias

    def zero_border(ref, S, C):
        """Zero only the 1-px border of a pad scratch; its interior is fully
        rewritten before every use.  Done unconditionally every grid step so
        the megacore 'parallel' split stays correct."""
        zr = jnp.zeros((B, 1, S + 2, C), f32)
        zc = jnp.zeros((B, S + 2, 1, C), f32)
        ref[:, 0:1, :, :] = zr
        ref[:, S + 1:S + 2, :, :] = zr
        ref[:, :, 0:1, :] = zc
        ref[:, :, S + 1:S + 2, :] = zc

    def pick_even(v, C):
        """Stride-2 spatial subsample of dense conv rows (b, i, j) -> keep even
        i, j -- layout-preserving reshapes + static slices (no sel matmul)."""
        v = v.reshape(B * Hs * Q, 2, C)[:, 0, :]        # drop odd columns
        v = v.reshape(B * Q, 2, Q, C)[:, 0, :, :]       # drop odd rows
        return v.reshape(B * Q * Q, C)

    def flatten_rows(v, S, C):
        """(B*S*S, C) -> (B, S*S*C) lane-dense output layout using only lane
        concatenation (avoids a minor-dim-merging reshape)."""
        v4 = v.reshape(B, S, S, C)
        rows = jnp.concatenate([v4[:, :, j, :] for j in range(S)], axis=-1)
        return jnp.concatenate([rows[:, i, :] for i in range(S)], axis=-1)

    # ---- border-zero pad scratch (once per grid step) ----------------------
    zero_border(pad0_ref, Hs, C0)
    zero_border(pad1_ref, Q, C1)

    # ---- stem: 7x7 s2 conv, folded (space-to-depth) to a dense 4x4 s1 conv -
    h = jnp.maximum(
        im2col_dot(x0_ref[...], K0, Hs, Cs2d, w0_ref, bt[0:1, :C0], D0), 0.0)

    # ---- stage 0: BasicBlock, stride 1, C0 -> C0 ---------------------------
    pad0_ref[:, 1:Hs + 1, 1:Hs + 1, :] = h.reshape(B, Hs, Hs, C0)
    y = jnp.maximum(
        im2col_dot(pad0_ref[...], 3, Hs, C0, w1a_ref, bt[1:2, :C0], D1), 0.0)
    pad0_ref[:, 1:Hs + 1, 1:Hs + 1, :] = y.reshape(B, Hs, Hs, C0)
    y = im2col_dot(pad0_ref[...], 3, Hs, C0, w1b_ref, bt[2:3, :C0], D1)
    h = jnp.maximum(y + h, 0.0)                         # residual add + ReLU
    out0_ref[0] = flatten_rows(h, Hs, C0)               # lane-dense store (512)

    # ---- stage 1: BasicBlock, stride 2, C0 -> C1 ---------------------------
    pad0_ref[:, 1:Hs + 1, 1:Hs + 1, :] = h.reshape(B, Hs, Hs, C0)
    yd = im2col_dot(pad0_ref[...], 3, Hs, C0, w2a_ref, bt[3:4, :C1], D1)
    y1 = jnp.maximum(pick_even(yd, C1), 0.0)            # (B*Q*Q, C1)
    # identity path: stride-2 pick, then 1x1 downsample + folded BN
    idn = jnp.dot(pick_even(h, C0), wd_ref[...],
                  preferred_element_type=f32) + bt[5:6, :C1]
    # conv2 (stride 1) + residual + ReLU
    pad1_ref[:, 1:Q + 1, 1:Q + 1, :] = y1.reshape(B, Q, Q, C1)
    y2 = im2col_dot(pad1_ref[...], 3, Q, C1, w2b_ref, bt[4:5, :C1], D2)
    out1_ref[0] = flatten_rows(jnp.maximum(y2 + idn, 0.0), Q, C1)  # 256 lanes


# ---------------------------------------------------------------------------
# Forward pass (mirrors KDFPN.forward), NCHW in / NCHW out.
# ---------------------------------------------------------------------------
def kdfpn_forward(x_nchw, params):
    x = x_nchw.astype(jnp.float32)
    N, Cin, H, W = x.shape
    assert H == W and H % 4 == 0, "toy trunk assumes square inputs, H % 4 == 0"
    Hs, Q = H // 2, H // 4          # stem/stage-0 and stage-1 spatial extents
    C0 = params["stem"]["w"].shape[-1]
    C1 = params["stages"][1]["conv1"]["w"].shape[-1]
    Cs2d, K0 = 4 * Cin, 4           # space-to-depth channels / stem kernel size
    Hp0 = Hs + 3                    # padded s2d stem input extent

    def rup128(v):
        return ((v + 127) // 128) * 128

    # contraction widths, zero-padded to multiples of 128
    D0, D1, D2 = rup128(K0 * K0 * Cs2d), rup128(9 * C0), rup128(9 * C1)

    # ---- batch tile: fold images into one grid step so every matmul gets
    #      M = B_TILE*Hs*Hs rows (target >= 256; >=128 already fills v5e).
    B_TILE = 1
    for d in range(1, N + 1):
        if N % d == 0:
            B_TILE = d
            if d * Hs * Hs >= 256:
                break
    G = N // B_TILE
    # TODO(synk): for large N on v7x keep G a multiple of 2 (two TensorCores).

    # ---- stem input prep: NCHW->NHWC, pad 3, fold stride 2 into channels ---
    xh = jnp.transpose(x, (0, 2, 3, 1))
    xpad = jnp.pad(xh, ((0, 0), (3, 3), (3, 3), (0, 0)))       # (N,2Hp0,2Hp0,Cin)
    x0 = (xpad.reshape(N, Hp0, 2, Hp0, 2, Cin)
              .transpose(0, 1, 3, 2, 4, 5)
              .reshape(N, Hp0, Hp0, Cs2d))

    # ---- weights: fold BN scale, flatten, zero-pad contraction to 128k -----
    def fold_pad(p, D):
        w = (p["w"] * p["s"]).astype(jnp.float32)
        k, _, ci, _ = p["w"].shape
        wm = w.reshape(k * k * ci, w.shape[-1])
        return jnp.pad(wm, ((0, D - k * k * ci), (0, 0)))

    stem = params["stem"]
    w0 = stem["w"] * stem["s"]
    w0 = jnp.pad(w0, ((0, 1), (0, 1), (0, 0), (0, 0)))          # 7x7 -> 8x8
    W0 = (w0.reshape(K0, 2, K0, 2, Cin, C0)
            .transpose(0, 2, 1, 3, 4, 5)
            .reshape(K0 * K0 * Cs2d, C0)).astype(jnp.float32)
    W0 = jnp.pad(W0, ((0, D0 - W0.shape[0]), (0, 0)))

    s0, s1 = params["stages"]
    W1a, W1b = fold_pad(s0["conv1"], D1), fold_pad(s0["conv2"], D1)
    W2a, W2b = fold_pad(s1["conv1"], D1), fold_pad(s1["conv2"], D2)
    Wd = (s1["down"]["w"] * s1["down"]["s"]).reshape(C0, C1).astype(jnp.float32)

    # ---- folded BN biases, one small table ---------------------------------
    Bt = jnp.zeros((6, C1), jnp.float32)
    Bt = Bt.at[0, :C0].set(stem["b"])
    Bt = Bt.at[1, :C0].set(s0["conv1"]["b"])
    Bt = Bt.at[2, :C0].set(s0["conv2"]["b"])
    Bt = Bt.at[3, :].set(s1["conv1"]["b"])
    Bt = Bt.at[4, :].set(s1["conv2"]["b"])
    Bt = Bt.at[5, :].set(s1["down"]["b"])

    kern = functools.partial(_kdfpn_trunk_kernel, B=B_TILE, Hs=Hs, Q=Q, C0=C0,
                             C1=C1, Cs2d=Cs2d, K0=K0, D0=D0, D1=D1, D2=D2)

    def full_spec(a):
        z = (0,) * a.ndim
        return pl.BlockSpec(a.shape, lambda n, _z=z: _z)

    out0, out1 = pl.pallas_call(
        kern,
        out_shape=(
            jax.ShapeDtypeStruct((G, B_TILE, Hs * Hs * C0), jnp.float32),
            jax.ShapeDtypeStruct((G, B_TILE, Q * Q * C1), jnp.float32)),
        grid=(G,),
        in_specs=[
            pl.BlockSpec((B_TILE, Hp0, Hp0, Cs2d), lambda n: (n, 0, 0, 0)),
            full_spec(W0), full_spec(W1a), full_spec(W1b),
            full_spec(W2a), full_spec(W2b), full_spec(Wd), full_spec(Bt),
        ],
        out_specs=(
            pl.BlockSpec((1, B_TILE, Hs * Hs * C0), lambda n: (n, 0, 0)),
            pl.BlockSpec((1, B_TILE, Q * Q * C1), lambda n: (n, 0, 0))),
        scratch_shapes=[
            pltpu.VMEM((B_TILE, Hs + 2, Hs + 2, C0), jnp.float32),  # pad buf 0
            pltpu.VMEM((B_TILE, Q + 2, Q + 2, C1), jnp.float32),    # pad buf 1
        ],
        compiler_params=pltpu.CompilerParams(
            dimension_semantics=("parallel",)),
    )(x0, W0, W1a, W1b, W2a, W2b, Wd, Bt)

    h0 = jnp.transpose(out0.reshape(N, Hs, Hs, C0), (0, 3, 1, 2))
    h1 = jnp.transpose(out1.reshape(N, Q, Q, C1), (0, 3, 1, 2))
    return [x, h0, h1]


# ---------------------------------------------------------------------------
# Parameter construction (deterministic, synthetic trunk)
# ---------------------------------------------------------------------------
def _fold_bn(gamma, beta, mean, var, eps=1e-5):
    scale = gamma / jnp.sqrt(var + eps)
    bias = beta - mean * scale
    return scale, bias


def _conv_bn_params(key, k, cin, cout):
    kw, kg, kb, km, kv = jax.random.split(key, 5)
    w = jax.random.normal(kw, (k, k, cin, cout), jnp.float32) * 0.1
    gamma = 1.0 + 0.1 * jax.random.normal(kg, (cout,), jnp.float32)
    beta = 0.1 * jax.random.normal(kb, (cout,), jnp.float32)
    mean = 0.1 * jax.random.normal(km, (cout,), jnp.float32)
    var = jnp.abs(jax.random.normal(kv, (cout,), jnp.float32)) + 0.5
    scale, bias = _fold_bn(gamma, beta, mean, var)
    return {"w": w, "s": scale, "b": bias}


def build_kdfpn_params(key, in_channels=4, base_channels=8):
    keys = jax.random.split(key, 8)
    params = {
        "stem": _conv_bn_params(keys[0], 7, in_channels, base_channels),
        "stages": [],
    }
    c0 = base_channels
    params["stages"].append({            # stage 0: 8 -> 8, stride 1
        "stride": 1,
        "conv1": _conv_bn_params(keys[1], 3, c0, c0),
        "conv2": _conv_bn_params(keys[2], 3, c0, c0),
        "down": None,
    })
    c1 = base_channels * 2
    params["stages"].append({            # stage 1: 8 -> 16, stride 2 (+1x1 down)
        "stride": 2,
        "conv1": _conv_bn_params(keys[3], 3, c0, c1),
        "conv2": _conv_bn_params(keys[4], 3, c1, c1),
        "down": _conv_bn_params(keys[5], 1, c0, c1),
    })
    return params


# ---------------------------------------------------------------------------
# Pure-JAX reference (lax.conv) for a correctness check
# ---------------------------------------------------------------------------
def _ref_conv(x, p, stride, padding, relu, residual=None):
    y = jax.lax.conv_general_dilated(
        x, p["w"], (stride, stride), [(padding, padding)] * 2,
        dimension_numbers=("NHWC", "HWIO", "NHWC"))
    y = y * p["s"] + p["b"]
    if residual is not None:
        y = y + residual
    if relu:
        y = jnp.maximum(y, 0.0)
    return y


def kdfpn_forward_ref(x_nchw, params):
    x = x_nchw.astype(jnp.float32)
    outs = [x]
    h = jnp.transpose(x, (0, 2, 3, 1))
    h = _ref_conv(h, params["stem"], 2, 3, True)
    for blk in params["stages"]:
        idt = h
        o = _ref_conv(h, blk["conv1"], blk["stride"], 1, True)
        if blk["down"] is not None:
            idt = _ref_conv(h, blk["down"], blk["stride"], 0, False)
        h = _ref_conv(o, blk["conv2"], 1, 1, True, residual=idt)
        outs.append(jnp.transpose(h, (0, 3, 1, 2)))
    return outs


if __name__ == "__main__":
    key = jax.random.PRNGKey(0)
    kx, kp = jax.random.split(key)
    x = jax.random.normal(kx, (2, 4, 16, 16), jnp.float32)   # NCHW like PyTorch
    params = build_kdfpn_params(kp, in_channels=4, base_channels=8)

    fwd = jax.jit(kdfpn_forward)
    outs = fwd(x, params)
    outs = [jax.block_until_ready(o) for o in outs]

    ref_outs = kdfpn_forward_ref(x, params)
    assert len(outs) == len(ref_outs) == 3
    for o, r in zip(outs, ref_outs):
        assert o.shape == r.shape and o.dtype == jnp.float32
        assert jnp.allclose(o, r, atol=1e-4, rtol=1e-4), \
            float(jnp.max(jnp.abs(o - r)))

    print("KERNEL_OK")
</pallas_src>

<mosaic_0001>
module attributes {stable_mosaic.version = 11 : i64} {
  func.func @_kdfpn_trunk_kernel(%arg0: i32, %arg1: memref<2x11x11x16xf32, #tpu.memory_space<vmem>>, %arg2: memref<256x8xf32, #tpu.memory_space<vmem>>, %arg3: memref<128x8xf32, #tpu.memory_space<vmem>>, %arg4: memref<128x8xf32, #tpu.memory_space<vmem>>, %arg5: memref<128x16xf32, #tpu.memory_space<vmem>>, %arg6: memref<256x16xf32, #tpu.memory_space<vmem>>, %arg7: memref<8x16xf32, #tpu.memory_space<vmem>>, %arg8: memref<6x16xf32, #tpu.memory_space<vmem>>, %arg9: memref<1x2x512xf32, #tpu.memory_space<vmem>>, %arg10: memref<1x2x256xf32, #tpu.memory_space<vmem>>, %arg11: memref<2x10x10x8xf32, #tpu.memory_space<vmem>>, %arg12: memref<2x6x6x16xf32, #tpu.memory_space<vmem>>) attributes {dimension_semantics = [#tpu.dimension_semantics<parallel>], iteration_bounds = array<i64: 1>, scalar_prefetch = 0 : i64, scratch_operands = 2 : i64, tpu.core_type = #tpu.core_type<tc>, window_params = [{transform_indices = @transform_0, window_bounds = array<i64: 2, 11, 11, 16>}, {pipeline_mode = #tpu.pipeline_mode<synchronous>, transform_indices = @transform_1, window_bounds = array<i64: 256, 8>}, {pipeline_mode = #tpu.pipeline_mode<synchronous>, transform_indices = @transform_2, window_bounds = array<i64: 128, 8>}, {pipeline_mode = #tpu.pipeline_mode<synchronous>, transform_indices = @transform_3, window_bounds = array<i64: 128, 8>}, {pipeline_mode = #tpu.pipeline_mode<synchronous>, transform_indices = @transform_4, window_bounds = array<i64: 128, 16>}, {pipeline_mode = #tpu.pipeline_mode<synchronous>, transform_indices = @transform_5, window_bounds = array<i64: 256, 16>}, {pipeline_mode = #tpu.pipeline_mode<synchronous>, transform_indices = @transform_6, window_bounds = array<i64: 8, 16>}, {pipeline_mode = #tpu.pipeline_mode<synchronous>, transform_indices = @transform_7, window_bounds = array<i64: 6, 16>}, {transform_indices = @transform_8, window_bounds = array<i64: 1, 2, 512>}, {transform_indices = @transform_9, window_bounds = array<i64: 1, 2, 256>}]} {
    %c0 = arith.constant 0 : index
    %c0_0 = arith.constant 0 : index
    %0 = vector.load %arg8[%c0, %c0_0] : memref<6x16xf32, #tpu.memory_space<vmem>>, vector<6x16xf32>
    %cst = arith.constant 0.000000e+00 : f32
    %1 = vector.broadcast %cst : f32 to vector<2x1x10x8xf32>
    %cst_1 = arith.constant 0.000000e+00 : f32
    %2 = vector.broadcast %cst_1 : f32 to vector<2x10x1x8xf32>
    %c0_2 = arith.constant 0 : index
    %c0_3 = arith.constant 0 : index
    %c0_4 = arith.constant 0 : index
    %c0_5 = arith.constant 0 : index
    %3 = vector.load %arg11[%c0_2, %c0_3, %c0_4, %c0_5] : memref<2x10x10x8xf32, #tpu.memory_space<vmem>>, vector<2x1x10x8xf32>
    tpu.vector_store %arg11[%c0_2, %c0_3, %c0_4, %c0_5], %1 {strides = array<i32>} : memref<2x10x10x8xf32, #tpu.memory_space<vmem>>, vector<2x1x10x8xf32>,
    %c0_6 = arith.constant 0 : index
    %c9 = arith.constant 9 : index
    %c0_7 = arith.constant 0 : index
    %c0_8 = arith.constant 0 : index
    %4 = vector.load %arg11[%c0_6, %c9, %c0_7, %c0_8] : memref<2x10x10x8xf32, #tpu.memory_space<vmem>>, vector<2x1x10x8xf32>
    tpu.vector_store %arg11[%c0_6, %c9, %c0_7, %c0_8], %1 {strides = array<i32>} : memref<2x10x10x8xf32, #tpu.memory_space<vmem>>, vector<2x1x10x8xf32>,
    %c0_9 = arith.constant 0 : index
    %c0_10 = arith.constant 0 : index
    %c0_11 = arith.constant 0 : index
    %c0_12 = arith.constant 0 : index
    %5 = vector.load %arg11[%c0_9, %c0_10, %c0_11, %c0_12] : memref<2x10x10x8xf32, #tpu.memory_space<vmem>>, vector<2x10x1x8xf32>
    tpu.vector_store %arg11[%c0_9, %c0_10, %c0_11, %c0_12], %2 {strides = array<i32>} : memref<2x10x10x8xf32, #tpu.memory_space<vmem>>, vector<2x10x1x8xf32>,
    %c0_13 = arith.constant 0 : index
    %c0_14 = arith.constant 0 : index
    %c9_15 = arith.constant 9 : index
    %c0_16 = arith.constant 0 : index
    %6 = vector.load %arg11[%c0_13, %c0_14, %c9_15, %c0_16] : memref<2x10x10x8xf32, #tpu.memory_space<vmem>>, vector<2x10x1x8xf32>
    tpu.vector_store %arg11[%c0_13, %c0_14, %c9_15, %c0_16], %2 {strides = array<i32>} : memref<2x10x10x8xf32, #tpu.memory_space<vmem>>, vector<2x10x1x8xf32>,
    %cst_17 = arith.constant 0.000000e+00 : f32
    %7 = vector.broadcast %cst_17 : f32 to vector<2x1x6x16xf32>
    %cst_18 = arith.constant 0.000000e+00 : f32
    %8 = vector.broadcast %cst_18 : f32 to vector<2x6x1x16xf32>
    %c0_19 = arith.constant 0 : index
    %c0_20 = arith.constant 0 : index
    %c0_21 = arith.constant 0 : index
    %c0_22 = arith.constant 0 : index
    %9 = vector.load %arg12[%c0_19, %c0_20, %c0_21, %c0_22] : memref<2x6x6x16xf32, #tpu.memory_space<vmem>>, vector<2x1x6x16xf32>
    tpu.vector_store %arg12[%c0_19, %c0_20, %c0_21, %c0_22], %7 {strides = array<i32>} : memref<2x6x6x16xf32, #tpu.memory_space<vmem>>, vector<2x1x6x16xf32>,
    %c0_23 = arith.constant 0 : index
    %c5 = arith.constant 5 : index
    %c0_24 = arith.constant 0 : index
    %c0_25 = arith.constant 0 : index
    %10 = vector.load %arg12[%c0_23, %c5, %c0_24, %c0_25] : memref<2x6x6x16xf32, #tpu.memory_space<vmem>>, vector<2x1x6x16xf32>
    tpu.vector_store %arg12[%c0_23, %c5, %c0_24, %c0_25], %7 {strides = array<i32>} : memref<2x6x6x16xf32, #tpu.memory_space<vmem>>, vector<2x1x6x16xf32>,
    %c0_26 = arith.constant 0 : index
    %c0_27 = arith.constant 0 : index
    %c0_28 = arith.constant 0 : index
    %c0_29 = arith.constant 0 : index
    %11 = vector.load %arg12[%c0_26, %c0_27, %c0_28, %c0_29] : memref<2x6x6x16xf32, #tpu.memory_space<vmem>>, vector<2x6x1x16xf32>
    tpu.vector_store %arg12[%c0_26, %c0_27, %c0_28, %c0_29], %8 {strides = array<i32>} : memref<2x6x6x16xf32, #tpu.memory_space<vmem>>, vector<2x6x1x16xf32>,
    %c0_30 = arith.constant 0 : index
    %c0_31 = arith.constant 0 : index
    %c5_32 = arith.constant 5 : index
    %c0_33 = arith.constant 0 : index
    %12 = vector.load %arg12[%c0_30, %c0_31, %c5_32, %c0_33] : memref<2x6x6x16xf32, #tpu.memory_space<vmem>>, vector<2x6x1x16xf32>
    tpu.vector_store %arg12[%c0_30, %c0_31, %c5_32, %c0_33], %8 {strides = array<i32>} : memref<2x6x6x16xf32, #tpu.memory_space<vmem>>, vector<2x6x1x16xf32>,
    %c0_34 = arith.constant 0 : index
    %c0_35 = arith.constant 0 : index
    %c0_36 = arith.constant 0 : index
    %c0_37 = arith.constant 0 : index
    %13 = vector.load %arg1[%c0_34, %c0_35, %c0_36, %c0_37] : memref<2x11x11x16xf32, #tpu.memory_space<vmem>>, vector<2x11x11x16xf32>
    %14 = vector.extract_strided_slice %0 {offsets = [0, 0], sizes = [1, 8], strides = [1, 1]} : vector<6x16xf32> to vector<1x8xf32>
    %15 = vector.extract_strided_slice %13 {offsets = [0, 0, 0, 0], sizes = [2, 8, 8, 16], strides = [1, 1, 1, 1]} : vector<2x11x11x16xf32> to vector<2x8x8x16xf32>
    %16 = vector.shape_cast %15 : vector<2x8x8x16xf32> to vector<128x16xf32>
    %17 = vector.extract_strided_slice %13 {offsets = [0, 0, 1, 0], sizes = [2, 8, 8, 16], strides = [1, 1, 1, 1]} : vector<2x11x11x16xf32> to vector<2x8x8x16xf32>
    %18 = vector.shape_cast %17 : vector<2x8x8x16xf32> to vector<128x16xf32>
    %19 = vector.extract_strided_slice %13 {offsets = [0, 0, 2, 0], sizes = [2, 8, 8, 16], strides = [1, 1, 1, 1]} : vector<2x11x11x16xf32> to vector<2x8x8x16xf32>
    %20 = vector.shape_cast %19 : vector<2x8x8x16xf32> to vector<128x16xf32>
    %21 = vector.extract_strided_slice %13 {offsets = [0, 0, 3, 0], sizes = [2, 8, 8, 16], strides = [1, 1, 1, 1]} : vector<2x11x11x16xf32> to vector<2x8x8x16xf32>
    %22 = vector.shape_cast %21 : vector<2x8x8x16xf32> to vector<128x16xf32>
    %23 = vector.extract_strided_slice %13 {offsets = [0, 1, 0, 0], sizes = [2, 8, 8, 16], strides = [1, 1, 1, 1]} : vector<2x11x11x16xf32> to vector<2x8x8x16xf32>
    %24 = vector.shape_cast %23 : vector<2x8x8x16xf32> to vector<128x16xf32>
    %25 = vector.extract_strided_slice %13 {offsets = [0, 1, 1, 0], sizes = [2, 8, 8, 16], strides = [1, 1, 1, 1]} : vector<2x11x11x16xf32> to vector<2x8x8x16xf32>
    %26 = vector.shape_cast %25 : vector<2x8x8x16xf32> to vector<128x16xf32>
    %27 = vector.extract_strided_slice %13 {offsets = [0, 1, 2, 0], sizes = [2, 8, 8, 16], strides = [1, 1, 1, 1]} : vector<2x11x11x16xf32> to vector<2x8x8x16xf32>
    %28 = vector.shape_cast %27 : vector<2x8x8x16xf32> to vector<128x16xf32>
    %29 = vector.extract_strided_slice %13 {offsets = [0, 1, 3, 0], sizes = [2, 8, 8, 16], strides = [1, 1, 1, 1]} : vector<2x11x11x16xf32> to vector<2x8x8x16xf32>
    %30 = vector.shape_cast %29 : vector<2x8x8x16xf32> to vector<128x16xf32>
    %31 = vector.extract_strided_slice %13 {offsets = [0, 2, 0, 0], sizes = [2, 8, 8, 16], strides = [1, 1, 1, 1]} : vector<2x11x11x16xf32> to vector<2x8x8x16xf32>
    %32 = vector.shape_cast %31 : vector<2x8x8x16xf32> to vector<128x16xf32>
    %33 = vector.extract_strided_slice %13 {offsets = [0, 2, 1, 0], sizes = [2, 8, 8, 16], strides = [1, 1, 1, 1]} : vector<2x11x11x16xf32> to vector<2x8x8x16xf32>
    %34 = vector.shape_cast %33 : vector<2x8x8x16xf32> to vector<128x16xf32>
    %35 = vector.extract_strided_slice %13 {offsets = [0, 2, 2, 0], sizes = [2, 8, 8, 16], strides = [1, 1, 1, 1]} : vector<2x11x11x16xf32> to vector<2x8x8x16xf32>
    %36 = vector.shape_cast %35 : vector<2x8x8x16xf32> to vector<128x16xf32>
    %37 = vector.extract_strided_slice %13 {offsets = [0, 2, 3, 0], sizes = [2, 8, 8, 16], strides = [1, 1, 1, 1]} : vector<2x11x11x16xf32> to vector<2x8x8x16xf32>
    %38 = vector.shape_cast %37 : vector<2x8x8x16xf32> to vector<128x16xf32>
    %39 = vector.extract_strided_slice %13 {offsets = [0, 3, 0, 0], sizes = [2, 8, 8, 16], strides = [1, 1, 1, 1]} : vector<2x11x11x16xf32> to vector<2x8x8x16xf32>
    %40 = vector.shape_cast %39 : vector<2x8x8x16xf32> to vector<128x16xf32>
    %41 = vector.extract_strided_slice %13 {offsets = [0, 3, 1, 0], sizes = [2, 8, 8, 16], strides = [1, 1, 1, 1]} : vector<2x11x11x16xf32> to vector<2x8x8x16xf32>
    %42 = vector.shape_cast %41 : vector<2x8x8x16xf32> to vector<128x16xf32>
    %43 = vector.extract_strided_slice %13 {offsets = [0, 3, 2, 0], sizes = [2, 8, 8, 16], strides = [1, 1, 1, 1]} : vector<2x11x11x16xf32> to vector<2x8x8x16xf32>
    %44 = vector.shape_cast %43 : vector<2x8x8x16xf32> to vector<128x16xf32>
    %45 = vector.extract_strided_slice %13 {offsets = [0, 3, 3, 0], sizes = [2, 8, 8, 16], strides = [1, 1, 1, 1]} : vector<2x11x11x16xf32> to vector<2x8x8x16xf32>
    %46 = vector.shape_cast %45 : vector<2x8x8x16xf32> to vector<128x16xf32>
    %47 = tpu.concatenate %16, %18, %20, %22, %24, %26, %28, %30, %32, %34, %36, %38, %40, %42, %44, %46 in 1 : vector<128x16xf32>, vector<128x16xf32>, vector<128x16xf32>, vector<128x16xf32>, vector<128x16xf32>, vector<128x16xf32>, vector<128x16xf32>, vector<128x16xf32>, vector<128x16xf32>, vector<128x16xf32>, vector<128x16xf32>, vector<128x16xf32>, vector<128x16xf32>, vector<128x16xf32>, vector<128x16xf32>, vector<128x16xf32> -> vector<128x256xf32>
    %c0_38 = arith.constant 0 : index
    %c0_39 = arith.constant 0 : index
    %48 = vector.load %arg2[%c0_38, %c0_39] : memref<256x8xf32, #tpu.memory_space<vmem>>, vector<256x8xf32>
    %cst_40 = arith.constant dense<0.000000e+00> : vector<128x8xf32>
    %49 = tpu.matmul %47, %48, %cst_40 {dimension_numbers = #tpu.dot_dimension_numbers<[1], [0], [0], [1], [0, 0, 1, 1], [], []>} : vector<128x256xf32>, vector<256x8xf32>, vector<128x8xf32> -> vector<128x8xf32>
    %50 = vector.broadcast %14 : vector<1x8xf32> to vector<128x8xf32>
    %51 = arith.addf %49, %50 : vector<128x8xf32>
    %cst_41 = arith.constant 0.000000e+00 : f32
    %52 = vector.broadcast %cst_41 : f32 to vector<128x8xf32>
    %53 = arith.maximumf %51, %52 : vector<128x8xf32>
    %54 = vector.shape_cast %53 : vector<128x8xf32> to vector<2x8x8x8xf32>
    %c0_42 = arith.constant 0 : index
    %c1 = arith.constant 1 : index
    %c1_43 = arith.constant 1 : index
    %c0_44 = arith.constant 0 : index
    %55 = vector.load %arg11[%c0_42, %c1, %c1_43, %c0_44] : memref<2x10x10x8xf32, #tpu.memory_space<vmem>>, vector<2x8x8x8xf32>
    tpu.vector_store %arg11[%c0_42, %c1, %c1_43, %c0_44], %54 {strides = array<i32>} : memref<2x10x10x8xf32, #tpu.memory_space<vmem>>, vector<2x8x8x8xf32>,
    %c0_45 = arith.constant 0 : index
    %c0_46 = arith.constant 0 : index
    %c0_47 = arith.constant 0 : index
    %c0_48 = arith.constant 0 : index
    %56 = vector.load %arg11[%c0_45, %c0_46, %c0_47, %c0_48] : memref<2x10x10x8xf32, #tpu.memory_space<vmem>>, vector<2x10x10x8xf32>
    %57 = vector.extract_strided_slice %0 {offsets = [1, 0], sizes = [1, 8], strides = [1, 1]} : vector<6x16xf32> to vector<1x8xf32>
    %58 = vector.extract_strided_slice %56 {offsets = [0, 0, 0, 0], sizes = [2, 8, 8, 8], strides = [1, 1, 1, 1]} : vector<2x10x10x8xf32> to vector<2x8x8x8xf32>
    %59 = vector.shape_cast %58 : vector<2x8x8x8xf32> to vector<128x8xf32>
    %60 = vector.extract_strided_slice %56 {offsets = [0, 0, 1, 0], sizes = [2, 8, 8, 8], strides = [1, 1, 1, 1]} : vector<2x10x10x8xf32> to vector<2x8x8x8xf32>
    %61 = vector.shape_cast %60 : vector<2x8x8x8xf32> to vector<128x8xf32>
    %62 = vector.extract_strided_slice %56 {offsets = [0, 0, 2, 0], sizes = [2, 8, 8, 8], strides = [1, 1, 1, 1]} : vector<2x10x10x8xf32> to vector<2x8x8x8xf32>
    %63 = vector.shape_cast %62 : vector<2x8x8x8xf32> to vector<128x8xf32>
    %64 = vector.extract_strided_slice %56 {offsets = [0, 1, 0, 0], sizes = [2, 8, 8, 8], strides = [1, 1, 1, 1]} : vector<2x10x10x8xf32> to vector<2x8x8x8xf32>
    %65 = vector.shape_cast %64 : vector<2x8x8x8xf32> to vector<128x8xf32>
    %66 = vector.extract_strided_slice %56 {offsets = [0, 1, 1, 0], sizes = [2, 8, 8, 8], strides = [1, 1, 1, 1]} : vector<2x10x10x8xf32> to vector<2x8x8x8xf32>
    %67 = vector.shape_cast %66 : vector<2x8x8x8xf32> to vector<128x8xf32>
    %68 = vector.extract_strided_slice %56 {offsets = [0, 1, 2, 0], sizes = [2, 8, 8, 8], strides = [1, 1, 1, 1]} : vector<2x10x10x8xf32> to vector<2x8x8x8xf32>
    %69 = vector.shape_cast %68 : vector<2x8x8x8xf32> to vector<128x8xf32>
    %70 = vector.extract_strided_slice %56 {offsets = [0, 2, 0, 0], sizes = [2, 8, 8, 8], strides = [1, 1, 1, 1]} : vector<2x10x10x8xf32> to vector<2x8x8x8xf32>
    %71 = vector.shape_cast %70 : vector<2x8x8x8xf32> to vector<128x8xf32>
    %72 = vector.extract_strided_slice %56 {offsets = [0, 2, 1, 0], sizes = [2, 8, 8, 8], strides = [1, 1, 1, 1]} : vector<2x10x10x8xf32> to vector<2x8x8x8xf32>
    %73 = vector.shape_cast %72 : vector<2x8x8x8xf32> to vector<128x8xf32>
    %74 = vector.extract_strided_slice %56 {offsets = [0, 2, 2, 0], sizes = [2, 8, 8, 8], strides = [1, 1, 1, 1]} : vector<2x10x10x8xf32> to vector<2x8x8x8xf32>
    %75 = vector.shape_cast %74 : vector<2x8x8x8xf32> to vector<128x8xf32>
    %cst_49 = arith.constant 0.000000e+00 : f32
    %76 = vector.broadcast %cst_49 : f32 to vector<128x56xf32>
    %77 = tpu.concatenate %59, %61, %63, %65, %67, %69, %71, %73, %75, %76 in 1 : vector<128x8xf32>, vector<128x8xf32>, vector<128x8xf32>, vector<128x8xf32>, vector<128x8xf32>, vector<128x8xf32>, vector<128x8xf32>, vector<128x8xf32>, vector<128x8xf32>, vector<128x56xf32> -> vector<128x128xf32>
    %c0_50 = arith.constant 0 : index
    %c0_51 = arith.constant 0 : index
    %78 = vector.load %arg3[%c0_50, %c0_51] : memref<128x8xf32, #tpu.memory_space<vmem>>, vector<128x8xf32>
    %cst_52 = arith.constant dense<0.000000e+00> : vector<128x8xf32>
    %79 = tpu.matmul %77, %78, %cst_52 {dimension_numbers = #tpu.dot_dimension_numbers<[1], [0], [0], [1], [0, 0, 1, 1], [], []>} : vector<128x128xf32>, vector<128x8xf32>, vector<128x8xf32> -> vector<128x8xf32>
    %80 = vector.broadcast %57 : vector<1x8xf32> to vector<128x8xf32>
    %81 = arith.addf %79, %80 : vector<128x8xf32>
    %cst_53 = arith.constant 0.000000e+00 : f32
    %82 = vector.broadcast %cst_53 : f32 to vector<128x8xf32>
    %83 = arith.maximumf %81, %82 : vector<128x8xf32>
    %84 = vector.shape_cast %83 : vector<128x8xf32> to vector<2x8x8x8xf32>
    %c0_54 = arith.constant 0 : index
    %c1_55 = arith.constant 1 : index
    %c1_56 = arith.constant 1 : index
    %c0_57 = arith.constant 0 : index
    %85 = vector.load %arg11[%c0_54, %c1_55, %c1_56, %c0_57] : memref<2x10x10x8xf32, #tpu.memory_space<vmem>>, vector<2x8x8x8xf32>
    tpu.vector_store %arg11[%c0_54, %c1_55, %c1_56, %c0_57], %84 {strides = array<i32>} : memref<2x10x10x8xf32, #tpu.memory_space<vmem>>, vector<2x8x8x8xf32>,
    %c0_58 = arith.constant 0 : index
    %c0_59 = arith.constant 0 : index
    %c0_60 = arith.constant 0 : index
    %c0_61 = arith.constant 0 : index
    %86 = vector.load %arg11[%c0_58, %c0_59, %c0_60, %c0_61] : memref<2x10x10x8xf32, #tpu.memory_space<vmem>>, vector<2x10x10x8xf32>
    %87 = vector.extract_strided_slice %0 {offsets = [2, 0], sizes = [1, 8], strides = [1, 1]} : vector<6x16xf32> to vector<1x8xf32>
    %88 = vector.extract_strided_slice %86 {offsets = [0, 0, 0, 0], sizes = [2, 8, 8, 8], strides = [1, 1, 1, 1]} : vector<2x10x10x8xf32> to vector<2x8x8x8xf32>
    %89 = vector.shape_cast %88 : vector<2x8x8x8xf32> to vector<128x8xf32>
    %90 = vector.extract_strided_slice %86 {offsets = [0, 0, 1, 0], sizes = [2, 8, 8, 8], strides = [1, 1, 1, 1]} : vector<2x10x10x8xf32> to vector<2x8x8x8xf32>
    %91 = vector.shape_cast %90 : vector<2x8x8x8xf32> to vector<128x8xf32>
    %92 = vector.extract_strided_slice %86 {offsets = [0, 0, 2, 0], sizes = [2, 8, 8, 8], strides = [1, 1, 1, 1]} : vector<2x10x10x8xf32> to vector<2x8x8x8xf32>
    %93 = vector.shape_cast %92 : vector<2x8x8x8xf32> to vector<128x8xf32>
    %94 = vector.extract_strided_slice %86 {offsets = [0, 1, 0, 0], sizes = [2, 8, 8, 8], strides = [1, 1, 1, 1]} : vector<2x10x10x8xf32> to vector<2x8x8x8xf32>
    %95 = vector.shape_cast %94 : vector<2x8x8x8xf32> to vector<128x8xf32>
    %96 = vector.extract_strided_slice %86 {offsets = [0, 1, 1, 0], sizes = [2, 8, 8, 8], strides = [1, 1, 1, 1]} : vector<2x10x10x8xf32> to vector<2x8x8x8xf32>
    %97 = vector.shape_cast %96 : vector<2x8x8x8xf32> to vector<128x8xf32>
    %98 = vector.extract_strided_slice %86 {offsets = [0, 1, 2, 0], sizes = [2, 8, 8, 8], strides = [1, 1, 1, 1]} : vector<2x10x10x8xf32> to vector<2x8x8x8xf32>
    %99 = vector.shape_cast %98 : vector<2x8x8x8xf32> to vector<128x8xf32>
    %100 = vector.extract_strided_slice %86 {offsets = [0, 2, 0, 0], sizes = [2, 8, 8, 8], strides = [1, 1, 1, 1]} : vector<2x10x10x8xf32> to vector<2x8x8x8xf32>
    %101 = vector.shape_cast %100 : vector<2x8x8x8xf32> to vector<128x8xf32>
    %102 = vector.extract_strided_slice %86 {offsets = [0, 2, 1, 0], sizes = [2, 8, 8, 8], strides = [1, 1, 1, 1]} : vector<2x10x10x8xf32> to vector<2x8x8x8xf32>
    %103 = vector.shape_cast %102 : vector<2x8x8x8xf32> to vector<128x8xf32>
    %104 = vector.extract_strided_slice %86 {offsets = [0, 2, 2, 0], sizes = [2, 8, 8, 8], strides = [1, 1, 1, 1]} : vector<2x10x10x8xf32> to vector<2x8x8x8xf32>
    %105 = vector.shape_cast %104 : vector<2x8x8x8xf32> to vector<128x8xf32>
    %cst_62 = arith.constant 0.000000e+00 : f32
    %106 = vector.broadcast %cst_62 : f32 to vector<128x56xf32>
    %107 = tpu.concatenate %89, %91, %93, %95, %97, %99, %101, %103, %105, %106 in 1 : vector<128x8xf32>, vector<128x8xf32>, vector<128x8xf32>, vector<128x8xf32>, vector<128x8xf32>, vector<128x8xf32>, vector<128x8xf32>, vector<128x8xf32>, vector<128x8xf32>, vector<128x56xf32> -> vector<128x128xf32>
    %c0_63 = arith.constant 0 : index
    %c0_64 = arith.constant 0 : index
    %108 = vector.load %arg4[%c0_63, %c0_64] : memref<128x8xf32, #tpu.memory_space<vmem>>, vector<128x8xf32>
    %cst_65 = arith.constant dense<0.000000e+00> : vector<128x8xf32>
    %109 = tpu.matmul %107, %108, %cst_65 {dimension_numbers = #tpu.dot_dimension_numbers<[1], [0], [0], [1], [0, 0, 1, 1], [], []>} : vector<128x128xf32>, vector<128x8xf32>, vector<128x8xf32> -> vector<128x8xf32>
    %110 = vector.broadcast %87 : vector<1x8xf32> to vector<128x8xf32>
    %111 = arith.addf %109, %110 : vector<128x8xf32>
    %112 = arith.addf %111, %53 : vector<128x8xf32>
    %cst_66 = arith.constant 0.000000e+00 : f32
    %113 = vector.broadcast %cst_66 : f32 to vector<128x8xf32>
    %114 = arith.maximumf %112, %113 : vector<128x8xf32>
    %115 = vector.shape_cast %114 : vector<128x8xf32> to vector<2x8x8x8xf32>
    %116 = vector.extract_strided_slice %115 {offsets = [0, 0, 0, 0], sizes = [2, 8, 1, 8], strides = [1, 1, 1, 1]} : vector<2x8x8x8xf32> to vector<2x8x1x8xf32>
    %117 = vector.shape_cast %116 : vector<2x8x1x8xf32> to vector<2x8x8xf32>
    %118 = vector.extract_strided_slice %115 {offsets = [0, 0, 1, 0], sizes = [2, 8, 1, 8], strides = [1, 1, 1, 1]} : vector<2x8x8x8xf32> to vector<2x8x1x8xf32>
    %119 = vector.shape_cast %118 : vector<2x8x1x8xf32> to vector<2x8x8xf32>
    %120 = vector.extract_strided_slice %115 {offsets = [0, 0, 2, 0], sizes = [2, 8, 1, 8], strides = [1, 1, 1, 1]} : vector<2x8x8x8xf32> to vector<2x8x1x8xf32>
    %121 = vector.shape_cast %120 : vector<2x8x1x8xf32> to vector<2x8x8xf32>
    %122 = vector.extract_strided_slice %115 {offsets = [0, 0, 3, 0], sizes = [2, 8, 1, 8], strides = [1, 1, 1, 1]} : vector<2x8x8x8xf32> to vector<2x8x1x8xf32>
    %123 = vector.shape_cast %122 : vector<2x8x1x8xf32> to vector<2x8x8xf32>
    %124 = vector.extract_strided_slice %115 {offsets = [0, 0, 4, 0], sizes = [2, 8, 1, 8], strides = [1, 1, 1, 1]} : vector<2x8x8x8xf32> to vector<2x8x1x8xf32>
    %125 = vector.shape_cast %124 : vector<2x8x1x8xf32> to vector<2x8x8xf32>
    %126 = vector.extract_strided_slice %115 {offsets = [0, 0, 5, 0], sizes = [2, 8, 1, 8], strides = [1, 1, 1, 1]} : vector<2x8x8x8xf32> to vector<2x8x1x8xf32>
    %127 = vector.shape_cast %126 : vector<2x8x1x8xf32> to vector<2x8x8xf32>
    %128 = vector.extract_strided_slice %115 {offsets = [0, 0, 6, 0], sizes = [2, 8, 1, 8], strides = [1, 1, 1, 1]} : vector<2x8x8x8xf32> to vector<2x8x1x8xf32>
    %129 = vector.shape_cast %128 : vector<2x8x1x8xf32> to vector<2x8x8xf32>
    %130 = vector.extract_strided_slice %115 {offsets = [0, 0, 7, 0], sizes = [2, 8, 1, 8], strides = [1, 1, 1, 1]} : vector<2x8x8x8xf32> to vector<2x8x1x8xf32>
    %131 = vector.shape_cast %130 : vector<2x8x1x8xf32> to vector<2x8x8xf32>
    %132 = tpu.concatenate %117, %119, %121, %123, %125, %127, %129, %131 in 2 : vector<2x8x8xf32>, vector<2x8x8xf32>, vector<2x8x8xf32>, vector<2x8x8xf32>, vector<2x8x8xf32>, vector<2x8x8xf32>, vector<2x8x8xf32>, vector<2x8x8xf32> -> vector<2x8x64xf32>
    %133 = vector.extract_strided_slice %132 {offsets = [0, 0, 0], sizes = [2, 1, 64], strides = [1, 1, 1]} : vector<2x8x64xf32> to vector<2x1x64xf32>
    %134 = vector.shape_cast %133 : vector<2x1x64xf32> to vector<2x64xf32>
    %135 = vector.extract_strided_slice %132 {offsets = [0, 1, 0], sizes = [2, 1, 64], strides = [1, 1, 1]} : vector<2x8x64xf32> to vector<2x1x64xf32>
    %136 = vector.shape_cast %135 : vector<2x1x64xf32> to vector<2x64xf32>
    %137 = vector.extract_strided_slice %132 {offsets = [0, 2, 0], sizes = [2, 1, 64], strides = [1, 1, 1]} : vector<2x8x64xf32> to vector<2x1x64xf32>
    %138 = vector.shape_cast %137 : vector<2x1x64xf32> to vector<2x64xf32>
    %139 = vector.extract_strided_slice %132 {offsets = [0, 3, 0], sizes = [2, 1, 64], strides = [1, 1, 1]} : vector<2x8x64xf32> to vector<2x1x64xf32>
    %140 = vector.shape_cast %139 : vector<2x1x64xf32> to vector<2x64xf32>
    %141 = vector.extract_strided_slice %132 {offsets = [0, 4, 0], sizes = [2, 1, 64], strides = [1, 1, 1]} : vector<2x8x64xf32> to vector<2x1x64xf32>
    %142 = vector.shape_cast %141 : vector<2x1x64xf32> to vector<2x64xf32>
    %143 = vector.extract_strided_slice %132 {offsets = [0, 5, 0], sizes = [2, 1, 64], strides = [1, 1, 1]} : vector<2x8x64xf32> to vector<2x1x64xf32>
    %144 = vector.shape_cast %143 : vector<2x1x64xf32> to vector<2x64xf32>
    %145 = vector.extract_strided_slice %132 {offsets = [0, 6, 0], sizes = [2, 1, 64], strides = [1, 1, 1]} : vector<2x8x64xf32> to vector<2x1x64xf32>
    %146 = vector.shape_cast %145 : vector<2x1x64xf32> to vector<2x64xf32>
    %147 = vector.extract_strided_slice %132 {offsets = [0, 7, 0], sizes = [2, 1, 64], strides = [1, 1, 1]} : vector<2x8x64xf32> to vector<2x1x64xf32>
    %148 = vector.shape_cast %147 : vector<2x1x64xf32> to vector<2x64xf32>
    %149 = tpu.concatenate %134, %136, %138, %140, %142, %144, %146, %148 in 1 : vector<2x64xf32>, vector<2x64xf32>, vector<2x64xf32>, vector<2x64xf32>, vector<2x64xf32>, vector<2x64xf32>, vector<2x64xf32>, vector<2x64xf32> -> vector<2x512xf32>
    %c0_67 = arith.constant 0 : index
    %c0_68 = arith.constant 0 : index
    %c0_69 = arith.constant 0 : index
    %150 = vector.load %arg9[%c0_67, %c0_68, %c0_69] : memref<1x2x512xf32, #tpu.memory_space<vmem>>, vector<1x2x512xf32>
    %151 = vector.shape_cast %150 : vector<1x2x512xf32> to vector<2x512xf32>
    %152 = vector.shape_cast %149 : vector<2x512xf32> to vector<1x2x512xf32>
    tpu.vector_store %arg9[%c0_67, %c0_68, %c0_69], %152 {strides = array<i32>} : memref<1x2x512xf32, #tpu.memory_space<vmem>>, vector<1x2x512xf32>,
    %153 = vector.shape_cast %114 : vector<128x8xf32> to vector<2x8x8x8xf32>
    %c0_70 = arith.constant 0 : index
    %c1_71 = arith.constant 1 : index
    %c1_72 = arith.constant 1 : index
    %c0_73 = arith.constant 0 : index
    %154 = vector.load %arg11[%c0_70, %c1_71, %c1_72, %c0_73] : memref<2x10x10x8xf32, #tpu.memory_space<vmem>>, vector<2x8x8x8xf32>
    tpu.vector_store %arg11[%c0_70, %c1_71, %c1_72, %c0_73], %153 {strides = array<i32>} : memref<2x10x10x8xf32, #tpu.memory_space<vmem>>, vector<2x8x8x8xf32>,
    %c0_74 = arith.constant 0 : index
    %c0_75 = arith.constant 0 : index
    %c0_76 = arith.constant 0 : index
    %c0_77 = arith.constant 0 : index
    %155 = vector.load %arg11[%c0_74, %c0_75, %c0_76, %c0_77] : memref<2x10x10x8xf32, #tpu.memory_space<vmem>>, vector<2x10x10x8xf32>
    %156 = vector.extract_strided_slice %0 {offsets = [3, 0], sizes = [1, 16], strides = [1, 1]} : vector<6x16xf32> to vector<1x16xf32>
    %157 = vector.extract_strided_slice %155 {offsets = [0, 0, 0, 0], sizes = [2, 8, 8, 8], strides = [1, 1, 1, 1]} : vector<2x10x10x8xf32> to vector<2x8x8x8xf32>
    %158 = vector.shape_cast %157 : vector<2x8x8x8xf32> to vector<128x8xf32>
    %159 = vector.extract_strided_slice %155 {offsets = [0, 0, 1, 0], sizes = [2, 8, 8, 8], strides = [1, 1, 1, 1]} : vector<2x10x10x8xf32> to vector<2x8x8x8xf32>
    %160 = vector.shape_cast %159 : vector<2x8x8x8xf32> to vector<128x8xf32>
    %161 = vector.extract_strided_slice %155 {offsets = [0, 0, 2, 0], sizes = [2, 8, 8, 8], strides = [1, 1, 1, 1]} : vector<2x10x10x8xf32> to vector<2x8x8x8xf32>
    %162 = vector.shape_cast %161 : vector<2x8x8x8xf32> to vector<128x8xf32>
    %163 = vector.extract_strided_slice %155 {offsets = [0, 1, 0, 0], sizes = [2, 8, 8, 8], strides = [1, 1, 1, 1]} : vector<2x10x10x8xf32> to vector<2x8x8x8xf32>
    %164 = vector.shape_cast %163 : vector<2x8x8x8xf32> to vector<128x8xf32>
    %165 = vector.extract_strided_slice %155 {offsets = [0, 1, 1, 0], sizes = [2, 8, 8, 8], strides = [1, 1, 1, 1]} : vector<2x10x10x8xf32> to vector<2x8x8x8xf32>
    %166 = vector.shape_cast %165 : vector<2x8x8x8xf32> to vector<128x8xf32>
    %167 = vector.extract_strided_slice %155 {offsets = [0, 1, 2, 0], sizes = [2, 8, 8, 8], strides = [1, 1, 1, 1]} : vector<2x10x10x8xf32> to vector<2x8x8x8xf32>
    %168 = vector.shape_cast %167 : vector<2x8x8x8xf32> to vector<128x8xf32>
    %169 = vector.extract_strided_slice %155 {offsets = [0, 2, 0, 0], sizes = [2, 8, 8, 8], strides = [1, 1, 1, 1]} : vector<2x10x10x8xf32> to vector<2x8x8x8xf32>
    %170 = vector.shape_cast %169 : vector<2x8x8x8xf32> to vector<128x8xf32>
    %171 = vector.extract_strided_slice %155 {offsets = [0, 2, 1, 0], sizes = [2, 8, 8, 8], strides = [1, 1, 1, 1]} : vector<2x10x10x8xf32> to vector<2x8x8x8xf32>
    %172 = vector.shape_cast %171 : vector<2x8x8x8xf32> to vector<128x8xf32>
    %173 = vector.extract_strided_slice %155 {offsets = [0, 2, 2, 0], sizes = [2, 8, 8, 8], strides = [1, 1, 1, 1]} : vector<2x10x10x8xf32> to vector<2x8x8x8xf32>
    %174 = vector.shape_cast %173 : vector<2x8x8x8xf32> to vector<128x8xf32>
    %cst_78 = arith.constant 0.000000e+00 : f32
    %175 = vector.broadcast %cst_78 : f32 to vector<128x56xf32>
    %176 = tpu.concatenate %158, %160, %162, %164, %166, %168, %170, %172, %174, %175 in 1 : vector<128x8xf32>, vector<128x8xf32>, vector<128x8xf32>, vector<128x8xf32>, vector<128x8xf32>, vector<128x8xf32>, vector<128x8xf32>, vector<128x8xf32>, vector<128x8xf32>, vector<128x56xf32> -> vector<128x128xf32>
    %c0_79 = arith.constant 0 : index
    %c0_80 = arith.constant 0 : index
    %177 = vector.load %arg5[%c0_79, %c0_80] : memref<128x16xf32, #tpu.memory_space<vmem>>, vector<128x16xf32>
    %cst_81 = arith.constant dense<0.000000e+00> : vector<128x16xf32>
    %178 = tpu.matmul %176, %177, %cst_81 {dimension_numbers = #tpu.dot_dimension_numbers<[1], [0], [0], [1], [0, 0, 1, 1], [], []>} : vector<128x128xf32>, vector<128x16xf32>, vector<128x16xf32> -> vector<128x16xf32>
    %179 = vector.broadcast %156 : vector<1x16xf32> to vector<128x16xf32>
    %180 = arith.addf %178, %179 : vector<128x16xf32>
    %181 = vector.shape_cast %180 : vector<128x16xf32> to vector<64x2x16xf32>
    %182 = vector.extract_strided_slice %181 {offsets = [0, 0, 0], sizes = [64, 1, 16], strides = [1, 1, 1]} : vector<64x2x16xf32> to vector<64x1x16xf32>
    %183 = vector.shape_cast %182 : vector<64x1x16xf32> to vector<64x16xf32>
    %184 = vector.shape_cast %183 : vector<64x16xf32> to vector<8x2x4x16xf32>
    %185 = vector.extract_strided_slice %184 {offsets = [0, 0, 0, 0], sizes = [8, 1, 4, 16], strides = [1, 1, 1, 1]} : vector<8x2x4x16xf32> to vector<8x1x4x16xf32>
    %186 = vector.shape_cast %185 : vector<8x1x4x16xf32> to vector<8x4x16xf32>
    %187 = vector.shape_cast %186 : vector<8x4x16xf32> to vector<32x16xf32>
    %cst_82 = arith.constant 0.000000e+00 : f32
    %188 = vector.broadcast %cst_82 : f32 to vector<32x16xf32>
    %189 = arith.maximumf %187, %188 : vector<32x16xf32>
    %190 = vector.shape_cast %114 : vector<128x8xf32> to vector<64x2x8xf32>
    %191 = vector.extract_strided_slice %190 {offsets = [0, 0, 0], sizes = [64, 1, 8], strides = [1, 1, 1]} : vector<64x2x8xf32> to vector<64x1x8xf32>
    %192 = vector.shape_cast %191 : vector<64x1x8xf32> to vector<64x8xf32>
    %193 = vector.shape_cast %192 : vector<64x8xf32> to vector<8x2x4x8xf32>
    %194 = vector.extract_strided_slice %193 {offsets = [0, 0, 0, 0], sizes = [8, 1, 4, 8], strides = [1, 1, 1, 1]} : vector<8x2x4x8xf32> to vector<8x1x4x8xf32>
    %195 = vector.shape_cast %194 : vector<8x1x4x8xf32> to vector<8x4x8xf32>
    %196 = vector.shape_cast %195 : vector<8x4x8xf32> to vector<32x8xf32>
    %c0_83 = arith.constant 0 : index
    %c0_84 = arith.constant 0 : index
    %197 = vector.load %arg7[%c0_83, %c0_84] : memref<8x16xf32, #tpu.memory_space<vmem>>, vector<8x16xf32>
    %cst_85 = arith.constant dense<0.000000e+00> : vector<32x16xf32>
    %198 = tpu.matmul %196, %197, %cst_85 {dimension_numbers = #tpu.dot_dimension_numbers<[1], [0], [0], [1], [0, 0, 1, 1], [], []>} : vector<32x8xf32>, vector<8x16xf32>, vector<32x16xf32> -> vector<32x16xf32>
    %199 = vector.extract_strided_slice %0 {offsets = [5, 0], sizes = [1, 16], strides = [1, 1]} : vector<6x16xf32> to vector<1x16xf32>
    %200 = vector.broadcast %199 : vector<1x16xf32> to vector<32x16xf32>
    %201 = arith.addf %198, %200 : vector<32x16xf32>
    %202 = vector.shape_cast %189 : vector<32x16xf32> to vector<2x4x4x16xf32>
    %c0_86 = arith.constant 0 : index
    %c1_87 = arith.constant 1 : index
    %c1_88 = arith.constant 1 : index
    %c0_89 = arith.constant 0 : index
    %203 = vector.load %arg12[%c0_86, %c1_87, %c1_88, %c0_89] : memref<2x6x6x16xf32, #tpu.memory_space<vmem>>, vector<2x4x4x16xf32>
    tpu.vector_store %arg12[%c0_86, %c1_87, %c1_88, %c0_89], %202 {strides = array<i32>} : memref<2x6x6x16xf32, #tpu.memory_space<vmem>>, vector<2x4x4x16xf32>,
    %c0_90 = arith.constant 0 : index
    %c0_91 = arith.constant 0 : index
    %c0_92 = arith.constant 0 : index
    %c0_93 = arith.constant 0 : index
    %204 = vector.load %arg12[%c0_90, %c0_91, %c0_92, %c0_93] : memref<2x6x6x16xf32, #tpu.memory_space<vmem>>, vector<2x6x6x16xf32>
    %205 = vector.extract_strided_slice %0 {offsets = [4, 0], sizes = [1, 16], strides = [1, 1]} : vector<6x16xf32> to vector<1x16xf32>
    %206 = vector.extract_strided_slice %204 {offsets = [0, 0, 0, 0], sizes = [2, 4, 4, 16], strides = [1, 1, 1, 1]} : vector<2x6x6x16xf32> to vector<2x4x4x16xf32>
    %207 = vector.shape_cast %206 : vector<2x4x4x16xf32> to vector<32x16xf32>
    %208 = vector.extract_strided_slice %204 {offsets = [0, 0, 1, 0], sizes = [2, 4, 4, 16], strides = [1, 1, 1, 1]} : vector<2x6x6x16xf32> to vector<2x4x4x16xf32>
    %209 = vector.shape_cast %208 : vector<2x4x4x16xf32> to vector<32x16xf32>
    %210 = vector.extract_strided_slice %204 {offsets = [0, 0, 2, 0], sizes = [2, 4, 4, 16], strides = [1, 1, 1, 1]} : vector<2x6x6x16xf32> to vector<2x4x4x16xf32>
    %211 = vector.shape_cast %210 : vector<2x4x4x16xf32> to vector<32x16xf32>
    %212 = vector.extract_strided_slice %204 {offsets = [0, 1, 0, 0], sizes = [2, 4, 4, 16], strides = [1, 1, 1, 1]} : vector<2x6x6x16xf32> to vector<2x4x4x16xf32>
    %213 = vector.shape_cast %212 : vector<2x4x4x16xf32> to vector<32x16xf32>
    %214 = vector.extract_strided_slice %204 {offsets = [0, 1, 1, 0], sizes = [2, 4, 4, 16], strides = [1, 1, 1, 1]} : vector<2x6x6x16xf32> to vector<2x4x4x16xf32>
    %215 = vector.shape_cast %214 : vector<2x4x4x16xf32> to vector<32x16xf32>
    %216 = vector.extract_strided_slice %204 {offsets = [0, 1, 2, 0], sizes = [2, 4, 4, 16], strides = [1, 1, 1, 1]} : vector<2x6x6x16xf32> to vector<2x4x4x16xf32>
    %217 = vector.shape_cast %216 : vector<2x4x4x16xf32> to vector<32x16xf32>
    %218 = vector.extract_strided_slice %204 {offsets = [0, 2, 0, 0], sizes = [2, 4, 4, 16], strides = [1, 1, 1, 1]} : vector<2x6x6x16xf32> to vector<2x4x4x16xf32>
    %219 = vector.shape_cast %218 : vector<2x4x4x16xf32> to vector<32x16xf32>
    %220 = vector.extract_strided_slice %204 {offsets = [0, 2, 1, 0], sizes = [2, 4, 4, 16], strides = [1, 1, 1, 1]} : vector<2x6x6x16xf32> to vector<2x4x4x16xf32>
    %221 = vector.shape_cast %220 : vector<2x4x4x16xf32> to vector<32x16xf32>
    %222 = vector.extract_strided_slice %204 {offsets = [0, 2, 2, 0], sizes = [2, 4, 4, 16], strides = [1, 1, 1, 1]} : vector<2x6x6x16xf32> to vector<2x4x4x16xf32>
    %223 = vector.shape_cast %222 : vector<2x4x4x16xf32> to vector<32x16xf32>
    %cst_94 = arith.constant 0.000000e+00 : f32
    %224 = vector.broadcast %cst_94 : f32 to vector<32x112xf32>
    %225 = tpu.concatenate %207, %209, %211, %213, %215, %217, %219, %221, %223, %224 in 1 : vector<32x16xf32>, vector<32x16xf32>, vector<32x16xf32>, vector<32x16xf32>, vector<32x16xf32>, vector<32x16xf32>, vector<32x16xf32>, vector<32x16xf32>, vector<32x16xf32>, vector<32x112xf32> -> vector<32x256xf32>
    %c0_95 = arith.constant 0 : index
    %c0_96 = arith.constant 0 : index
    %226 = vector.load %arg6[%c0_95, %c0_96] : memref<256x16xf32, #tpu.memory_space<vmem>>, vector<256x16xf32>
    %cst_97 = arith.constant dense<0.000000e+00> : vector<32x16xf32>
    %227 = tpu.matmul %225, %226, %cst_97 {dimension_numbers = #tpu.dot_dimension_numbers<[1], [0], [0], [1], [0, 0, 1, 1], [], []>} : vector<32x256xf32>, vector<256x16xf32>, vector<32x16xf32> -> vector<32x16xf32>
    %228 = vector.broadcast %205 : vector<1x16xf32> to vector<32x16xf32>
    %229 = arith.addf %227, %228 : vector<32x16xf32>
    %230 = arith.addf %229, %201 : vector<32x16xf32>
    %cst_98 = arith.constant 0.000000e+00 : f32
    %231 = vector.broadcast %cst_98 : f32 to vector<32x16xf32>
    %232 = arith.maximumf %230, %231 : vector<32x16xf32>
    %233 = vector.shape_cast %232 : vector<32x16xf32> to vector<2x4x4x16xf32>
    %234 = vector.extract_strided_slice %233 {offsets = [0, 0, 0, 0], sizes = [2, 4, 1, 16], strides = [1, 1, 1, 1]} : vector<2x4x4x16xf32> to vector<2x4x1x16xf32>
    %235 = vector.shape_cast %234 : vector<2x4x1x16xf32> to vector<2x4x16xf32>
    %236 = vector.extract_strided_slice %233 {offsets = [0, 0, 1, 0], sizes = [2, 4, 1, 16], strides = [1, 1, 1, 1]} : vector<2x4x4x16xf32> to vector<2x4x1x16xf32>
    %237 = vector.shape_cast %236 : vector<2x4x1x16xf32> to vector<2x4x16xf32>
    %238 = vector.extract_strided_slice %233 {offsets = [0, 0, 2, 0], sizes = [2, 4, 1, 16], strides = [1, 1, 1, 1]} : vector<2x4x4x16xf32> to vector<2x4x1x16xf32>
    %239 = vector.shape_cast %238 : vector<2x4x1x16xf32> to vector<2x4x16xf32>
    %240 = vector.extract_strided_slice %233 {offsets = [0, 0, 3, 0], sizes = [2, 4, 1, 16], strides = [1, 1, 1, 1]} : vector<2x4x4x16xf32> to vector<2x4x1x16xf32>
    %241 = vector.shape_cast %240 : vector<2x4x1x16xf32> to vector<2x4x16xf32>
    %242 = tpu.concatenate %235, %237, %239, %241 in 2 : vector<2x4x16xf32>, vector<2x4x16xf32>, vector<2x4x16xf32>, vector<2x4x16xf32> -> vector<2x4x64xf32>
    %243 = vector.extract_strided_slice %242 {offsets = [0, 0, 0], sizes = [2, 1, 64], strides = [1, 1, 1]} : vector<2x4x64xf32> to vector<2x1x64xf32>
    %244 = vector.shape_cast %243 : vector<2x1x64xf32> to vector<2x64xf32>
    %245 = vector.extract_strided_slice %242 {offsets = [0, 1, 0], sizes = [2, 1, 64], strides = [1, 1, 1]} : vector<2x4x64xf32> to vector<2x1x64xf32>
    %246 = vector.shape_cast %245 : vector<2x1x64xf32> to vector<2x64xf32>
    %247 = vector.extract_strided_slice %242 {offsets = [0, 2, 0], sizes = [2, 1, 64], strides = [1, 1, 1]} : vector<2x4x64xf32> to vector<2x1x64xf32>
    %248 = vector.shape_cast %247 : vector<2x1x64xf32> to vector<2x64xf32>
    %249 = vector.extract_strided_slice %242 {offsets = [0, 3, 0], sizes = [2, 1, 64], strides = [1, 1, 1]} : vector<2x4x64xf32> to vector<2x1x64xf32>
    %250 = vector.shape_cast %249 : vector<2x1x64xf32> to vector<2x64xf32>
    %251 = tpu.concatenate %244, %246, %248, %250 in 1 : vector<2x64xf32>, vector<2x64xf32>, vector<2x64xf32>, vector<2x64xf32> -> vector<2x256xf32>
    %c0_99 = arith.constant 0 : index
    %c0_100 = arith.constant 0 : index
    %c0_101 = arith.constant 0 : index
    %252 = vector.load %arg10[%c0_99, %c0_100, %c0_101] : memref<1x2x256xf32, #tpu.memory_space<vmem>>, vector<1x2x256xf32>
    %253 = vector.shape_cast %252 : vector<1x2x256xf32> to vector<2x256xf32>
    %254 = vector.shape_cast %251 : vector<2x256xf32> to vector<1x2x256xf32>
    tpu.vector_store %arg10[%c0_99, %c0_100, %c0_101], %254 {strides = array<i32>} : memref<1x2x256xf32, #tpu.memory_space<vmem>>, vector<1x2x256xf32>,
    return
  }
  func.func @transform_0(%arg0: i32) -> (i32, i32, i32, i32) {
    %c0_i32 = arith.constant 0 : i32
    %c0_i32_0 = arith.constant 0 : i32
    %c0_i32_1 = arith.constant 0 : i32
    %c0_i32_2 = arith.constant 0 : i32
    return %arg0, %c0_i32, %c0_i32_0, %c0_i32_1 : i32, i32, i32, i32
  }
  func.func @transform_1(%arg0: i32) -> (i32, i32) {
    %c0_i32 = arith.constant 0 : i32
    %c0_i32_0 = arith.constant 0 : i32
    %c0_i32_1 = arith.constant 0 : i32
    return %c0_i32, %c0_i32_0 : i32, i32
  }
  func.func @transform_2(%arg0: i32) -> (i32, i32) {
    %c0_i32 = arith.constant 0 : i32
    %c0_i32_0 = arith.constant 0 : i32
    %c0_i32_1 = arith.constant 0 : i32
    return %c0_i32, %c0_i32_0 : i32, i32
  }
  func.func @transform_3(%arg0: i32) -> (i32, i32) {
    %c0_i32 = arith.constant 0 : i32
    %c0_i32_0 = arith.constant 0 : i32
    %c0_i32_1 = arith.constant 0 : i32
    return %c0_i32, %c0_i32_0 : i32, i32
  }
  func.func @transform_4(%arg0: i32) -> (i32, i32) {
    %c0_i32 = arith.constant 0 : i32
    %c0_i32_0 = arith.constant 0 : i32
    %c0_i32_1 = arith.constant 0 : i32
    return %c0_i32, %c0_i32_0 : i32, i32
  }
  func.func @transform_5(%arg0: i32) -> (i32, i32) {
    %c0_i32 = arith.constant 0 : i32
    %c0_i32_0 = arith.constant 0 : i32
    %c0_i32_1 = arith.constant 0 : i32
    return %c0_i32, %c0_i32_0 : i32, i32
  }
  func.func @transform_6(%arg0: i32) -> (i32, i32) {
    %c0_i32 = arith.constant 0 : i32
    %c0_i32_0 = arith.constant 0 : i32
    %c0_i32_1 = arith.constant 0 : i32
    return %c0_i32, %c0_i32_0 : i32, i32
  }
  func.func @transform_7(%arg0: i32) -> (i32, i32) {
    %c0_i32 = arith.constant 0 : i32
    %c0_i32_0 = arith.constant 0 : i32
    %c0_i32_1 = arith.constant 0 : i32
    return %c0_i32, %c0_i32_0 : i32, i32
  }
  func.func @transform_8(%arg0: i32) -> (i32, i32, i32) {
    %c0_i32 = arith.constant 0 : i32
    %c0_i32_0 = arith.constant 0 : i32
    %c0_i32_1 = arith.constant 0 : i32
    return %arg0, %c0_i32, %c0_i32_0 : i32, i32, i32
  }
  func.func @transform_9(%arg0: i32) -> (i32, i32, i32) {
    %c0_i32 = arith.constant 0 : i32
    %c0_i32_0 = arith.constant 0 : i32
    %c0_i32_1 = arith.constant 0 : i32
    return %arg0, %c0_i32, %c0_i32_0 : i32, i32, i32
  }
}

</mosaic_0001>

<llo_original>
// kernel: kdfpn_forward.1
$region0: #{kdfpn_forward.1}
  #allocation0 [shape = 'u32[]', space=smem, size = 0x4, offset = 0x4, fixed_abs, tag = 'smem constant byte address 0x4 - core index']
  #allocation1 [shape = 'u32[144,128]{1,0:T(1,128)}', space=vmem, size = 0x12000, scoped, tag = 'internal scratch']
  #allocation2 [shape = 'f32[2,10,10,8]{3,2,1,0:T(8,128)}', space=vmem, size = 0x28000, scoped, tag = 'scratch operand']
  #allocation3 [shape = 'f32[2,6,6,16]{3,2,1,0:T(8,128)}', space=vmem, size = 0xc000, scoped, tag = 'scratch operand']
  %s0 = inlined_call_operand.vmem [shape: f32[2,11,11,16], index: 0, kind: input, shape index: {}]
  %s1 = inlined_call_operand.vmem [shape: f32[256,8], index: 1, kind: input, shape index: {}]
  %s2 = inlined_call_operand.vmem [shape: f32[128,8], index: 2, kind: input, shape index: {}]
  %s3 = inlined_call_operand.vmem [shape: f32[128,8], index: 3, kind: input, shape index: {}]
  %s4 = inlined_call_operand.vmem [shape: f32[128,16], index: 4, kind: input, shape index: {}]
  %s5 = inlined_call_operand.vmem [shape: f32[256,16], index: 5, kind: input, shape index: {}]
  %s6 = inlined_call_operand.vmem [shape: f32[8,16], index: 6, kind: input, shape index: {}]
  %s7 = inlined_call_operand.vmem [shape: f32[6,16], index: 7, kind: input, shape index: {}]
  %s8 = inlined_call_operand.vmem [shape: f32[1,2,512], index: 8, kind: output, shape index: {0}]
  %s9 = inlined_call_operand.vmem [shape: f32[1,2,256], index: 9, kind: output, shape index: {1}]
  %10 = xla_tuple %s8, %s9
  %s11 = sld [smem:[#allocation0]]
  $region50: #{kdfpn_forward.1} parent=0
    _
  %s13 = ssub.s32 1, %s11
  %s14 = scalar_select 0, %s13, %s11
  // Predicated region
  $region2: #{kdfpn_forward.1} parent=0 // pred_check
    _
  $region3: #{kdfpn_forward.1} parent=0 // pred_check_branch
    %16 = sbr.rel (0) target = $region5
  $region4: #{kdfpn_forward.1} parent=0 // pred_region
    _
  $region5: #{kdfpn_forward.1} parent=0 // pred_fallthru
    _
  // Predicated region
  $region6: #{kdfpn_forward.1} parent=0 // pred_check
    _
  $region7: #{kdfpn_forward.1} parent=0 // pred_check_branch
    %18 = sbr.rel (0) target = $region9
  $region8: #{kdfpn_forward.1} parent=0 // pred_region
    _
  $region9: #{kdfpn_forward.1} parent=0 // pred_fallthru
    _
  // Predicated region
  $region10: #{kdfpn_forward.1} parent=0 // pred_check
    _
  $region11: #{kdfpn_forward.1} parent=0 // pred_check_branch
    %20 = sbr.rel (0) target = $region13
  $region12: #{kdfpn_forward.1} parent=0 // pred_region
    _
  $region13: #{kdfpn_forward.1} parent=0 // pred_fallthru
    _
  // Predicated region
  $region14: #{kdfpn_forward.1} parent=0 // pred_check
    _
  $region15: #{kdfpn_forward.1} parent=0 // pred_check_branch
    %22 = sbr.rel (0) target = $region17
  $region16: #{kdfpn_forward.1} parent=0 // pred_region
    _
  $region17: #{kdfpn_forward.1} parent=0 // pred_fallthru
    _
  // Predicated region
  $region18: #{kdfpn_forward.1} parent=0 // pred_check
    _
  $region19: #{kdfpn_forward.1} parent=0 // pred_check_branch
    %24 = sbr.rel (0) target = $region21
  $region20: #{kdfpn_forward.1} parent=0 // pred_region
    _
  $region21: #{kdfpn_forward.1} parent=0 // pred_fallthru
    _
  // Predicated region
  $region22: #{kdfpn_forward.1} parent=0 // pred_check
    _
  $region23: #{kdfpn_forward.1} parent=0 // pred_check_branch
    %26 = sbr.rel (0) target = $region25
  $region24: #{kdfpn_forward.1} parent=0 // pred_region
    _
  $region25: #{kdfpn_forward.1} parent=0 // pred_fallthru
    _
  // Predicated region
  $region26: #{kdfpn_forward.1} parent=0 // pred_check
    _
  $region27: #{kdfpn_forward.1} parent=0 // pred_check_branch
    %28 = sbr.rel (0) target = $region29
  $region28: #{kdfpn_forward.1} parent=0 // pred_region
    _
  $region29: #{kdfpn_forward.1} parent=0 // pred_fallthru
    _
  // Predicated region
  $region30: #{kdfpn_forward.1} parent=0 // pred_check
    _
  $region31: #{kdfpn_forward.1} parent=0 // pred_check_branch
    %30 = sbr.rel (0) target = $region33
  $region32: #{kdfpn_forward.1} parent=0 // pred_region
    _
  $region33: #{kdfpn_forward.1} parent=0 // pred_fallthru
    _
  %v31 = vld [vmem:[%s7] sm:$0x3f]
  %vm32 = vcmask 64512
  %33 = vst.msk [vmem:[#allocation2] sm:$0xff] %vm32, 0.0
  %vm34 = vcmask 58368
  %35 = vst.msk [vmem:[#allocation2 + $0x8] sm:$0x3] %vm34, 0.0
  %36 = vst.msk [vmem:[#allocation2 + $0xa0] sm:$0xff] %vm32, 0.0
  %37 = vst.msk [vmem:[#allocation2 + $0xa8] sm:$0x3] %vm34, 0.0
  %s38 = scalar_lea.vmem [#allocation2], 144
  %39 = vst.msk [vmem:[%s38] sm:$0xff] %vm32, 0.0
  %40 = vst.msk [vmem:[%s38 + $0x8] sm:$0x3] %vm34, 0.0
  %41 = vst.msk [vmem:[%s38 + $0xa0] sm:$0xff] %vm32, 0.0
  %42 = vst.msk [vmem:[%s38 + $0xa8] sm:$0x3] %vm34, 0.0
  %vm43 = vcmask 57344
  %44 = vst.msk [vmem:[#allocation2] sm:$0x1] %vm43, 0.0
  %45 = vst.msk [vmem:[#allocation2 + $0x10] sm:$0x1] %vm43, 0.0
  %46 = vst.msk [vmem:[#allocation2 + $0x20] sm:$0x1] %vm43, 0.0
  %47 = vst.msk [vmem:[#allocation2 + $0x30] sm:$0x1] %vm43, 0.0
  %48 = vst.msk [vmem:[#allocation2 + $0x40] sm:$0x1] %vm43, 0.0
  %49 = vst.msk [vmem:[#allocation2 + $0x50] sm:$0x1] %vm43, 0.0
  %50 = vst.msk [vmem:[#allocation2 + $0x60] sm:$0x1] %vm43, 0.0
  %51 = vst.msk [vmem:[#allocation2 + $0x70] sm:$0x1] %vm43, 0.0
  %52 = vst.msk [vmem:[#allocation2 + $0x80] sm:$0x1] %vm43, 0.0
  %53 = vst.msk [vmem:[#allocation2 + $0x90] sm:$0x1] %vm43, 0.0
  %54 = vst.msk [vmem:[#allocation2 + $0xa0] sm:$0x1] %vm43, 0.0
  %55 = vst.msk [vmem:[#allocation2 + $0xb0] sm:$0x1] %vm43, 0.0
  %56 = vst.msk [vmem:[#allocation2 + $0xc0] sm:$0x1] %vm43, 0.0
  %57 = vst.msk [vmem:[#allocation2 + $0xd0] sm:$0x1] %vm43, 0.0
  %58 = vst.msk [vmem:[#allocation2 + $0xe0] sm:$0x1] %vm43, 0.0
  %59 = vst.msk [vmem:[#allocation2 + $0xf0] sm:$0x1] %vm43, 0.0
  %60 = vst.msk [vmem:[#allocation2 + $0x100] sm:$0x1] %vm43, 0.0
  %61 = vst.msk [vmem:[#allocation2 + $0x110] sm:$0x1] %vm43, 0.0
  %62 = vst.msk [vmem:[#allocation2 + $0x120] sm:$0x1] %vm43, 0.0
  %63 = vst.msk [vmem:[#allocation2 + $0x130] sm:$0x1] %vm43, 0.0
  %64 = vst.msk [vmem:[#allocation2 + $0x9] sm:$0x1] %vm43, 0.0
  %65 = vst.msk [vmem:[#allocation2 + $0x19] sm:$0x1] %vm43, 0.0
  %66 = vst.msk [vmem:[#allocation2 + $0x29] sm:$0x1] %vm43, 0.0
  %67 = vst.msk [vmem:[#allocation2 + $0x39] sm:$0x1] %vm43, 0.0
  %68 = vst.msk [vmem:[#allocation2 + $0x49] sm:$0x1] %vm43, 0.0
  %69 = vst.msk [vmem:[#allocation2 + $0x59] sm:$0x1] %vm43, 0.0
  %70 = vst.msk [vmem:[#allocation2 + $0x69] sm:$0x1] %vm43, 0.0
  %71 = vst.msk [vmem:[#allocation2 + $0x79] sm:$0x1] %vm43, 0.0
  %72 = vst.msk [vmem:[#allocation2 + $0x89] sm:$0x1] %vm43, 0.0
  %73 = vst.msk [vmem:[#allocation2 + $0x99] sm:$0x1] %vm43, 0.0
  %74 = vst.msk [vmem:[#allocation2 + $0xa9] sm:$0x1] %vm43, 0.0
  %75 = vst.msk [vmem:[#allocation2 + $0xb9] sm:$0x1] %vm43, 0.0
  %76 = vst.msk [vmem:[#allocation2 + $0xc9] sm:$0x1] %vm43, 0.0
  %77 = vst.msk [vmem:[#allocation2 + $0xd9] sm:$0x1] %vm43, 0.0
  %78 = vst.msk [vmem:[#allocation2 + $0xe9] sm:$0x1] %vm43, 0.0
  %79 = vst.msk [vmem:[#allocation2 + $0xf9] sm:$0x1] %vm43, 0.0
  %80 = vst.msk [vmem:[#allocation2 + $0x109] sm:$0x1] %vm43, 0.0
  %81 = vst.msk [vmem:[#allocation2 + $0x119] sm:$0x1] %vm43, 0.0
  %82 = vst.msk [vmem:[#allocation2 + $0x129] sm:$0x1] %vm43, 0.0
  %83 = vst.msk [vmem:[#allocation2 + $0x139] sm:$0x1] %vm43, 0.0
  %vm84 = vcmask 128000
  %85 = vst.msk [vmem:[#allocation3] sm:$0x3f] %vm84, 0.0
  %86 = vst.msk [vmem:[#allocation3 + $0x30] sm:$0x3f] %vm84, 0.0
  %s87 = scalar_lea.vmem [#allocation3], 40
  %88 = vst.msk [vmem:[%s87] sm:$0x3f] %vm84, 0.0
  %89 = vst.msk [vmem:[%s87 + $0x30] sm:$0x3f] %vm84, 0.0
  %vm90 = vcmask 122880
  %91 = vst.msk [vmem:[#allocation3] sm:$0x1] %vm90, 0.0
  %92 = vst.msk [vmem:[#allocation3 + $0x8] sm:$0x1] %vm90, 0.0
  %93 = vst.msk [vmem:[#allocation3 + $0x10] sm:$0x1] %vm90, 0.0
  %94 = vst.msk [vmem:[#allocation3 + $0x18] sm:$0x1] %vm90, 0.0
  %95 = vst.msk [vmem:[#allocation3 + $0x20] sm:$0x1] %vm90, 0.0
  %96 = vst.msk [vmem:[#allocation3 + $0x28] sm:$0x1] %vm90, 0.0
  %97 = vst.msk [vmem:[#allocation3 + $0x30] sm:$0x1] %vm90, 0.0
  %98 = vst.msk [vmem:[#allocation3 + $0x38] sm:$0x1] %vm90, 0.0
  %99 = vst.msk [vmem:[#allocation3 + $0x40] sm:$0x1] %vm90, 0.0
  %100 = vst.msk [vmem:[#allocation3 + $0x48] sm:$0x1] %vm90, 0.0
  %101 = vst.msk [vmem:[#allocation3 + $0x50] sm:$0x1] %vm90, 0.0
  %102 = vst.msk [vmem:[#allocation3 + $0x58] sm:$0x1] %vm90, 0.0
  %103 = vst.msk [vmem:[#allocation3 + $0x5] sm:$0x1] %vm90, 0.0
  %104 = vst.msk [vmem:[#allocation3 + $0xd] sm:$0x1] %vm90, 0.0
  %105 = vst.msk [vmem:[#allocation3 + $0x15] sm:$0x1] %vm90, 0.0
  %106 = vst.msk [vmem:[#allocation3 + $0x1d] sm:$0x1] %vm90, 0.0
  %107 = vst.msk [vmem:[#allocation3 + $0x25] sm:$0x1] %vm90, 0.0
  %108 = vst.msk [vmem:[#allocation3 + $0x2d] sm:$0x1] %vm90, 0.0
  %109 = vst.msk [vmem:[#allocation3 + $0x35] sm:$0x1] %vm90, 0.0
  %110 = vst.msk [vmem:[#allocation3 + $0x3d] sm:$0x1] %vm90, 0.0
  %111 = vst.msk [vmem:[#allocation3 + $0x45] sm:$0x1] %vm90, 0.0
  %112 = vst.msk [vmem:[#allocation3 + $0x4d] sm:$0x1] %vm90, 0.0
  %113 = vst.msk [vmem:[#allocation3 + $0x55] sm:$0x1] %vm90, 0.0
  %114 = vst.msk [vmem:[#allocation3 + $0x5d] sm:$0x1] %vm90, 0.0
  %v115 = vld [vmem:[%s0] sm:$0xff]
  %v116 = vld [vmem:[%s0 + $0x8] sm:$0x7]
  %v117 = vld [vmem:[%s0 + $0x10] sm:$0xff]
  %v118 = vld [vmem:[%s0 + $0x18] sm:$0x7]
  %v119 = vld [vmem:[%s0 + $0x20] sm:$0xff]
  %v120 = vld [vmem:[%s0 + $0x28] sm:$0x7]
  %v121 = vld [vmem:[%s0 + $0x30] sm:$0xff]
  %v122 = vld [vmem:[%s0 + $0x38] sm:$0x7]
  %v123 = vld [vmem:[%s0 + $0x40] sm:$0xff]
  %v124 = vld [vmem:[%s0 + $0x48] sm:$0x7]
  %v125 = vld [vmem:[%s0 + $0x50] sm:$0xff]
  %v126 = vld [vmem:[%s0 + $0x58] sm:$0x7]
  %v127 = vld [vmem:[%s0 + $0x60] sm:$0xff]
  %v128 = vld [vmem:[%s0 + $0x68] sm:$0x7]
  %v129 = vld [vmem:[%s0 + $0x70] sm:$0xff]
  %v130 = vld [vmem:[%s0 + $0x78] sm:$0x7]
  %v131 = vld [vmem:[%s0 + $0x80] sm:$0xff]
  %v132 = vld [vmem:[%s0 + $0x88] sm:$0x7]
  %v133 = vld [vmem:[%s0 + $0x90] sm:$0xff]
  %v134 = vld [vmem:[%s0 + $0x98] sm:$0x7]
  %v135 = vld [vmem:[%s0 + $0xa0] sm:$0xff]
  %v136 = vld [vmem:[%s0 + $0xa8] sm:$0x7]
  %v137 = vld [vmem:[%s0 + $0xb0] sm:$0xff]
  %v138 = vld [vmem:[%s0 + $0xb8] sm:$0x7]
  %v139 = vld [vmem:[%s0 + $0xc0] sm:$0xff]
  %v140 = vld [vmem:[%s0 + $0xc8] sm:$0x7]
  %v141 = vld [vmem:[%s0 + $0xd0] sm:$0xff]
  %v142 = vld [vmem:[%s0 + $0xd8] sm:$0x7]
  %v143 = vld [vmem:[%s0 + $0xe0] sm:$0xff]
  %v144 = vld [vmem:[%s0 + $0xe8] sm:$0x7]
  %v145 = vld [vmem:[%s0 + $0xf0] sm:$0xff]
  %v146 = vld [vmem:[%s0 + $0xf8] sm:$0x7]
  %v147 = vld [vmem:[%s0 + $0x100] sm:$0xff]
  %v148 = vld [vmem:[%s0 + $0x108] sm:$0x7]
  %v149 = vld [vmem:[%s0 + $0x110] sm:$0xff]
  %v150 = vld [vmem:[%s0 + $0x118] sm:$0x7]
  %v151 = vld [vmem:[%s0 + $0x120] sm:$0xff]
  %v152 = vld [vmem:[%s0 + $0x128] sm:$0x7]
  %v153 = vld [vmem:[%s0 + $0x130] sm:$0xff]
  %v154 = vld [vmem:[%s0 + $0x138] sm:$0x7]
  %v155 = vld [vmem:[%s0 + $0x140] sm:$0xff]
  %v156 = vld [vmem:[%s0 + $0x148] sm:$0x7]
  %v157 = vld [vmem:[%s0 + $0x150] sm:$0xff]
  %v158 = vld [vmem:[%s0 + $0x158] sm:$0x7]
  %vm191 = vcmask 1046528
  %v192 = vrot.slane %v115, 1
  %v193 = vrot.slane %v116, 1
  %v194 = vsel %vm191, %v192, %v193
  %v195 = vrot.slane %v117, 1
  %v196 = vrot.slane %v118, 1
  %v197 = vsel %vm191, %v195, %v196
  %v198 = vrot.slane %v119, 1
  %v199 = vrot.slane %v120, 1
  %v200 = vsel %vm191, %v198, %v199
  %v201 = vrot.slane %v121, 1
  %v202 = vrot.slane %v122, 1
  %v203 = vsel %vm191, %v201, %v202
  %v204 = vrot.slane %v123, 1
  %v205 = vrot.slane %v124, 1
  %v206 = vsel %vm191, %v204, %v205
  %v207 = vrot.slane %v125, 1
  %v208 = vrot.slane %v126, 1
  %v209 = vsel %vm191, %v207, %v208
  %v210 = vrot.slane %v127, 1
  %v211 = vrot.slane %v128, 1
  %v212 = vsel %vm191, %v210, %v211
  %v213 = vrot.slane %v129, 1
  %v214 = vrot.slane %v130, 1
  %v215 = vsel %vm191, %v213, %v214
  %v216 = vrot.slane %v137, 1
  %v217 = vrot.slane %v138, 1
  %v218 = vsel %vm191, %v216, %v217
  %v219 = vrot.slane %v139, 1
  %v220 = vrot.slane %v140, 1
  %v221 = vsel %vm191, %v219, %v220
  %v222 = vrot.slane %v141, 1
  %v223 = vrot.slane %v142, 1
  %v224 = vsel %vm191, %v222, %v223
  %v225 = vrot.slane %v143, 1
  %v226 = vrot.slane %v144, 1
  %v227 = vsel %vm191, %v225, %v226
  %v228 = vrot.slane %v145, 1
  %v229 = vrot.slane %v146, 1
  %v230 = vsel %vm191, %v228, %v229
  %v231 = vrot.slane %v147, 1
  %v232 = vrot.slane %v148, 1
  %v233 = vsel %vm191, %v231, %v232
  %v234 = vrot.slane %v149, 1
  %v235 = vrot.slane %v150, 1
  %v236 = vsel %vm191, %v234, %v235
  %v237 = vrot.slane %v151, 1
  %v238 = vrot.slane %v152, 1
  %v239 = vsel %vm191, %v237, %v238
  %vm240 = vcmask 1045504
  %v241 = vrot.slane %v115, 2
  %v242 = vrot.slane %v116, 2
  %v243 = vsel %vm240, %v241, %v242
  %v244 = vrot.slane %v117, 2
  %v245 = vrot.slane %v118, 2
  %v246 = vsel %vm240, %v244, %v245
  %v247 = vrot.slane %v119, 2
  %v248 = vrot.slane %v120, 2
  %v249 = vsel %vm240, %v247, %v248
  %v250 = vrot.slane %v121, 2
  %v251 = vrot.slane %v122, 2
  %v252 = vsel %vm240, %v250, %v251
  %v253 = vrot.slane %v123, 2
  %v254 = vrot.slane %v124, 2
  %v255 = vsel %vm240, %v253, %v254
  %v256 = vrot.slane %v125, 2
  %v257 = vrot.slane %v126, 2
  %v258 = vsel %vm240, %v256, %v257
  %v259 = vrot.slane %v127, 2
  %v260 = vrot.slane %v128, 2
  %v261 = vsel %vm240, %v259, %v260
  %v262 = vrot.slane %v129, 2
  %v263 = vrot.slane %v130, 2
  %v264 = vsel %vm240, %v262, %v263
  %v265 = vrot.slane %v137, 2
  %v266 = vrot.slane %v138, 2
  %v267 = vsel %vm240, %v265, %v266
  %v268 = vrot.slane %v139, 2
  %v269 = vrot.slane %v140, 2
  %v270 = vsel %vm240, %v268, %v269
  %v271 = vrot.slane %v141, 2
  %v272 = vrot.slane %v142, 2
  %v273 = vsel %vm240, %v271, %v272
  %v274 = vrot.slane %v143, 2
  %v275 = vrot.slane %v144, 2
  %v276 = vsel %vm240, %v274, %v275
  %v277 = vrot.slane %v145, 2
  %v278 = vrot.slane %v146, 2
  %v279 = vsel %vm240, %v277, %v278
  %v280 = vrot.slane %v147, 2
  %v281 = vrot.slane %v148, 2
  %v282 = vsel %vm240, %v280, %v281
  %v283 = vrot.slane %v149, 2
  %v284 = vrot.slane %v150, 2
  %v285 = vsel %vm240, %v283, %v284
  %v286 = vrot.slane %v151, 2
  %v287 = vrot.slane %v152, 2
  %v288 = vsel %vm240, %v286, %v287
  %vm289 = vcmask 1044480
  %v290 = vrot.slane %v115, 3
  %v291 = vrot.slane %v116, 3
  %v292 = vsel %vm289, %v290, %v291
  %v293 = vrot.slane %v117, 3
  %v294 = vrot.slane %v118, 3
  %v295 = vsel %vm289, %v293, %v294
  %v296 = vrot.slane %v119, 3
  %v297 = vrot.slane %v120, 3
  %v298 = vsel %vm289, %v296, %v297
  %v299 = vrot.slane %v121, 3
  %v300 = vrot.slane %v122, 3
  %v301 = vsel %vm289, %v299, %v300
  %v302 = vrot.slane %v123, 3
  %v303 = vrot.slane %v124, 3
  %v304 = vsel %vm289, %v302, %v303
  %v305 = vrot.slane %v125, 3
  %v306 = vrot.slane %v126, 3
  %v307 = vsel %vm289, %v305, %v306
  %v308 = vrot.slane %v127, 3
  %v309 = vrot.slane %v128, 3
  %v310 = vsel %vm289, %v308, %v309
  %v311 = vrot.slane %v129, 3
  %v312 = vrot.slane %v130, 3
  %v313 = vsel %vm289, %v311, %v312
  %v314 = vrot.slane %v137, 3
  %v315 = vrot.slane %v138, 3
  %v316 = vsel %vm289, %v314, %v315
  %v317 = vrot.slane %v139, 3
  %v318 = vrot.slane %v140, 3
  %v319 = vsel %vm289, %v317, %v318
  %v320 = vrot.slane %v141, 3
  %v321 = vrot.slane %v142, 3
  %v322 = vsel %vm289, %v320, %v321
  %v323 = vrot.slane %v143, 3
  %v324 = vrot.slane %v144, 3
  %v325 = vsel %vm289, %v323, %v324
  %v326 = vrot.slane %v145, 3
  %v327 = vrot.slane %v146, 3
  %v328 = vsel %vm289, %v326, %v327
  %v329 = vrot.slane %v147, 3
  %v330 = vrot.slane %v148, 3
  %v331 = vsel %vm289, %v329, %v330
  %v332 = vrot.slane %v149, 3
  %v333 = vrot.slane %v150, 3
  %v334 = vsel %vm289, %v332, %v333
  %v335 = vrot.slane %v151, 3
  %v336 = vrot.slane %v152, 3
  %v337 = vsel %vm289, %v335, %v336
  %v342 = vrot.slane %v131, 1
  %v343 = vrot.slane %v132, 1
  %v344 = vsel %vm191, %v342, %v343
  %v345 = vrot.slane %v153, 1
  %v346 = vrot.slane %v154, 1
  %v347 = vsel %vm191, %v345, %v346
  %v348 = vrot.slane %v131, 2
  %v349 = vrot.slane %v132, 2
  %v350 = vsel %vm240, %v348, %v349
  %v351 = vrot.slane %v153, 2
  %v352 = vrot.slane %v154, 2
  %v353 = vsel %vm240, %v351, %v352
  %v354 = vrot.slane %v131, 3
  %v355 = vrot.slane %v132, 3
  %v356 = vsel %vm289, %v354, %v355
  %v357 = vrot.slane %v153, 3
  %v358 = vrot.slane %v154, 3
  %v359 = vsel %vm289, %v357, %v358
  %v364 = vrot.slane %v133, 1
  %v365 = vrot.slane %v134, 1
  %v366 = vsel %vm191, %v364, %v365
  %v367 = vrot.slane %v155, 1
  %v368 = vrot.slane %v156, 1
  %v369 = vsel %vm191, %v367, %v368
  %v370 = vrot.slane %v133, 2
  %v371 = vrot.slane %v134, 2
  %v372 = vsel %vm240, %v370, %v371
  %v373 = vrot.slane %v155, 2
  %v374 = vrot.slane %v156, 2
  %v375 = vsel %vm240, %v373, %v374
  %v376 = vrot.slane %v133, 3
  %v377 = vrot.slane %v134, 3
  %v378 = vsel %vm289, %v376, %v377
  %v379 = vrot.slane %v155, 3
  %v380 = vrot.slane %v156, 3
  %v381 = vsel %vm289, %v379, %v380
  %v386 = vrot.slane %v135, 1
  %v387 = vrot.slane %v136, 1
  %v388 = vsel %vm191, %v386, %v387
  %v389 = vrot.slane %v157, 1
  %v390 = vrot.slane %v158, 1
  %v391 = vsel %vm191, %v389, %v390
  %v392 = vrot.slane %v135, 2
  %v393 = vrot.slane %v136, 2
  %v394 = vsel %vm240, %v392, %v393
  %v395 = vrot.slane %v157, 2
  %v396 = vrot.slane %v158, 2
  %v397 = vsel %vm240, %v395, %v396
  %v398 = vrot.slane %v135, 3
  %v399 = vrot.slane %v136, 3
  %v400 = vsel %vm289, %v398, %v399
  %v401 = vrot.slane %v157, 3
  %v402 = vrot.slane %v158, 3
  %v403 = vsel %vm289, %v401, %v402
  %404 = vrot.lane.b32.xlu0 %v194, 16
  %v405 = vpop.permute.xlu0 %404
  %406 = vrot.lane.b32.xlu0 %v197, 16
  %v407 = vpop.permute.xlu0 %406
  %408 = vrot.lane.b32.xlu0 %v200, 16
  %v409 = vpop.permute.xlu0 %408
  %410 = vrot.lane.b32.xlu0 %v203, 16
  %v411 = vpop.permute.xlu0 %410
  %412 = vrot.lane.b32.xlu0 %v206, 16
  %v413 = vpop.permute.xlu0 %412
  %414 = vrot.lane.b32.xlu0 %v209, 16
  %v415 = vpop.permute.xlu0 %414
  %416 = vrot.lane.b32.xlu0 %v212, 16
  %v417 = vpop.permute.xlu0 %416
  %418 = vrot.lane.b32.xlu0 %v215, 16
  %v419 = vpop.permute.xlu0 %418
  %420 = vrot.lane.b32.xlu0 %v218, 16
  %v421 = vpop.permute.xlu0 %420
  %422 = vrot.lane.b32.xlu0 %v221, 16
  %v423 = vpop.permute.xlu0 %422
  %424 = vrot.lane.b32.xlu0 %v224, 16
  %v425 = vpop.permute.xlu0 %424
  %426 = vrot.lane.b32.xlu0 %v227, 16
  %v427 = vpop.permute.xlu0 %426
  %428 = vrot.lane.b32.xlu0 %v230, 16
  %v429 = vpop.permute.xlu0 %428
  %430 = vrot.lane.b32.xlu0 %v233, 16
  %v431 = vpop.permute.xlu0 %430
  %432 = vrot.lane.b32.xlu0 %v236, 16
  %v433 = vpop.permute.xlu0 %432
  %434 = vrot.lane.b32.xlu0 %v239, 16
  %v435 = vpop.permute.xlu0 %434
  %452 = vrot.lane.b32.xlu0 %v243, 32
  %v453 = vpop.permute.xlu0 %452
  %454 = vrot.lane.b32.xlu0 %v246, 32
  %v455 = vpop.permute.xlu0 %454
  %456 = vrot.lane.b32.xlu0 %v249, 32
  %v457 = vpop.permute.xlu0 %456
  %458 = vrot.lane.b32.xlu0 %v252, 32
  %v459 = vpop.permute.xlu0 %458
  %460 = vrot.lane.b32.xlu0 %v255, 32
  %v461 = vpop.permute.xlu0 %460
  %462 = vrot.lane.b32.xlu0 %v258, 32
  %v463 = vpop.permute.xlu0 %462
  %464 = vrot.lane.b32.xlu0 %v261, 32
  %v465 = vpop.permute.xlu0 %464
  %466 = vrot.lane.b32.xlu0 %v264, 32
  %v467 = vpop.permute.xlu0 %466
  %468 = vrot.lane.b32.xlu0 %v267, 32
  %v469 = vpop.permute.xlu0 %468
  %470 = vrot.lane.b32.xlu0 %v270, 32
  %v471 = vpop.permute.xlu0 %470
  %472 = vrot.lane.b32.xlu0 %v273, 32
  %v473 = vpop.permute.xlu0 %472
  %474 = vrot.lane.b32.xlu0 %v276, 32
  %v475 = vpop.permute.xlu0 %474
  %476 = vrot.lane.b32.xlu0 %v279, 32
  %v477 = vpop.permute.xlu0 %476
  %478 = vrot.lane.b32.xlu0 %v282, 32
  %v479 = vpop.permute.xlu0 %478
  %480 = vrot.lane.b32.xlu0 %v285, 32
  %v481 = vpop.permute.xlu0 %480
  %482 = vrot.lane.b32.xlu0 %v288, 32
  %v483 = vpop.permute.xlu0 %482
  %500 = vrot.lane.b32.xlu0 %v292, 48
  %v501 = vpop.permute.xlu0 %500
  %502 = vrot.lane.b32.xlu0 %v295, 48
  %v503 = vpop.permute.xlu0 %502
  %504 = vrot.lane.b32.xlu0 %v298, 48
  %v505 = vpop.permute.xlu0 %504
  %506 = vrot.lane.b32.xlu0 %v301, 48
  %v507 = vpop.permute.xlu0 %506
  %508 = vrot.lane.b32.xlu0 %v304, 48
  %v509 = vpop.permute.xlu0 %508
  %510 = vrot.lane.b32.xlu0 %v307, 48
  %v511 = vpop.permute.xlu0 %510
  %512 = vrot.lane.b32.xlu0 %v310, 48
  %v513 = vpop.permute.xlu0 %512
  %514 = vrot.lane.b32.xlu0 %v313, 48
  %v515 = vpop.permute.xlu0 %514
  %516 = vrot.lane.b32.xlu0 %v316, 48
  %v517 = vpop.permute.xlu0 %516
  %518 = vrot.lane.b32.xlu0 %v319, 48
  %v519 = vpop.permute.xlu0 %518
  %520 = vrot.lane.b32.xlu0 %v322, 48
  %v521 = vpop.permute.xlu0 %520
  %522 = vrot.lane.b32.xlu0 %v325, 48
  %v523 = vpop.permute.xlu0 %522
  %524 = vrot.lane.b32.xlu0 %v328, 48
  %v525 = vpop.permute.xlu0 %524
  %526 = vrot.lane.b32.xlu0 %v331, 48
  %v527 = vpop.permute.xlu0 %526
  %528 = vrot.lane.b32.xlu0 %v334, 48
  %v529 = vpop.permute.xlu0 %528
  %530 = vrot.lane.b32.xlu0 %v337, 48
  %v531 = vpop.permute.xlu0 %530
  %548 = vrot.lane.b32.xlu0 %v117, 64
  %v549 = vpop.permute.xlu0 %548
  %550 = vrot.lane.b32.xlu0 %v119, 64
  %v551 = vpop.permute.xlu0 %550
  %552 = vrot.lane.b32.xlu0 %v121, 64
  %v553 = vpop.permute.xlu0 %552
  %554 = vrot.lane.b32.xlu0 %v123, 64
  %v555 = vpop.permute.xlu0 %554
  %556 = vrot.lane.b32.xlu0 %v125, 64
  %v557 = vpop.permute.xlu0 %556
  %558 = vrot.lane.b32.xlu0 %v127, 64
  %v559 = vpop.permute.xlu0 %558
  %560 = vrot.lane.b32.xlu0 %v129, 64
  %v561 = vpop.permute.xlu0 %560
  %562 = vrot.lane.b32.xlu0 %v131, 64
  %v563 = vpop.permute.xlu0 %562
  %564 = vrot.lane.b32.xlu0 %v139, 64
  %v565 = vpop.permute.xlu0 %564
  %566 = vrot.lane.b32.xlu0 %v141, 64
  %v567 = vpop.permute.xlu0 %566
  %568 = vrot.lane.b32.xlu0 %v143, 64
  %v569 = vpop.permute.xlu0 %568
  %570 = vrot.lane.b32.xlu0 %v145, 64
  %v571 = vpop.permute.xlu0 %570
  %572 = vrot.lane.b32.xlu0 %v147, 64
  %v573 = vpop.permute.xlu0 %572
  %574 = vrot.lane.b32.xlu0 %v149, 64
  %v575 = vpop.permute.xlu0 %574
  %576 = vrot.lane.b32.xlu0 %v151, 64
  %v577 = vpop.permute.xlu0 %576
  %578 = vrot.lane.b32.xlu0 %v153, 64
  %v579 = vpop.permute.xlu0 %578
  %596 = vrot.lane.b32.xlu0 %v197, 80
  %v597 = vpop.permute.xlu0 %596
  %598 = vrot.lane.b32.xlu0 %v200, 80
  %v599 = vpop.permute.xlu0 %598
  %600 = vrot.lane.b32.xlu0 %v203, 80
  %v601 = vpop.permute.xlu0 %600
  %602 = vrot.lane.b32.xlu0 %v206, 80
  %v603 = vpop.permute.xlu0 %602
  %604 = vrot.lane.b32.xlu0 %v209, 80
  %v605 = vpop.permute.xlu0 %604
  %606 = vrot.lane.b32.xlu0 %v212, 80
  %v607 = vpop.permute.xlu0 %606
  %608 = vrot.lane.b32.xlu0 %v215, 80
  %v609 = vpop.permute.xlu0 %608
  %610 = vrot.lane.b32.xlu0 %v344, 80
  %v611 = vpop.permute.xlu0 %610
  %612 = vrot.lane.b32.xlu0 %v221, 80
  %v613 = vpop.permute.xlu0 %612
  %614 = vrot.lane.b32.xlu0 %v224, 80
  %v615 = vpop.permute.xlu0 %614
  %616 = vrot.lane.b32.xlu0 %v227, 80
  %v617 = vpop.permute.xlu0 %616
  %618 = vrot.lane.b32.xlu0 %v230, 80
  %v619 = vpop.permute.xlu0 %618
  %620 = vrot.lane.b32.xlu0 %v233, 80
  %v621 = vpop.permute.xlu0 %620
  %622 = vrot.lane.b32.xlu0 %v236, 80
  %v623 = vpop.permute.xlu0 %622
  %624 = vrot.lane.b32.xlu0 %v239, 80
  %v625 = vpop.permute.xlu0 %624
  %626 = vrot.lane.b32.xlu0 %v347, 80
  %v627 = vpop.permute.xlu0 %626
  %644 = vrot.lane.b32.xlu0 %v246, 96
  %v645 = vpop.permute.xlu0 %644
  %646 = vrot.lane.b32.xlu0 %v249, 96
  %v647 = vpop.permute.xlu0 %646
  %648 = vrot.lane.b32.xlu0 %v252, 96
  %v649 = vpop.permute.xlu0 %648
  %650 = vrot.lane.b32.xlu0 %v255, 96
  %v651 = vpop.permute.xlu0 %650
  %652 = vrot.lane.b32.xlu0 %v258, 96
  %v653 = vpop.permute.xlu0 %652
  %654 = vrot.lane.b32.xlu0 %v261, 96
  %v655 = vpop.permute.xlu0 %654
  %656 = vrot.lane.b32.xlu0 %v264, 96
  %v657 = vpop.permute.xlu0 %656
  %658 = vrot.lane.b32.xlu0 %v350, 96
  %v659 = vpop.permute.xlu0 %658
  %660 = vrot.lane.b32.xlu0 %v270, 96
  %v661 = vpop.permute.xlu0 %660
  %662 = vrot.lane.b32.xlu0 %v273, 96
  %v663 = vpop.permute.xlu0 %662
  %664 = vrot.lane.b32.xlu0 %v276, 96
  %v665 = vpop.permute.xlu0 %664
  %666 = vrot.lane.b32.xlu0 %v279, 96
  %v667 = vpop.permute.xlu0 %666
  %668 = vrot.lane.b32.xlu0 %v282, 96
  %v669 = vpop.permute.xlu0 %668
  %670 = vrot.lane.b32.xlu0 %v285, 96
  %v671 = vpop.permute.xlu0 %670
  %672 = vrot.lane.b32.xlu0 %v288, 96
  %v673 = vpop.permute.xlu0 %672
  %674 = vrot.lane.b32.xlu0 %v353, 96
  %v675 = vpop.permute.xlu0 %674
  %692 = vrot.lane.b32.xlu0 %v295, 112
  %v693 = vpop.permute.xlu0 %692
  %694 = vrot.lane.b32.xlu0 %v298, 112
  %v695 = vpop.permute.xlu0 %694
  %696 = vrot.lane.b32.xlu0 %v301, 112
  %v697 = vpop.permute.xlu0 %696
  %698 = vrot.lane.b32.xlu0 %v304, 112
  %v699 = vpop.permute.xlu0 %698
  %700 = vrot.lane.b32.xlu0 %v307, 112
  %v701 = vpop.permute.xlu0 %700
  %702 = vrot.lane.b32.xlu0 %v310, 112
  %v703 = vpop.permute.xlu0 %702
  %704 = vrot.lane.b32.xlu0 %v313, 112
  %v705 = vpop.permute.xlu0 %704
  %706 = vrot.lane.b32.xlu0 %v356, 112
  %v707 = vpop.permute.xlu0 %706
  %708 = vrot.lane.b32.xlu0 %v319, 112
  %v709 = vpop.permute.xlu0 %708
  %710 = vrot.lane.b32.xlu0 %v322, 112
  %v711 = vpop.permute.xlu0 %710
  %712 = vrot.lane.b32.xlu0 %v325, 112
  %v713 = vpop.permute.xlu0 %712
  %714 = vrot.lane.b32.xlu0 %v328, 112
  %v715 = vpop.permute.xlu0 %714
  %716 = vrot.lane.b32.xlu0 %v331, 112
  %v717 = vpop.permute.xlu0 %716
  %718 = vrot.lane.b32.xlu0 %v334, 112
  %v719 = vpop.permute.xlu0 %718
  %720 = vrot.lane.b32.xlu0 %v337, 112
  %v721 = vpop.permute.xlu0 %720
  %722 = vrot.lane.b32.xlu0 %v359, 112
  %v723 = vpop.permute.xlu0 %722
  %740 = vrot.lane.b32.xlu0 %v344, 16
  %v741 = vpop.permute.xlu0 %740
  %742 = vrot.lane.b32.xlu0 %v366, 16
  %v743 = vpop.permute.xlu0 %742
  %744 = vrot.lane.b32.xlu0 %v347, 16
  %v745 = vpop.permute.xlu0 %744
  %746 = vrot.lane.b32.xlu0 %v369, 16
  %v747 = vpop.permute.xlu0 %746
  %752 = vrot.lane.b32.xlu0 %v350, 32
  %v753 = vpop.permute.xlu0 %752
  %754 = vrot.lane.b32.xlu0 %v372, 32
  %v755 = vpop.permute.xlu0 %754
  %756 = vrot.lane.b32.xlu0 %v353, 32
  %v757 = vpop.permute.xlu0 %756
  %758 = vrot.lane.b32.xlu0 %v375, 32
  %v759 = vpop.permute.xlu0 %758
  %764 = vrot.lane.b32.xlu0 %v356, 48
  %v765 = vpop.permute.xlu0 %764
  %766 = vrot.lane.b32.xlu0 %v378, 48
  %v767 = vpop.permute.xlu0 %766
  %768 = vrot.lane.b32.xlu0 %v359, 48
  %v769 = vpop.permute.xlu0 %768
  %770 = vrot.lane.b32.xlu0 %v381, 48
  %v771 = vpop.permute.xlu0 %770
  %776 = vrot.lane.b32.xlu0 %v133, 64
  %v777 = vpop.permute.xlu0 %776
  %778 = vrot.lane.b32.xlu0 %v135, 64
  %v779 = vpop.permute.xlu0 %778
  %780 = vrot.lane.b32.xlu0 %v155, 64
  %v781 = vpop.permute.xlu0 %780
  %782 = vrot.lane.b32.xlu0 %v157, 64
  %v783 = vpop.permute.xlu0 %782
  %788 = vrot.lane.b32.xlu0 %v366, 80
  %v789 = vpop.permute.xlu0 %788
  %790 = vrot.lane.b32.xlu0 %v388, 80
  %v791 = vpop.permute.xlu0 %790
  %792 = vrot.lane.b32.xlu0 %v369, 80
  %v793 = vpop.permute.xlu0 %792
  %794 = vrot.lane.b32.xlu0 %v391, 80
  %v795 = vpop.permute.xlu0 %794
  %800 = vrot.lane.b32.xlu0 %v372, 96
  %v801 = vpop.permute.xlu0 %800
  %802 = vrot.lane.b32.xlu0 %v394, 96
  %v803 = vpop.permute.xlu0 %802
  %804 = vrot.lane.b32.xlu0 %v375, 96
  %v805 = vpop.permute.xlu0 %804
  %806 = vrot.lane.b32.xlu0 %v397, 96
  %v807 = vpop.permute.xlu0 %806
  %812 = vrot.lane.b32.xlu0 %v378, 112
  %v813 = vpop.permute.xlu0 %812
  %814 = vrot.lane.b32.xlu0 %v400, 112
  %v815 = vpop.permute.xlu0 %814
  %816 = vrot.lane.b32.xlu0 %v381, 112
  %v817 = vpop.permute.xlu0 %816
  %818 = vrot.lane.b32.xlu0 %v403, 112
  %v819 = vpop.permute.xlu0 %818
  %vm824 = vcmask 130048
  %v825 = vsel %vm824, %v115, %v405
  %v826 = vsel %vm824, %v117, %v407
  %v827 = vsel %vm824, %v119, %v409
  %v828 = vsel %vm824, %v121, %v411
  %v829 = vsel %vm824, %v123, %v413
  %v830 = vsel %vm824, %v125, %v415
  %v831 = vsel %vm824, %v127, %v417
  %v832 = vsel %vm824, %v129, %v419
  %v833 = vsel %vm824, %v137, %v421
  %v834 = vsel %vm824, %v139, %v423
  %v835 = vsel %vm824, %v141, %v425
  %v836 = vsel %vm824, %v143, %v427
  %v837 = vsel %vm824, %v145, %v429
  %v838 = vsel %vm824, %v147, %v431
  %v839 = vsel %vm824, %v149, %v433
  %v840 = vsel %vm824, %v151, %v435
  %vm841 = vcmask 261120
  %v842 = vsel %vm841, %v825, %v453
  %v843 = vsel %vm841, %v826, %v455
  %v844 = vsel %vm841, %v827, %v457
  %v845 = vsel %vm841, %v828, %v459
  %v846 = vsel %vm841, %v829, %v461
  %v847 = vsel %vm841, %v830, %v463
  %v848 = vsel %vm841, %v831, %v465
  %v849 = vsel %vm841, %v832, %v467
  %v850 = vsel %vm841, %v833, %v469
  %v851 = vsel %vm841, %v834, %v471
  %v852 = vsel %vm841, %v835, %v473
  %v853 = vsel %vm841, %v836, %v475
  %v854 = vsel %vm841, %v837, %v477
  %v855 = vsel %vm841, %v838, %v479
  %v856 = vsel %vm841, %v839, %v481
  %v857 = vsel %vm841, %v840, %v483
  %vm858 = vcmask 392192
  %v859 = vsel %vm858, %v842, %v501
  %v860 = vsel %vm858, %v843, %v503
  %v861 = vsel %vm858, %v844, %v505
  %v862 = vsel %vm858, %v845, %v507
  %v863 = vsel %vm858, %v846, %v509
  %v864 = vsel %vm858, %v847, %v511
  %v865 = vsel %vm858, %v848, %v513
  %v866 = vsel %vm858, %v849, %v515
  %v867 = vsel %vm858, %v850, %v517
  %v868 = vsel %vm858, %v851, %v519
  %v869 = vsel %vm858, %v852, %v521
  %v870 = vsel %vm858, %v853, %v523
  %v871 = vsel %vm858, %v854, %v525
  %v872 = vsel %vm858, %v855, %v527
  %v873 = vsel %vm858, %v856, %v529
  %v874 = vsel %vm858, %v857, %v531
  %vm875 = vcmask 523264
  %v876 = vsel %vm875, %v859, %v549
  %v877 = vsel %vm875, %v860, %v551
  %v878 = vsel %vm875, %v861, %v553
  %v879 = vsel %vm875, %v862, %v555
  %v880 = vsel %vm875, %v863, %v557
  %v881 = vsel %vm875, %v864, %v559
  %v882 = vsel %vm875, %v865, %v561
  %v883 = vsel %vm875, %v866, %v563
  %v884 = vsel %vm875, %v867, %v565
  %v885 = vsel %vm875, %v868, %v567
  %v886 = vsel %vm875, %v869, %v569
  %v887 = vsel %vm875, %v870, %v571
  %v888 = vsel %vm875, %v871, %v573
  %v889 = vsel %vm875, %v872, %v575
  %v890 = vsel %vm875, %v873, %v577
  %v891 = vsel %vm875, %v874, %v579
  %vm892 = vcmask 654336
  %v893 = vsel %vm892, %v876, %v597
  %v894 = vsel %vm892, %v877, %v599
  %v895 = vsel %vm892, %v878, %v601
  %v896 = vsel %vm892, %v879, %v603
  %v897 = vsel %vm892, %v880, %v605
  %v898 = vsel %vm892, %v881, %v607
  %v899 = vsel %vm892, %v882, %v609
  %v900 = vsel %vm892, %v883, %v611
  %v901 = vsel %vm892, %v884, %v613
  %v902 = vsel %vm892, %v885, %v615
  %v903 = vsel %vm892, %v886, %v617
  %v904 = vsel %vm892, %v887, %v619
  %v905 = vsel %vm892, %v888, %v621
  %v906 = vsel %vm892, %v889, %v623
  %v907 = vsel %vm892, %v890, %v625
  %v908 = vsel %vm892, %v891, %v627
  %vm909 = vcmask 785408
  %v910 = vsel %vm909, %v893, %v645
  %v911 = vsel %vm909, %v894, %v647
  %v912 = vsel %vm909, %v895, %v649
  %v913 = vsel %vm909, %v896, %v651
  %v914 = vsel %vm909, %v897, %v653
  %v915 = vsel %vm909, %v898, %v655
  %v916 = vsel %vm909, %v899, %v657
  %v917 = vsel %vm909, %v900, %v659
  %v918 = vsel %vm909, %v901, %v661
  %v919 = vsel %vm909, %v902, %v663
  %v920 = vsel %vm909, %v903, %v665
  %v921 = vsel %vm909, %v904, %v667
  %v922 = vsel %vm909, %v905, %v669
  %v923 = vsel %vm909, %v906, %v671
  %v924 = vsel %vm909, %v907, %v673
  %v925 = vsel %vm909, %v908, %v675
  %vm926 = vcmask 916480
  %v927 = vsel %vm926, %v910, %v693
  %v928 = vsel %vm926, %v911, %v695
  %v929 = vsel %vm926, %v912, %v697
  %v930 = vsel %vm926, %v913, %v699
  %v931 = vsel %vm926, %v914, %v701
  %v932 = vsel %vm926, %v915, %v703
  %v933 = vsel %vm926, %v916, %v705
  %v934 = vsel %vm926, %v917, %v707
  %v935 = vsel %vm926, %v918, %v709
  %v936 = vsel %vm926, %v919, %v711
  %v937 = vsel %vm926, %v920, %v713
  %v938 = vsel %vm926, %v921, %v715
  %v939 = vsel %vm926, %v922, %v717
  %v940 = vsel %vm926, %v923, %v719
  %v941 = vsel %vm926, %v924, %v721
  %v942 = vsel %vm926, %v925, %v723
  %v943 = vsel %vm824, %v131, %v741
  %v944 = vsel %vm824, %v133, %v743
  %v945 = vsel %vm824, %v153, %v745
  %v946 = vsel %vm824, %v155, %v747
  %v947 = vsel %vm841, %v943, %v753
  %v948 = vsel %vm841, %v944, %v755
  %v949 = vsel %vm841, %v945, %v757
  %v950 = vsel %vm841, %v946, %v759
  %v951 = vsel %vm858, %v947, %v765
  %v952 = vsel %vm858, %v948, %v767
  %v953 = vsel %vm858, %v949, %v769
  %v954 = vsel %vm858, %v950, %v771
  %v955 = vsel %vm875, %v951, %v777
  %v956 = vsel %vm875, %v952, %v779
  %v957 = vsel %vm875, %v953, %v781
  %v958 = vsel %vm875, %v954, %v783
  %v959 = vsel %vm892, %v955, %v789
  %v960 = vsel %vm892, %v956, %v791
  %v961 = vsel %vm892, %v957, %v793
  %v962 = vsel %vm892, %v958, %v795
  %v963 = vsel %vm909, %v959, %v801
  %v964 = vsel %vm909, %v960, %v803
  %v965 = vsel %vm909, %v961, %v805
  %v966 = vsel %vm909, %v962, %v807
  %v967 = vsel %vm926, %v963, %v813
  %v968 = vsel %vm926, %v964, %v815
  %v969 = vsel %vm926, %v965, %v817
  %v970 = vsel %vm926, %v966, %v819
  %v971 = vld [vmem:[%s1] sm:$0xff]
  %v972 = vld [vmem:[%s1 + $0x8] sm:$0xff]
  %v973 = vld [vmem:[%s1 + $0x10] sm:$0xff]
  %v974 = vld [vmem:[%s1 + $0x18] sm:$0xff]
  %v975 = vld [vmem:[%s1 + $0x20] sm:$0xff]
  %v976 = vld [vmem:[%s1 + $0x28] sm:$0xff]
  %v977 = vld [vmem:[%s1 + $0x30] sm:$0xff]
  %v978 = vld [vmem:[%s1 + $0x38] sm:$0xff]
  %v979 = vld [vmem:[%s1 + $0x40] sm:$0xff]
  %v980 = vld [vmem:[%s1 + $0x48] sm:$0xff]
  %v981 = vld [vmem:[%s1 + $0x50] sm:$0xff]
  %v982 = vld [vmem:[%s1 + $0x58] sm:$0xff]
  %v983 = vld [vmem:[%s1 + $0x60] sm:$0xff]
  %v984 = vld [vmem:[%s1 + $0x68] sm:$0xff]
  %v985 = vld [vmem:[%s1 + $0x70] sm:$0xff]
  %v986 = vld [vmem:[%s1 + $0x78] sm:$0xff]
  %v987 = vld [vmem:[%s1 + $0x80] sm:$0xff]
  %v988 = vld [vmem:[%s1 + $0x88] sm:$0xff]
  %v989 = vld [vmem:[%s1 + $0x90] sm:$0xff]
  %v990 = vld [vmem:[%s1 + $0x98] sm:$0xff]
  %v991 = vld [vmem:[%s1 + $0xa0] sm:$0xff]
  %v992 = vld [vmem:[%s1 + $0xa8] sm:$0xff]
  %v993 = vld [vmem:[%s1 + $0xb0] sm:$0xff]
  %v994 = vld [vmem:[%s1 + $0xb8] sm:$0xff]
  %v995 = vld [vmem:[%s1 + $0xc0] sm:$0xff]
  %v996 = vld [vmem:[%s1 + $0xc8] sm:$0xff]
  %v997 = vld [vmem:[%s1 + $0xd0] sm:$0xff]
  %v998 = vld [vmem:[%s1 + $0xd8] sm:$0xff]
  %v999 = vld [vmem:[%s1 + $0xe0] sm:$0xff]
  %v1000 = vld [vmem:[%s1 + $0xe8] sm:$0xff]
  %v1001 = vld [vmem:[%s1 + $0xf0] sm:$0xff]
  %v1002 = vld [vmem:[%s1 + $0xf8] sm:$0xff]
  %v1003 = vlaneseq
  %v1004 = vshrl.u32 %v1003, 7
  %v1005 = vsub.s32 0, %v1004
  %v1006 = vrot.slane %v31, %v1005
  %1007 = vmatprep.subr.mxu0 0.0
  %1008 = vmatpush1.msra.mxu0 %v971
  %1009 = vmatprep.subr.mxu0 0.0
  %1010 = vmatpush1.msra.mxu0 %v972
  %1011 = vmatprep.subr.mxu0 0.0
  %1012 = vmatpush1.msra.mxu0 %v973
  %1013 = vmatprep.subr.mxu0 0.0
  %1014 = vmatpush1.msra.mxu0 %v974
  %1015 = vmatprep.subr.mxu0 0.0
  %1016 = vmatpush1.msra.mxu0 %v975
  %1017 = vmatprep.subr.mxu0 0.0
  %1018 = vmatpush1.msra.mxu0 %v976
  %1019 = vmatprep.subr.mxu0 0.0
  %1020 = vmatpush1.msra.mxu0 %v977
  %1021 = vmatprep.subr.mxu0 0.0
  %1022 = vmatpush1.msra.mxu0 %v978
  %1023 = vmatprep.subr.mxu0 0.0
  %1024 = vmatpush1.msra.mxu0 %v979
  %1025 = vmatprep.subr.mxu0 0.0
  %1026 = vmatpush1.msra.mxu0 %v980
  %1027 = vmatprep.subr.mxu0 0.0
  %1028 = vmatpush1.msra.mxu0 %v981
  %1029 = vmatprep.subr.mxu0 0.0
  %1030 = vmatpush1.msra.mxu0 %v982
  %1031 = vmatprep.subr.mxu0 0.0
  %1032 = vmatpush1.msra.mxu0 %v983
  %1033 = vmatprep.subr.mxu0 0.0
  %1034 = vmatpush1.msra.mxu0 %v984
  %1035 = vmatprep.subr.mxu0 0.0
  %1036 = vmatpush1.msra.mxu0 %v985
  %1037 = vmatprep.subr.mxu0 0.0
  %1038 = vmatpush1.msra.mxu0 %v986
  %1039 = vmatprep.subr.mxu0 0.0
  %1040 = vmatpush1.msra.mxu0 %v987
  %1041 = vmatprep.subr.mxu0 0.0
  %1042 = vmatpush1.msra.mxu0 %v988
  %1043 = vmatprep.subr.mxu0 0.0
  %1044 = vmatpush1.msra.mxu0 %v989
  %1045 = vmatprep.subr.mxu0 0.0
  %1046 = vmatpush1.msra.mxu0 %v990
  %1047 = vmatprep.subr.mxu0 0.0
  %1048 = vmatpush1.msra.mxu0 %v991
  %1049 = vmatprep.subr.mxu0 0.0
  %1050 = vmatpush1.msra.mxu0 %v992
  %1051 = vmatprep.subr.mxu0 0.0
  %1052 = vmatpush1.msra.mxu0 %v993
  %1053 = vmatprep.subr.mxu0 0.0
  %1054 = vmatpush1.msra.mxu0 %v994
  %1055 = vmatprep.subr.mxu0 0.0
  %1056 = vmatpush1.msra.mxu0 %v995
  %1057 = vmatprep.subr.mxu0 0.0
  %1058 = vmatpush1.msra.mxu0 %v996
  %1059 = vmatprep.subr.mxu0 0.0
  %1060 = vmatpush1.msra.mxu0 %v997
  %1061 = vmatprep.subr.mxu0 0.0
  %1062 = vmatpush1.msra.mxu0 %v998
  %1063 = vmatprep.subr.mxu0 0.0
  %1064 = vmatpush1.msra.mxu0 %v999
  %1065 = vmatprep.subr.mxu0 0.0
  %1066 = vmatpush1.msra.mxu0 %v1000
  %1067 = vmatprep.subr.mxu0 0.0
  %1068 = vmatpush1.msra.mxu0 %v1001
  %1069 = vmatprep.subr.mxu0 0.0
  %1070 = vmatpush1.msra.mxu0 %v1002
  %1071 = vmatprep.mubr.f32.mxu0 %v929
  %1072 = vmatmul.mubr.f32.gmra.mrb[0].mxu0 %v927
  %v1073 = vpop.f32.mrb[0].mxu0
  %v1074 = vadd.f32 %v1006, %v1073
  %v1075 = vpop.f32.mrb[0].mxu0
  %1076 = vmatprep.mubr.f32.mxu0 %v930
  %1077 = vmatmul.mubr.f32.gmra.mrb[0].mxu0 %v928
  %v1078 = vpop.f32.mrb[0].mxu0
  %v1079 = vadd.f32 %v1006, %v1078
  %v1080 = vpop.f32.mrb[0].mxu0
  %1081 = vmatprep.mubr.f32.mxu0 %v931
  %1082 = vmatmul.mubr.f32.gmra.mrb[0].mxu0 %v929
  %v1083 = vpop.f32.mrb[0].mxu0
  %v1084 = vadd.f32 %v1006, %v1083
  %v1085 = vpop.f32.mrb[0].mxu0
  %1086 = vmatprep.mubr.f32.mxu0 %v932
  %1087 = vmatmul.mubr.f32.gmra.mrb[0].mxu0 %v930
  %v1088 = vpop.f32.mrb[0].mxu0
  %v1089 = vadd.f32 %v1006, %v1088
  %v1090 = vpop.f32.mrb[0].mxu0
  %1091 = vmatprep.mubr.f32.mxu0 %v933
  %1092 = vmatmul.mubr.f32.gmra.mrb[0].mxu0 %v931
  %v1093 = vpop.f32.mrb[0].mxu0
  %v1094 = vadd.f32 %v1006, %v1093
  %v1095 = vpop.f32.mrb[0].mxu0
  %1096 = vmatprep.mubr.f32.mxu0 %v934
  %1097 = vmatmul.mubr.f32.gmra.mrb[0].mxu0 %v932
  %v1098 = vpop.f32.mrb[0].mxu0
  %v1099 = vadd.f32 %v1006, %v1098
  %v1100 = vpop.f32.mrb[0].mxu0
  %1101 = vmatprep.mubr.f32.mxu0 %v967
  %1102 = vmatmul.mubr.f32.gmra.mrb[0].mxu0 %v933
  %v1103 = vpop.f32.mrb[0].mxu0
  %v1104 = vadd.f32 %v1006, %v1103
  %v1105 = vpop.f32.mrb[0].mxu0
  %1106 = vmatprep.mubr.f32.mxu0 %v968
  %1107 = vmatmul.mubr.f32.gmra.mrb[0].mxu0 %v934
  %v1108 = vpop.f32.mrb[0].mxu0
  %v1109 = vadd.f32 %v1006, %v1108
  %v1110 = vpop.f32.mrb[0].mxu0
  %1111 = vmatprep.mubr.f32.mxu0 %v937
  %1112 = vmatmul.mubr.f32.gmra.mrb[0].mxu0 %v935
  %v1113 = vpop.f32.mrb[0].mxu0
  %v1114 = vadd.f32 %v1006, %v1113
  %v1115 = vpop.f32.mrb[0].mxu0
  %1116 = vmatprep.mubr.f32.mxu0 %v938
  %1117 = vmatmul.mubr.f32.gmra.mrb[0].mxu0 %v936
  %v1118 = vpop.f32.mrb[0].mxu0
  %v1119 = vadd.f32 %v1006, %v1118
  %v1120 = vpop.f32.mrb[0].mxu0
  %1121 = vmatprep.mubr.f32.mxu0 %v939
  %1122 = vmatmul.mubr.f32.gmra.mrb[0].mxu0 %v937
  %v1123 = vpop.f32.mrb[0].mxu0
  %v1124 = vadd.f32 %v1006, %v1123
  %v1125 = vpop.f32.mrb[0].mxu0
  %1126 = vmatprep.mubr.f32.mxu0 %v940
  %1127 = vmatmul.mubr.f32.gmra.mrb[0].mxu0 %v938
  %v1128 = vpop.f32.mrb[0].mxu0
  %v1129 = vadd.f32 %v1006, %v1128
  %v1130 = vpop.f32.mrb[0].mxu0
  %1131 = vmatprep.mubr.f32.mxu0 %v941
  %1132 = vmatmul.mubr.f32.gmra.mrb[0].mxu0 %v939
  %v1133 = vpop.f32.mrb[0].mxu0
  %v1134 = vadd.f32 %v1006, %v1133
  %v1135 = vpop.f32.mrb[0].mxu0
  %1136 = vmatprep.mubr.f32.mxu0 %v942
  %1137 = vmatmul.mubr.f32.gmra.mrb[0].mxu0 %v940
  %v1138 = vpop.f32.mrb[0].mxu0
  %v1139 = vadd.f32 %v1006, %v1138
  %v1140 = vpop.f32.mrb[0].mxu0
  %1141 = vmatprep.mubr.f32.mxu0 %v969
  %1142 = vmatmul.mubr.f32.gmra.mrb[0].mxu0 %v941
  %v1143 = vpop.f32.mrb[0].mxu0
  %v1144 = vadd.f32 %v1006, %v1143
  %v1145 = vpop.f32.mrb[0].mxu0
  %1146 = vmatprep.mubr.f32.mxu0 %v970
  %1147 = vmatmul.mubr.f32.gmra.mrb[0].mxu0 %v942
  %v1148 = vpop.f32.mrb[0].mxu0
  %v1149 = vadd.f32 %v1006, %v1148
  %v1150 = vpop.f32.mrb[0].mxu0
  %1151 = vdwg.mxu0
  %v1152 = vmax.f32 %v1074, 0.0
  %v1153 = vmax.f32 %v1079, 0.0
  %v1154 = vmax.f32 %v1084, 0.0
  %v1155 = vmax.f32 %v1089, 0.0
  %v1156 = vmax.f32 %v1094, 0.0
  %v1157 = vmax.f32 %v1099, 0.0
  %v1158 = vmax.f32 %v1104, 0.0
  %v1159 = vmax.f32 %v1109, 0.0
  %v1160 = vmax.f32 %v1114, 0.0
  %v1161 = vmax.f32 %v1119, 0.0
  %v1162 = vmax.f32 %v1124, 0.0
  %v1163 = vmax.f32 %v1129, 0.0
  %v1164 = vmax.f32 %v1134, 0.0
  %v1165 = vmax.f32 %v1139, 0.0
  %v1166 = vmax.f32 %v1144, 0.0
  %v1167 = vmax.f32 %v1149, 0.0
  %s1168 = scalar_lea.vmem [#allocation2], 16
  %1169 = vst.msk [vmem:[%s1168 + $0x1] sm:$0xff] %vm32, %v1152
  %1170 = vst.msk [vmem:[%s1168 + $0x11] sm:$0xff] %vm32, %v1153
  %1171 = vst.msk [vmem:[%s1168 + $0x21] sm:$0xff] %vm32, %v1154
  %1172 = vst.msk [vmem:[%s1168 + $0x31] sm:$0xff] %vm32, %v1155
  %1173 = vst.msk [vmem:[%s1168 + $0x41] sm:$0xff] %vm32, %v1156
  %1174 = vst.msk [vmem:[%s1168 + $0x51] sm:$0xff] %vm32, %v1157
  %1175 = vst.msk [vmem:[%s1168 + $0x61] sm:$0xff] %vm32, %v1158
  %1176 = vst.msk [vmem:[%s1168 + $0x71] sm:$0xff] %vm32, %v1159
  %1177 = vst.msk [vmem:[%s1168 + $0xa1] sm:$0xff] %vm32, %v1160
  %1178 = vst.msk [vmem:[%s1168 + $0xb1] sm:$0xff] %vm32, %v1161
  %1179 = vst.msk [vmem:[%s1168 + $0xc1] sm:$0xff] %vm32, %v1162
  %1180 = vst.msk [vmem:[%s1168 + $0xd1] sm:$0xff] %vm32, %v1163
  %1181 = vst.msk [vmem:[%s1168 + $0xe1] sm:$0xff] %vm32, %v1164
  %1182 = vst.msk [vmem:[%s1168 + $0xf1] sm:$0xff] %vm32, %v1165
  %1183 = vst.msk [vmem:[%s1168 + $0x101] sm:$0xff] %vm32, %v1166
  %1184 = vst.msk [vmem:[%s1168 + $0x111] sm:$0xff] %vm32, %v1167
  %v1185 = vld [vmem:[#allocation2] sm:$0xff]
  %v1186 = vld [vmem:[#allocation2 + $0x8] sm:$0x3]
  %v1187 = vld [vmem:[#allocation2 + $0x10] sm:$0xff]
  %v1188 = vld [vmem:[#allocation2 + $0x18] sm:$0x3]
  %v1189 = vld [vmem:[#allocation2 + $0x20] sm:$0xff]
  %v1190 = vld [vmem:[#allocation2 + $0x28] sm:$0x3]
  %v1191 = vld [vmem:[#allocation2 + $0x30] sm:$0xff]
  %v1192 = vld [vmem:[#allocation2 + $0x38] sm:$0x3]
  %v1193 = vld [vmem:[#allocation2 + $0x40] sm:$0xff]
  %v1194 = vld [vmem:[#allocation2 + $0x48] sm:$0x3]
  %v1195 = vld [vmem:[#allocation2 + $0x50] sm:$0xff]
  %v1196 = vld [vmem:[#allocation2 + $0x58] sm:$0x3]
  %v1197 = vld [vmem:[#allocation2 + $0x60] sm:$0xff]
  %v1198 = vld [vmem:[#allocation2 + $0x68] sm:$0x3]
  %v1199 = vld [vmem:[#allocation2 + $0x70] sm:$0xff]
  %v1200 = vld [vmem:[#allocation2 + $0x78] sm:$0x3]
  %v1201 = vld [vmem:[#allocation2 + $0x80] sm:$0xff]
  %v1202 = vld [vmem:[#allocation2 + $0x88] sm:$0x3]
  %v1203 = vld [vmem:[#allocation2 + $0x90] sm:$0xff]
  %v1204 = vld [vmem:[#allocation2 + $0x98] sm:$0x3]
  %v1205 = vld [vmem:[#allocation2 + $0xa0] sm:$0xff]
  %v1206 = vld [vmem:[#allocation2 + $0xa8] sm:$0x3]
  %v1207 = vld [vmem:[#allocation2 + $0xb0] sm:$0xff]
  %v1208 = vld [vmem:[#allocation2 + $0xb8] sm:$0x3]
  %v1209 = vld [vmem:[#allocation2 + $0xc0] sm:$0xff]
  %v1210 = vld [vmem:[#allocation2 + $0xc8] sm:$0x3]
  %v1211 = vld [vmem:[#allocation2 + $0xd0] sm:$0xff]
  %v1212 = vld [vmem:[#allocation2 + $0xd8] sm:$0x3]
  %v1213 = vld [vmem:[#allocation2 + $0xe0] sm:$0xff]
  %v1214 = vld [vmem:[#allocation2 + $0xe8] sm:$0x3]
  %v1215 = vld [vmem:[#allocation2 + $0xf0] sm:$0xff]
  %v1216 = vld [vmem:[#allocation2 + $0xf8] sm:$0x3]
  %v1217 = vld [vmem:[#allocation2 + $0x100] sm:$0xff]
  %v1218 = vld [vmem:[#allocation2 + $0x108] sm:$0x3]
  %v1219 = vld [vmem:[#allocation2 + $0x110] sm:$0xff]
  %v1220 = vld [vmem:[#allocation2 + $0x118] sm:$0x3]
  %v1221 = vld [vmem:[#allocation2 + $0x120] sm:$0xff]
  %v1222 = vld [vmem:[#allocation2 + $0x128] sm:$0x3]
  %v1223 = vld [vmem:[#allocation2 + $0x130] sm:$0xff]
  %v1224 = vld [vmem:[#allocation2 + $0x138] sm:$0x3]
  %v1257 = vrot.slane %v1185, 1
  %v1258 = vrot.slane %v1186, 1
  %v1259 = vsel %vm191, %v1257, %v1258
  %v1260 = vrot.slane %v1187, 1
  %v1261 = vrot.slane %v1188, 1
  %v1262 = vsel %vm191, %v1260, %v1261
  %v1263 = vrot.slane %v1189, 1
  %v1264 = vrot.slane %v1190, 1
  %v1265 = vsel %vm191, %v1263, %v1264
  %v1266 = vrot.slane %v1191, 1
  %v1267 = vrot.slane %v1192, 1
  %v1268 = vsel %vm191, %v1266, %v1267
  %v1269 = vrot.slane %v1193, 1
  %v1270 = vrot.slane %v1194, 1
  %v1271 = vsel %vm191, %v1269, %v1270
  %v1272 = vrot.slane %v1195, 1
  %v1273 = vrot.slane %v1196, 1
  %v1274 = vsel %vm191, %v1272, %v1273
  %v1275 = vrot.slane %v1197, 1
  %v1276 = vrot.slane %v1198, 1
  %v1277 = vsel %vm191, %v1275, %v1276
  %v1278 = vrot.slane %v1199, 1
  %v1279 = vrot.slane %v1200, 1
  %v1280 = vsel %vm191, %v1278, %v1279
  %v1281 = vrot.slane %v1205, 1
  %v1282 = vrot.slane %v1206, 1
  %v1283 = vsel %vm191, %v1281, %v1282
  %v1284 = vrot.slane %v1207, 1
  %v1285 = vrot.slane %v1208, 1
  %v1286 = vsel %vm191, %v1284, %v1285
  %v1287 = vrot.slane %v1209, 1
  %v1288 = vrot.slane %v1210, 1
  %v1289 = vsel %vm191, %v1287, %v1288
  %v1290 = vrot.slane %v1211, 1
  %v1291 = vrot.slane %v1212, 1
  %v1292 = vsel %vm191, %v1290, %v1291
  %v1293 = vrot.slane %v1213, 1
  %v1294 = vrot.slane %v1214, 1
  %v1295 = vsel %vm191, %v1293, %v1294
  %v1296 = vrot.slane %v1215, 1
  %v1297 = vrot.slane %v1216, 1
  %v1298 = vsel %vm191, %v1296, %v1297
  %v1299 = vrot.slane %v1217, 1
  %v1300 = vrot.slane %v1218, 1
  %v1301 = vsel %vm191, %v1299, %v1300
  %v1302 = vrot.slane %v1219, 1
  %v1303 = vrot.slane %v1220, 1
  %v1304 = vsel %vm191, %v1302, %v1303
  %v1305 = vrot.slane %v1185, 2
  %v1306 = vrot.slane %v1186, 2
  %v1307 = vsel %vm240, %v1305, %v1306
  %v1308 = vrot.slane %v1187, 2
  %v1309 = vrot.slane %v1188, 2
  %v1310 = vsel %vm240, %v1308, %v1309
  %v1311 = vrot.slane %v1189, 2
  %v1312 = vrot.slane %v1190, 2
  %v1313 = vsel %vm240, %v1311, %v1312
  %v1314 = vrot.slane %v1191, 2
  %v1315 = vrot.slane %v1192, 2
  %v1316 = vsel %vm240, %v1314, %v1315
  %v1317 = vrot.slane %v1193, 2
  %v1318 = vrot.slane %v1194, 2
  %v1319 = vsel %vm240, %v1317, %v1318
  %v1320 = vrot.slane %v1195, 2
  %v1321 = vrot.slane %v1196, 2
  %v1322 = vsel %vm240, %v1320, %v1321
  %v1323 = vrot.slane %v1197, 2
  %v1324 = vrot.slane %v1198, 2
  %v1325 = vsel %vm240, %v1323, %v1324
  %v1326 = vrot.slane %v1199, 2
  %v1327 = vrot.slane %v1200, 2
  %v1328 = vsel %vm240, %v1326, %v1327
  %v1329 = vrot.slane %v1205, 2
  %v1330 = vrot.slane %v1206, 2
  %v1331 = vsel %vm240, %v1329, %v1330
  %v1332 = vrot.slane %v1207, 2
  %v1333 = vrot.slane %v1208, 2
  %v1334 = vsel %vm240, %v1332, %v1333
  %v1335 = vrot.slane %v1209, 2
  %v1336 = vrot.slane %v1210, 2
  %v1337 = vsel %vm240, %v1335, %v1336
  %v1338 = vrot.slane %v1211, 2
  %v1339 = vrot.slane %v1212, 2
  %v1340 = vsel %vm240, %v1338, %v1339
  %v1341 = vrot.slane %v1213, 2
  %v1342 = vrot.slane %v1214, 2
  %v1343 = vsel %vm240, %v1341, %v1342
  %v1344 = vrot.slane %v1215, 2
  %v1345 = vrot.slane %v1216, 2
  %v1346 = vsel %vm240, %v1344, %v1345
  %v1347 = vrot.slane %v1217, 2
  %v1348 = vrot.slane %v1218, 2
  %v1349 = vsel %vm240, %v1347, %v1348
  %v1350 = vrot.slane %v1219, 2
  %v1351 = vrot.slane %v1220, 2
  %v1352 = vsel %vm240, %v1350, %v1351
  %v1357 = vrot.slane %v1201, 1
  %v1358 = vrot.slane %v1202, 1
  %v1359 = vsel %vm191, %v1357, %v1358
  %v1360 = vrot.slane %v1221, 1
  %v1361 = vrot.slane %v1222, 1
  %v1362 = vsel %vm191, %v1360, %v1361
  %v1363 = vrot.slane %v1201, 2
  %v1364 = vrot.slane %v1202, 2
  %v1365 = vsel %vm240, %v1363, %v1364
  %v1366 = vrot.slane %v1221, 2
  %v1367 = vrot.slane %v1222, 2
  %v1368 = vsel %vm240, %v1366, %v1367
  %v1373 = vrot.slane %v1203, 1
  %v1374 = vrot.slane %v1204, 1
  %v1375 = vsel %vm191, %v1373, %v1374
  %v1376 = vrot.slane %v1223, 1
  %v1377 = vrot.slane %v1224, 1
  %v1378 = vsel %vm191, %v1376, %v1377
  %v1379 = vrot.slane %v1203, 2
  %v1380 = vrot.slane %v1204, 2
  %v1381 = vsel %vm240, %v1379, %v1380
  %v1382 = vrot.slane %v1223, 2
  %v1383 = vrot.slane %v1224, 2
  %v1384 = vsel %vm240, %v1382, %v1383
  %1385 = vrot.lane.b32.xlu0 %v1259, 8
  %v1386 = vpop.permute.xlu0 %1385
  %1387 = vrot.lane.b32.xlu0 %v1262, 8
  %v1388 = vpop.permute.xlu0 %1387
  %1389 = vrot.lane.b32.xlu0 %v1265, 8
  %v1390 = vpop.permute.xlu0 %1389
  %1391 = vrot.lane.b32.xlu0 %v1268, 8
  %v1392 = vpop.permute.xlu0 %1391
  %1393 = vrot.lane.b32.xlu0 %v1271, 8
  %v1394 = vpop.permute.xlu0 %1393
  %1395 = vrot.lane.b32.xlu0 %v1274, 8
  %v1396 = vpop.permute.xlu0 %1395
  %1397 = vrot.lane.b32.xlu0 %v1277, 8
  %v1398 = vpop.permute.xlu0 %1397
  %1399 = vrot.lane.b32.xlu0 %v1280, 8
  %v1400 = vpop.permute.xlu0 %1399
  %1401 = vrot.lane.b32.xlu0 %v1283, 8
  %v1402 = vpop.permute.xlu0 %1401
  %1403 = vrot.lane.b32.xlu0 %v1286, 8
  %v1404 = vpop.permute.xlu0 %1403
  %1405 = vrot.lane.b32.xlu0 %v1289, 8
  %v1406 = vpop.permute.xlu0 %1405
  %1407 = vrot.lane.b32.xlu0 %v1292, 8
  %v1408 = vpop.permute.xlu0 %1407
  %1409 = vrot.lane.b32.xlu0 %v1295, 8
  %v1410 = vpop.permute.xlu0 %1409
  %1411 = vrot.lane.b32.xlu0 %v1298, 8
  %v1412 = vpop.permute.xlu0 %1411
  %1413 = vrot.lane.b32.xlu0 %v1301, 8
  %v1414 = vpop.permute.xlu0 %1413
  %1415 = vrot.lane.b32.xlu0 %v1304, 8
  %v1416 = vpop.permute.xlu0 %1415
  %1433 = vrot.lane.b32.xlu0 %v1307, 16
  %v1434 = vpop.permute.xlu0 %1433
  %1435 = vrot.lane.b32.xlu0 %v1310, 16
  %v1436 = vpop.permute.xlu0 %1435
  %1437 = vrot.lane.b32.xlu0 %v1313, 16
  %v1438 = vpop.permute.xlu0 %1437
  %1439 = vrot.lane.b32.xlu0 %v1316, 16
  %v1440 = vpop.permute.xlu0 %1439
  %1441 = vrot.lane.b32.xlu0 %v1319, 16
  %v1442 = vpop.permute.xlu0 %1441
  %1443 = vrot.lane.b32.xlu0 %v1322, 16
  %v1444 = vpop.permute.xlu0 %1443
  %1445 = vrot.lane.b32.xlu0 %v1325, 16
  %v1446 = vpop.permute.xlu0 %1445
  %1447 = vrot.lane.b32.xlu0 %v1328, 16
  %v1448 = vpop.permute.xlu0 %1447
  %1449 = vrot.lane.b32.xlu0 %v1331, 16
  %v1450 = vpop.permute.xlu0 %1449
  %1451 = vrot.lane.b32.xlu0 %v1334, 16
  %v1452 = vpop.permute.xlu0 %1451
  %1453 = vrot.lane.b32.xlu0 %v1337, 16
  %v1454 = vpop.permute.xlu0 %1453
  %1455 = vrot.lane.b32.xlu0 %v1340, 16
  %v1456 = vpop.permute.xlu0 %1455
  %1457 = vrot.lane.b32.xlu0 %v1343, 16
  %v1458 = vpop.permute.xlu0 %1457
  %1459 = vrot.lane.b32.xlu0 %v1346, 16
  %v1460 = vpop.permute.xlu0 %1459
  %1461 = vrot.lane.b32.xlu0 %v1349, 16
  %v1462 = vpop.permute.xlu0 %1461
  %1463 = vrot.lane.b32.xlu0 %v1352, 16
  %v1464 = vpop.permute.xlu0 %1463
  %1481 = vrot.lane.b32.xlu0 %v1187, 24
  %v1482 = vpop.permute.xlu0 %1481
  %1483 = vrot.lane.b32.xlu0 %v1189, 24
  %v1484 = vpop.permute.xlu0 %1483
  %1485 = vrot.lane.b32.xlu0 %v1191, 24
  %v1486 = vpop.permute.xlu0 %1485
  %1487 = vrot.lane.b32.xlu0 %v1193, 24
  %v1488 = vpop.permute.xlu0 %1487
  %1489 = vrot.lane.b32.xlu0 %v1195, 24
  %v1490 = vpop.permute.xlu0 %1489
  %1491 = vrot.lane.b32.xlu0 %v1197, 24
  %v1492 = vpop.permute.xlu0 %1491
  %1493 = vrot.lane.b32.xlu0 %v1199, 24
  %v1494 = vpop.permute.xlu0 %1493
  %1495 = vrot.lane.b32.xlu0 %v1201, 24
  %v1496 = vpop.permute.xlu0 %1495
  %1497 = vrot.lane.b32.xlu0 %v1207, 24
  %v1498 = vpop.permute.xlu0 %1497
  %1499 = vrot.lane.b32.xlu0 %v1209, 24
  %v1500 = vpop.permute.xlu0 %1499
  %1501 = vrot.lane.b32.xlu0 %v1211, 24
  %v1502 = vpop.permute.xlu0 %1501
  %1503 = vrot.lane.b32.xlu0 %v1213, 24
  %v1504 = vpop.permute.xlu0 %1503
  %1505 = vrot.lane.b32.xlu0 %v1215, 24
  %v1506 = vpop.permute.xlu0 %1505
  %1507 = vrot.lane.b32.xlu0 %v1217, 24
  %v1508 = vpop.permute.xlu0 %1507
  %1509 = vrot.lane.b32.xlu0 %v1219, 24
  %v1510 = vpop.permute.xlu0 %1509
  %1511 = vrot.lane.b32.xlu0 %v1221, 24
  %v1512 = vpop.permute.xlu0 %1511
  %1529 = vrot.lane.b32.xlu0 %v1262, 32
  %v1530 = vpop.permute.xlu0 %1529
  %1531 = vrot.lane.b32.xlu0 %v1265, 32
  %v1532 = vpop.permute.xlu0 %1531
  %1533 = vrot.lane.b32.xlu0 %v1268, 32
  %v1534 = vpop.permute.xlu0 %1533
  %1535 = vrot.lane.b32.xlu0 %v1271, 32
  %v1536 = vpop.permute.xlu0 %1535
  %1537 = vrot.lane.b32.xlu0 %v1274, 32
  %v1538 = vpop.permute.xlu0 %1537
  %1539 = vrot.lane.b32.xlu0 %v1277, 32
  %v1540 = vpop.permute.xlu0 %1539
  %1541 = vrot.lane.b32.xlu0 %v1280, 32
  %v1542 = vpop.permute.xlu0 %1541
  %1543 = vrot.lane.b32.xlu0 %v1359, 32
  %v1544 = vpop.permute.xlu0 %1543
  %1545 = vrot.lane.b32.xlu0 %v1286, 32
  %v1546 = vpop.permute.xlu0 %1545
  %1547 = vrot.lane.b32.xlu0 %v1289, 32
  %v1548 = vpop.permute.xlu0 %1547
  %1549 = vrot.lane.b32.xlu0 %v1292, 32
  %v1550 = vpop.permute.xlu0 %1549
  %1551 = vrot.lane.b32.xlu0 %v1295, 32
  %v1552 = vpop.permute.xlu0 %1551
  %1553 = vrot.lane.b32.xlu0 %v1298, 32
  %v1554 = vpop.permute.xlu0 %1553
  %1555 = vrot.lane.b32.xlu0 %v1301, 32
  %v1556 = vpop.permute.xlu0 %1555
  %1557 = vrot.lane.b32.xlu0 %v1304, 32
  %v1558 = vpop.permute.xlu0 %1557
  %1559 = vrot.lane.b32.xlu0 %v1362, 32
  %v1560 = vpop.permute.xlu0 %1559
  %1577 = vrot.lane.b32.xlu0 %v1310, 40
  %v1578 = vpop.permute.xlu0 %1577
  %1579 = vrot.lane.b32.xlu0 %v1313, 40
  %v1580 = vpop.permute.xlu0 %1579
  %1581 = vrot.lane.b32.xlu0 %v1316, 40
  %v1582 = vpop.permute.xlu0 %1581
  %1583 = vrot.lane.b32.xlu0 %v1319, 40
  %v1584 = vpop.permute.xlu0 %1583
  %1585 = vrot.lane.b32.xlu0 %v1322, 40
  %v1586 = vpop.permute.xlu0 %1585
  %1587 = vrot.lane.b32.xlu0 %v1325, 40
  %v1588 = vpop.permute.xlu0 %1587
  %1589 = vrot.lane.b32.xlu0 %v1328, 40
  %v1590 = vpop.permute.xlu0 %1589
  %1591 = vrot.lane.b32.xlu0 %v1365, 40
  %v1592 = vpop.permute.xlu0 %1591
  %1593 = vrot.lane.b32.xlu0 %v1334, 40
  %v1594 = vpop.permute.xlu0 %1593
  %1595 = vrot.lane.b32.xlu0 %v1337, 40
  %v1596 = vpop.permute.xlu0 %1595
  %1597 = vrot.lane.b32.xlu0 %v1340, 40
  %v1598 = vpop.permute.xlu0 %1597
  %1599 = vrot.lane.b32.xlu0 %v1343, 40
  %v1600 = vpop.permute.xlu0 %1599
  %1601 = vrot.lane.b32.xlu0 %v1346, 40
  %v1602 = vpop.permute.xlu0 %1601
  %1603 = vrot.lane.b32.xlu0 %v1349, 40
  %v1604 = vpop.permute.xlu0 %1603
  %1605 = vrot.lane.b32.xlu0 %v1352, 40
  %v1606 = vpop.permute.xlu0 %1605
  %1607 = vrot.lane.b32.xlu0 %v1368, 40
  %v1608 = vpop.permute.xlu0 %1607
  %1625 = vrot.lane.b32.xlu0 %v1189, 48
  %v1626 = vpop.permute.xlu0 %1625
  %1627 = vrot.lane.b32.xlu0 %v1191, 48
  %v1628 = vpop.permute.xlu0 %1627
  %1629 = vrot.lane.b32.xlu0 %v1193, 48
  %v1630 = vpop.permute.xlu0 %1629
  %1631 = vrot.lane.b32.xlu0 %v1195, 48
  %v1632 = vpop.permute.xlu0 %1631
  %1633 = vrot.lane.b32.xlu0 %v1197, 48
  %v1634 = vpop.permute.xlu0 %1633
  %1635 = vrot.lane.b32.xlu0 %v1199, 48
  %v1636 = vpop.permute.xlu0 %1635
  %1637 = vrot.lane.b32.xlu0 %v1201, 48
  %v1638 = vpop.permute.xlu0 %1637
  %1639 = vrot.lane.b32.xlu0 %v1203, 48
  %v1640 = vpop.permute.xlu0 %1639
  %1641 = vrot.lane.b32.xlu0 %v1209, 48
  %v1642 = vpop.permute.xlu0 %1641
  %1643 = vrot.lane.b32.xlu0 %v1211, 48
  %v1644 = vpop.permute.xlu0 %1643
  %1645 = vrot.lane.b32.xlu0 %v1213, 48
  %v1646 = vpop.permute.xlu0 %1645
  %1647 = vrot.lane.b32.xlu0 %v1215, 48
  %v1648 = vpop.permute.xlu0 %1647
  %1649 = vrot.lane.b32.xlu0 %v1217, 48
  %v1650 = vpop.permute.xlu0 %1649
  %1651 = vrot.lane.b32.xlu0 %v1219, 48
  %v1652 = vpop.permute.xlu0 %1651
  %1653 = vrot.lane.b32.xlu0 %v1221, 48
  %v1654 = vpop.permute.xlu0 %1653
  %1655 = vrot.lane.b32.xlu0 %v1223, 48
  %v1656 = vpop.permute.xlu0 %1655
  %1673 = vrot.lane.b32.xlu0 %v1265, 56
  %v1674 = vpop.permute.xlu0 %1673
  %1675 = vrot.lane.b32.xlu0 %v1268, 56
  %v1676 = vpop.permute.xlu0 %1675
  %1677 = vrot.lane.b32.xlu0 %v1271, 56
  %v1678 = vpop.permute.xlu0 %1677
  %1679 = vrot.lane.b32.xlu0 %v1274, 56
  %v1680 = vpop.permute.xlu0 %1679
  %1681 = vrot.lane.b32.xlu0 %v1277, 56
  %v1682 = vpop.permute.xlu0 %1681
  %1683 = vrot.lane.b32.xlu0 %v1280, 56
  %v1684 = vpop.permute.xlu0 %1683
  %1685 = vrot.lane.b32.xlu0 %v1359, 56
  %v1686 = vpop.permute.xlu0 %1685
  %1687 = vrot.lane.b32.xlu0 %v1375, 56
  %v1688 = vpop.permute.xlu0 %1687
  %1689 = vrot.lane.b32.xlu0 %v1289, 56
  %v1690 = vpop.permute.xlu0 %1689
  %1691 = vrot.lane.b32.xlu0 %v1292, 56
  %v1692 = vpop.permute.xlu0 %1691
  %1693 = vrot.lane.b32.xlu0 %v1295, 56
  %v1694 = vpop.permute.xlu0 %1693
  %1695 = vrot.lane.b32.xlu0 %v1298, 56
  %v1696 = vpop.permute.xlu0 %1695
  %1697 = vrot.lane.b32.xlu0 %v1301, 56
  %v1698 = vpop.permute.xlu0 %1697
  %1699 = vrot.lane.b32.xlu0 %v1304, 56
  %v1700 = vpop.permute.xlu0 %1699
  %1701 = vrot.lane.b32.xlu0 %v1362, 56
  %v1702 = vpop.permute.xlu0 %1701
  %1703 = vrot.lane.b32.xlu0 %v1378, 56
  %v1704 = vpop.permute.xlu0 %1703
  %1721 = vrot.lane.b32.xlu0 %v1313, 64
  %v1722 = vpop.permute.xlu0 %1721
  %1723 = vrot.lane.b32.xlu0 %v1316, 64
  %v1724 = vpop.permute.xlu0 %1723
  %1725 = vrot.lane.b32.xlu0 %v1319, 64
  %v1726 = vpop.permute.xlu0 %1725
  %1727 = vrot.lane.b32.xlu0 %v1322, 64
  %v1728 = vpop.permute.xlu0 %1727
  %1729 = vrot.lane.b32.xlu0 %v1325, 64
  %v1730 = vpop.permute.xlu0 %1729
  %1731 = vrot.lane.b32.xlu0 %v1328, 64
  %v1732 = vpop.permute.xlu0 %1731
  %1733 = vrot.lane.b32.xlu0 %v1365, 64
  %v1734 = vpop.permute.xlu0 %1733
  %1735 = vrot.lane.b32.xlu0 %v1381, 64
  %v1736 = vpop.permute.xlu0 %1735
  %1737 = vrot.lane.b32.xlu0 %v1337, 64
  %v1738 = vpop.permute.xlu0 %1737
  %1739 = vrot.lane.b32.xlu0 %v1340, 64
  %v1740 = vpop.permute.xlu0 %1739
  %1741 = vrot.lane.b32.xlu0 %v1343, 64
  %v1742 = vpop.permute.xlu0 %1741
  %1743 = vrot.lane.b32.xlu0 %v1346, 64
  %v1744 = vpop.permute.xlu0 %1743
  %1745 = vrot.lane.b32.xlu0 %v1349, 64
  %v1746 = vpop.permute.xlu0 %1745
  %1747 = vrot.lane.b32.xlu0 %v1352, 64
  %v1748 = vpop.permute.xlu0 %1747
  %1749 = vrot.lane.b32.xlu0 %v1368, 64
  %v1750 = vpop.permute.xlu0 %1749
  %1751 = vrot.lane.b32.xlu0 %v1384, 64
  %v1752 = vpop.permute.xlu0 %1751
  %v1769 = vsel %vm32, %v1185, %v1386
  %v1770 = vsel %vm32, %v1187, %v1388
  %v1771 = vsel %vm32, %v1189, %v1390
  %v1772 = vsel %vm32, %v1191, %v1392
  %v1773 = vsel %vm32, %v1193, %v1394
  %v1774 = vsel %vm32, %v1195, %v1396
  %v1775 = vsel %vm32, %v1197, %v1398
  %v1776 = vsel %vm32, %v1199, %v1400
  %v1777 = vsel %vm32, %v1205, %v1402
  %v1778 = vsel %vm32, %v1207, %v1404
  %v1779 = vsel %vm32, %v1209, %v1406
  %v1780 = vsel %vm32, %v1211, %v1408
  %v1781 = vsel %vm32, %v1213, %v1410
  %v1782 = vsel %vm32, %v1215, %v1412
  %v1783 = vsel %vm32, %v1217, %v1414
  %v1784 = vsel %vm32, %v1219, %v1416
  %v1785 = vsel %vm824, %v1769, %v1434
  %v1786 = vsel %vm824, %v1770, %v1436
  %v1787 = vsel %vm824, %v1771, %v1438
  %v1788 = vsel %vm824, %v1772, %v1440
  %v1789 = vsel %vm824, %v1773, %v1442
  %v1790 = vsel %vm824, %v1774, %v1444
  %v1791 = vsel %vm824, %v1775, %v1446
  %v1792 = vsel %vm824, %v1776, %v1448
  %v1793 = vsel %vm824, %v1777, %v1450
  %v1794 = vsel %vm824, %v1778, %v1452
  %v1795 = vsel %vm824, %v1779, %v1454
  %v1796 = vsel %vm824, %v1780, %v1456
  %v1797 = vsel %vm824, %v1781, %v1458
  %v1798 = vsel %vm824, %v1782, %v1460
  %v1799 = vsel %vm824, %v1783, %v1462
  %v1800 = vsel %vm824, %v1784, %v1464
  %vm1801 = vcmask 195584
  %v1802 = vsel %vm1801, %v1785, %v1482
  %v1803 = vsel %vm1801, %v1786, %v1484
  %v1804 = vsel %vm1801, %v1787, %v1486
  %v1805 = vsel %vm1801, %v1788, %v1488
  %v1806 = vsel %vm1801, %v1789, %v1490
  %v1807 = vsel %vm1801, %v1790, %v1492
  %v1808 = vsel %vm1801, %v1791, %v1494
  %v1809 = vsel %vm1801, %v1792, %v1496
  %v1810 = vsel %vm1801, %v1793, %v1498
  %v1811 = vsel %vm1801, %v1794, %v1500
  %v1812 = vsel %vm1801, %v1795, %v1502
  %v1813 = vsel %vm1801, %v1796, %v1504
  %v1814 = vsel %vm1801, %v1797, %v1506
  %v1815 = vsel %vm1801, %v1798, %v1508
  %v1816 = vsel %vm1801, %v1799, %v1510
  %v1817 = vsel %vm1801, %v1800, %v1512
  %v1818 = vsel %vm841, %v1802, %v1530
  %v1819 = vsel %vm841, %v1803, %v1532
  %v1820 = vsel %vm841, %v1804, %v1534
  %v1821 = vsel %vm841, %v1805, %v1536
  %v1822 = vsel %vm841, %v1806, %v1538
  %v1823 = vsel %vm841, %v1807, %v1540
  %v1824 = vsel %vm841, %v1808, %v1542
  %v1825 = vsel %vm841, %v1809, %v1544
  %v1826 = vsel %vm841, %v1810, %v1546
  %v1827 = vsel %vm841, %v1811, %v1548
  %v1828 = vsel %vm841, %v1812, %v1550
  %v1829 = vsel %vm841, %v1813, %v1552
  %v1830 = vsel %vm841, %v1814, %v1554
  %v1831 = vsel %vm841, %v1815, %v1556
  %v1832 = vsel %vm841, %v1816, %v1558
  %v1833 = vsel %vm841, %v1817, %v1560
  %vm1834 = vcmask 326656
  %v1835 = vsel %vm1834, %v1818, %v1578
  %v1836 = vsel %vm1834, %v1819, %v1580
  %v1837 = vsel %vm1834, %v1820, %v1582
  %v1838 = vsel %vm1834, %v1821, %v1584
  %v1839 = vsel %vm1834, %v1822, %v1586
  %v1840 = vsel %vm1834, %v1823, %v1588
  %v1841 = vsel %vm1834, %v1824, %v1590
  %v1842 = vsel %vm1834, %v1825, %v1592
  %v1843 = vsel %vm1834, %v1826, %v1594
  %v1844 = vsel %vm1834, %v1827, %v1596
  %v1845 = vsel %vm1834, %v1828, %v1598
  %v1846 = vsel %vm1834, %v1829, %v1600
  %v1847 = vsel %vm1834, %v1830, %v1602
  %v1848 = vsel %vm1834, %v1831, %v1604
  %v1849 = vsel %vm1834, %v1832, %v1606
  %v1850 = vsel %vm1834, %v1833, %v1608
  %v1851 = vsel %vm858, %v1835, %v1626
  %v1852 = vsel %vm858, %v1836, %v1628
  %v1853 = vsel %vm858, %v1837, %v1630
  %v1854 = vsel %vm858, %v1838, %v1632
  %v1855 = vsel %vm858, %v1839, %v1634
  %v1856 = vsel %vm858, %v1840, %v1636
  %v1857 = vsel %vm858, %v1841, %v1638
  %v1858 = vsel %vm858, %v1842, %v1640
  %v1859 = vsel %vm858, %v1843, %v1642
  %v1860 = vsel %vm858, %v1844, %v1644
  %v1861 = vsel %vm858, %v1845, %v1646
  %v1862 = vsel %vm858, %v1846, %v1648
  %v1863 = vsel %vm858, %v1847, %v1650
  %v1864 = vsel %vm858, %v1848, %v1652
  %v1865 = vsel %vm858, %v1849, %v1654
  %v1866 = vsel %vm858, %v1850, %v1656
  %vm1867 = vcmask 457728
  %v1868 = vsel %vm1867, %v1851, %v1674
  %v1869 = vsel %vm1867, %v1852, %v1676
  %v1870 = vsel %vm1867, %v1853, %v1678
  %v1871 = vsel %vm1867, %v1854, %v1680
  %v1872 = vsel %vm1867, %v1855, %v1682
  %v1873 = vsel %vm1867, %v1856, %v1684
  %v1874 = vsel %vm1867, %v1857, %v1686
  %v1875 = vsel %vm1867, %v1858, %v1688
  %v1876 = vsel %vm1867, %v1859, %v1690
  %v1877 = vsel %vm1867, %v1860, %v1692
  %v1878 = vsel %vm1867, %v1861, %v1694
  %v1879 = vsel %vm1867, %v1862, %v1696
  %v1880 = vsel %vm1867, %v1863, %v1698
  %v1881 = vsel %vm1867, %v1864, %v1700
  %v1882 = vsel %vm1867, %v1865, %v1702
  %v1883 = vsel %vm1867, %v1866, %v1704
  %v1884 = vsel %vm875, %v1868, %v1722
  %v1885 = vsel %vm875, %v1869, %v1724
  %v1886 = vsel %vm875, %v1870, %v1726
  %v1887 = vsel %vm875, %v1871, %v1728
  %v1888 = vsel %vm875, %v1872, %v1730
  %v1889 = vsel %vm875, %v1873, %v1732
  %v1890 = vsel %vm875, %v1874, %v1734
  %v1891 = vsel %vm875, %v1875, %v1736
  %v1892 = vsel %vm875, %v1876, %v1738
  %v1893 = vsel %vm875, %v1877, %v1740
  %v1894 = vsel %vm875, %v1878, %v1742
  %v1895 = vsel %vm875, %v1879, %v1744
  %v1896 = vsel %vm875, %v1880, %v1746
  %v1897 = vsel %vm875, %v1881, %v1748
  %v1898 = vsel %vm875, %v1882, %v1750
  %v1899 = vsel %vm875, %v1883, %v1752
  %vm1900 = vcmask 588800
  %v1901 = vsel %vm1900, %v1884, 0.0
  %v1902 = vsel %vm1900, %v1885, 0.0
  %v1903 = vsel %vm1900, %v1886, 0.0
  %v1904 = vsel %vm1900, %v1887, 0.0
  %v1905 = vsel %vm1900, %v1888, 0.0
  %v1906 = vsel %vm1900, %v1889, 0.0
  %v1907 = vsel %vm1900, %v1890, 0.0
  %v1908 = vsel %vm1900, %v1891, 0.0
  %v1909 = vsel %vm1900, %v1892, 0.0
  %v1910 = vsel %vm1900, %v1893, 0.0
  %v1911 = vsel %vm1900, %v1894, 0.0
  %v1912 = vsel %vm1900, %v1895, 0.0
  %v1913 = vsel %vm1900, %v1896, 0.0
  %v1914 = vsel %vm1900, %v1897, 0.0
  %v1915 = vsel %vm1900, %v1898, 0.0
  %v1916 = vsel %vm1900, %v1899, 0.0
  %v1917 = vld [vmem:[%s2] sm:$0xff]
  %v1918 = vld [vmem:[%s2 + $0x8] sm:$0xff]
  %v1919 = vld [vmem:[%s2 + $0x10] sm:$0xff]
  %v1920 = vld [vmem:[%s2 + $0x18] sm:$0xff]
  %v1921 = vld [vmem:[%s2 + $0x20] sm:$0xff]
  %v1922 = vld [vmem:[%s2 + $0x28] sm:$0xff]
  %v1923 = vld [vmem:[%s2 + $0x30] sm:$0xff]
  %v1924 = vld [vmem:[%s2 + $0x38] sm:$0xff]
  %v1925 = vld [vmem:[%s2 + $0x40] sm:$0xff]
  %v1926 = vld [vmem:[%s2 + $0x48] sm:$0xff]
  %v1927 = vld [vmem:[%s2 + $0x50] sm:$0xff]
  %v1928 = vld [vmem:[%s2 + $0x58] sm:$0xff]
  %v1929 = vld [vmem:[%s2 + $0x60] sm:$0xff]
  %v1930 = vld [vmem:[%s2 + $0x68] sm:$0xff]
  %v1931 = vld [vmem:[%s2 + $0x70] sm:$0xff]
  %v1932 = vld [vmem:[%s2 + $0x78] sm:$0xff]
  %v1933 = vlaneseq
  %v1934 = vshrl.u32 %v1933, 7
  %v1935 = vsub.s32 1, %v1934
  %v1936 = vrot.slane %v31, %v1935
  %1937 = vmatprep.subr.mxu0 0.0
  %1938 = vmatpush1.msra.mxu0 %v1917
  %1939 = vmatprep.subr.mxu0 0.0
  %1940 = vmatpush1.msra.mxu0 %v1918
  %1941 = vmatprep.subr.mxu0 0.0
  %1942 = vmatpush1.msra.mxu0 %v1919
  %1943 = vmatprep.subr.mxu0 0.0
  %1944 = vmatpush1.msra.mxu0 %v1920
  %1945 = vmatprep.subr.mxu0 0.0
  %1946 = vmatpush1.msra.mxu0 %v1921
  %1947 = vmatprep.subr.mxu0 0.0
  %1948 = vmatpush1.msra.mxu0 %v1922
  %1949 = vmatprep.subr.mxu0 0.0
  %1950 = vmatpush1.msra.mxu0 %v1923
  %1951 = vmatprep.subr.mxu0 0.0
  %1952 = vmatpush1.msra.mxu0 %v1924
  %1953 = vmatprep.subr.mxu0 0.0
  %1954 = vmatpush1.msra.mxu0 %v1925
  %1955 = vmatprep.subr.mxu0 0.0
  %1956 = vmatpush1.msra.mxu0 %v1926
  %1957 = vmatprep.subr.mxu0 0.0
  %1958 = vmatpush1.msra.mxu0 %v1927
  %1959 = vmatprep.subr.mxu0 0.0
  %1960 = vmatpush1.msra.mxu0 %v1928
  %1961 = vmatprep.subr.mxu0 0.0
  %1962 = vmatpush1.msra.mxu0 %v1929
  %1963 = vmatprep.subr.mxu0 0.0
  %1964 = vmatpush1.msra.mxu0 %v1930
  %1965 = vmatprep.subr.mxu0 0.0
  %1966 = vmatpush1.msra.mxu0 %v1931
  %1967 = vmatprep.subr.mxu0 0.0
  %1968 = vmatpush1.msra.mxu0 %v1932
  %1969 = vmatprep.subr.mxu0 0.0
  %1970 = vmatpush1.msra.mxu0 0.0
  %1971 = vmatprep.subr.mxu0 0.0
  %1972 = vmatpush1.msra.mxu0 0.0
  %1973 = vmatprep.subr.mxu0 0.0
  %1974 = vmatpush1.msra.mxu0 0.0
  %1975 = vmatprep.subr.mxu0 0.0
  %1976 = vmatpush1.msra.mxu0 0.0
  %1977 = vmatprep.subr.mxu0 0.0
  %1978 = vmatpush1.msra.mxu0 0.0
  %1979 = vmatprep.subr.mxu0 0.0
  %1980 = vmatpush1.msra.mxu0 0.0
  %1981 = vmatprep.subr.mxu0 0.0
  %1982 = vmatpush1.msra.mxu0 0.0
  %1983 = vmatprep.subr.mxu0 0.0
  %1984 = vmatpush1.msra.mxu0 0.0
  %1985 = vmatprep.subr.mxu0 0.0
  %1986 = vmatpush1.msra.mxu0 0.0
  %1987 = vmatprep.subr.mxu0 0.0
  %1988 = vmatpush1.msra.mxu0 0.0
  %1989 = vmatprep.subr.mxu0 0.0
  %1990 = vmatpush1.msra.mxu0 0.0
  %1991 = vmatprep.subr.mxu0 0.0
  %1992 = vmatpush1.msra.mxu0 0.0
  %1993 = vmatprep.subr.mxu0 0.0
  %1994 = vmatpush1.msra.mxu0 0.0
  %1995 = vmatprep.subr.mxu0 0.0
  %1996 = vmatpush1.msra.mxu0 0.0
  %1997 = vmatprep.subr.mxu0 0.0
  %1998 = vmatpush1.msra.mxu0 0.0
  %1999 = vmatprep.subr.mxu0 0.0
  %2000 = vmatpush1.msra.mxu0 0.0
  %2001 = vmatprep.mubr.f32.mxu0 0.0
  %2002 = vmatmul.mubr.f32.gmra.mrb[0].mxu0 %v1901
  %v2003 = vpop.f32.mrb[0].mxu0
  %v2004 = vadd.f32 %v1936, %v2003
  %v2005 = vpop.f32.mrb[0].mxu0
  %2006 = vmatprep.mubr.f32.mxu0 0.0
  %2007 = vmatmul.mubr.f32.gmra.mrb[0].mxu0 %v1902
  %v2008 = vpop.f32.mrb[0].mxu0
  %v2009 = vadd.f32 %v1936, %v2008
  %v2010 = vpop.f32.mrb[0].mxu0
  %2011 = vmatprep.mubr.f32.mxu0 0.0
  %2012 = vmatmul.mubr.f32.gmra.mrb[0].mxu0 %v1903
  %v2013 = vpop.f32.mrb[0].mxu0
  %v2014 = vadd.f32 %v1936, %v2013
  %v2015 = vpop.f32.mrb[0].mxu0
  %2016 = vmatprep.mubr.f32.mxu0 0.0
  %2017 = vmatmul.mubr.f32.gmra.mrb[0].mxu0 %v1904
  %v2018 = vpop.f32.mrb[0].mxu0
  %v2019 = vadd.f32 %v1936, %v2018
  %v2020 = vpop.f32.mrb[0].mxu0
  %2021 = vmatprep.mubr.f32.mxu0 0.0
  %2022 = vmatmul.mubr.f32.gmra.mrb[0].mxu0 %v1905
  %v2023 = vpop.f32.mrb[0].mxu0
  %v2024 = vadd.f32 %v1936, %v2023
  %v2025 = vpop.f32.mrb[0].mxu0
  %2026 = vmatprep.mubr.f32.mxu0 0.0
  %2027 = vmatmul.mubr.f32.gmra.mrb[0].mxu0 %v1906
  %v2028 = vpop.f32.mrb[0].mxu0
  %v2029 = vadd.f32 %v1936, %v2028
  %v2030 = vpop.f32.mrb[0].mxu0
  %2031 = vmatprep.mubr.f32.mxu0 0.0
  %2032 = vmatmul.mubr.f32.gmra.mrb[0].mxu0 %v1907
  %v2033 = vpop.f32.mrb[0].mxu0
  %v2034 = vadd.f32 %v1936, %v2033
  %v2035 = vpop.f32.mrb[0].mxu0
  %2036 = vmatprep.mubr.f32.mxu0 0.0
  %2037 = vmatmul.mubr.f32.gmra.mrb[0].mxu0 %v1908
  %v2038 = vpop.f32.mrb[0].mxu0
  %v2039 = vadd.f32 %v1936, %v2038
  %v2040 = vpop.f32.mrb[0].mxu0
  %2041 = vmatprep.mubr.f32.mxu0 0.0
  %2042 = vmatmul.mubr.f32.gmra.mrb[0].mxu0 %v1909
  %v2043 = vpop.f32.mrb[0].mxu0
  %v2044 = vadd.f32 %v1936, %v2043
  %v2045 = vpop.f32.mrb[0].mxu0
  %2046 = vmatprep.mubr.f32.mxu0 0.0
  %2047 = vmatmul.mubr.f32.gmra.mrb[0].mxu0 %v1910
  %v2048 = vpop.f32.mrb[0].mxu0
  %v2049 = vadd.f32 %v1936, %v2048
  %v2050 = vpop.f32.mrb[0].mxu0
  %2051 = vmatprep.mubr.f32.mxu0 0.0
  %2052 = vmatmul.mubr.f32.gmra.mrb[0].mxu0 %v1911
  %v2053 = vpop.f32.mrb[0].mxu0
  %v2054 = vadd.f32 %v1936, %v2053
  %v2055 = vpop.f32.mrb[0].mxu0
  %2056 = vmatprep.mubr.f32.mxu0 0.0
  %2057 = vmatmul.mubr.f32.gmra.mrb[0].mxu0 %v1912
  %v2058 = vpop.f32.mrb[0].mxu0
  %v2059 = vadd.f32 %v1936, %v2058
  %v2060 = vpop.f32.mrb[0].mxu0
  %2061 = vmatprep.mubr.f32.mxu0 0.0
  %2062 = vmatmul.mubr.f32.gmra.mrb[0].mxu0 %v1913
  %v2063 = vpop.f32.mrb[0].mxu0
  %v2064 = vadd.f32 %v1936, %v2063
  %v2065 = vpop.f32.mrb[0].mxu0
  %2066 = vmatprep.mubr.f32.mxu0 0.0
  %2067 = vmatmul.mubr.f32.gmra.mrb[0].mxu0 %v1914
  %v2068 = vpop.f32.mrb[0].mxu0
  %v2069 = vadd.f32 %v1936, %v2068
  %v2070 = vpop.f32.mrb[0].mxu0
  %2071 = vmatprep.mubr.f32.mxu0 0.0
  %2072 = vmatmul.mubr.f32.gmra.mrb[0].mxu0 %v1915
  %v2073 = vpop.f32.mrb[0].mxu0
  %v2074 = vadd.f32 %v1936, %v2073
  %v2075 = vpop.f32.mrb[0].mxu0
  %2076 = vmatprep.mubr.f32.mxu0 0.0
  %2077 = vmatmul.mubr.f32.gmra.mrb[0].mxu0 %v1916
  %v2078 = vpop.f32.mrb[0].mxu0
  %v2079 = vadd.f32 %v1936, %v2078
  %v2080 = vpop.f32.mrb[0].mxu0
  %2081 = vdwg.mxu0
  %v2082 = vmax.f32 %v2004, 0.0
  %v2083 = vmax.f32 %v2009, 0.0
  %v2084 = vmax.f32 %v2014, 0.0
  %v2085 = vmax.f32 %v2019, 0.0
  %v2086 = vmax.f32 %v2024, 0.0
  %v2087 = vmax.f32 %v2029, 0.0
  %v2088 = vmax.f32 %v2034, 0.0
  %v2089 = vmax.f32 %v2039, 0.0
  %v2090 = vmax.f32 %v2044, 0.0
  %v2091 = vmax.f32 %v2049, 0.0
  %v2092 = vmax.f32 %v2054, 0.0
  %v2093 = vmax.f32 %v2059, 0.0
  %v2094 = vmax.f32 %v2064, 0.0
  %v2095 = vmax.f32 %v2069, 0.0
  %v2096 = vmax.f32 %v2074, 0.0
  %v2097 = vmax.f32 %v2079, 0.0
  %2098 = vst.msk [vmem:[%s1168 + $0x1] sm:$0xff] %vm32, %v2082
  %2099 = vst.msk [vmem:[%s1168 + $0x11] sm:$0xff] %vm32, %v2083
  %2100 = vst.msk [vmem:[%s1168 + $0x21] sm:$0xff] %vm32, %v2084
  %2101 = vst.msk [vmem:[%s1168 + $0x31] sm:$0xff] %vm32, %v2085
  %2102 = vst.msk [vmem:[%s1168 + $0x41] sm:$0xff] %vm32, %v2086
  %2103 = vst.msk [vmem:[%s1168 + $0x51] sm:$0xff] %vm32, %v2087
  %2104 = vst.msk [vmem:[%s1168 + $0x61] sm:$0xff] %vm32, %v2088
  %2105 = vst.msk [vmem:[%s1168 + $0x71] sm:$0xff] %vm32, %v2089
  %2106 = vst.msk [vmem:[%s1168 + $0xa1] sm:$0xff] %vm32, %v2090
  %2107 = vst.msk [vmem:[%s1168 + $0xb1] sm:$0xff] %vm32, %v2091
  %2108 = vst.msk [vmem:[%s1168 + $0xc1] sm:$0xff] %vm32, %v2092
  %2109 = vst.msk [vmem:[%s1168 + $0xd1] sm:$0xff] %vm32, %v2093
  %2110 = vst.msk [vmem:[%s1168 + $0xe1] sm:$0xff] %vm32, %v2094
  %2111 = vst.msk [vmem:[%s1168 + $0xf1] sm:$0xff] %vm32, %v2095
  %2112 = vst.msk [vmem:[%s1168 + $0x101] sm:$0xff] %vm32, %v2096
  %2113 = vst.msk [vmem:[%s1168 + $0x111] sm:$0xff] %vm32, %v2097
  %v2114 = vld [vmem:[#allocation2] sm:$0xff]
  %v2115 = vld [vmem:[#allocation2 + $0x8] sm:$0x3]
  %v2116 = vld [vmem:[#allocation2 + $0x10] sm:$0xff]
  %v2117 = vld [vmem:[#allocation2 + $0x18] sm:$0x3]
  %v2118 = vld [vmem:[#allocation2 + $0x20] sm:$0xff]
  %v2119 = vld [vmem:[#allocation2 + $0x28] sm:$0x3]
  %v2120 = vld [vmem:[#allocation2 + $0x30] sm:$0xff]
  %v2121 = vld [vmem:[#allocation2 + $0x38] sm:$0x3]
  %v2122 = vld [vmem:[#allocation2 + $0x40] sm:$0xff]
  %v2123 = vld [vmem:[#allocation2 + $0x48] sm:$0x3]
  %v2124 = vld [vmem:[#allocation2 + $0x50] sm:$0xff]
  %v2125 = vld [vmem:[#allocation2 + $0x58] sm:$0x3]
  %v2126 = vld [vmem:[#allocation2 + $0x60] sm:$0xff]
  %v2127 = vld [vmem:[#allocation2 + $0x68] sm:$0x3]
  %v2128 = vld [vmem:[#allocation2 + $0x70] sm:$0xff]
  %v2129 = vld [vmem:[#allocation2 + $0x78] sm:$0x3]
  %v2130 = vld [vmem:[#allocation2 + $0x80] sm:$0xff]
  %v2131 = vld [vmem:[#allocation2 + $0x88] sm:$0x3]
  %v2132 = vld [vmem:[#allocation2 + $0x90] sm:$0xff]
  %v2133 = vld [vmem:[#allocation2 + $0x98] sm:$0x3]
  %v2134 = vld [vmem:[#allocation2 + $0xa0] sm:$0xff]
  %v2135 = vld [vmem:[#allocation2 + $0xa8] sm:$0x3]
  %v2136 = vld [vmem:[#allocation2 + $0xb0] sm:$0xff]
  %v2137 = vld [vmem:[#allocation2 + $0xb8] sm:$0x3]
  %v2138 = vld [vmem:[#allocation2 + $0xc0] sm:$0xff]
  %v2139 = vld [vmem:[#allocation2 + $0xc8] sm:$0x3]
  %v2140 = vld [vmem:[#allocation2 + $0xd0] sm:$0xff]
  %v2141 = vld [vmem:[#allocation2 + $0xd8] sm:$0x3]
  %v2142 = vld [vmem:[#allocation2 + $0xe0] sm:$0xff]
  %v2143 = vld [vmem:[#allocation2 + $0xe8] sm:$0x3]
  %v2144 = vld [vmem:[#allocation2 + $0xf0] sm:$0xff]
  %v2145 = vld [vmem:[#allocation2 + $0xf8] sm:$0x3]
  %v2146 = vld [vmem:[#allocation2 + $0x100] sm:$0xff]
  %v2147 = vld [vmem:[#allocation2 + $0x108] sm:$0x3]
  %v2148 = vld [vmem:[#allocation2 + $0x110] sm:$0xff]
  %v2149 = vld [vmem:[#allocation2 + $0x118] sm:$0x3]
  %v2150 = vld [vmem:[#allocation2 + $0x120] sm:$0xff]
  %v2151 = vld [vmem:[#allocation2 + $0x128] sm:$0x3]
  %v2152 = vld [vmem:[#allocation2 + $0x130] sm:$0xff]
  %v2153 = vld [vmem:[#allocation2 + $0x138] sm:$0x3]
  %v2186 = vrot.slane %v2114, 1
  %v2187 = vrot.slane %v2115, 1
  %v2188 = vsel %vm191, %v2186, %v2187
  %v2189 = vrot.slane %v2116, 1
  %v2190 = vrot.slane %v2117, 1
  %v2191 = vsel %vm191, %v2189, %v2190
  %v2192 = vrot.slane %v2118, 1
  %v2193 = vrot.slane %v2119, 1
  %v2194 = vsel %vm191, %v2192, %v2193
  %v2195 = vrot.slane %v2120, 1
  %v2196 = vrot.slane %v2121, 1
  %v2197 = vsel %vm191, %v2195, %v2196
  %v2198 = vrot.slane %v2122, 1
  %v2199 = vrot.slane %v2123, 1
  %v2200 = vsel %vm191, %v2198, %v2199
  %v2201 = vrot.slane %v2124, 1
  %v2202 = vrot.slane %v2125, 1
  %v2203 = vsel %vm191, %v2201, %v2202
  %v2204 = vrot.slane %v2126, 1
  %v2205 = vrot.slane %v2127, 1
  %v2206 = vsel %vm191, %v2204, %v2205
  %v2207 = vrot.slane %v2128, 1
  %v2208 = vrot.slane %v2129, 1
  %v2209 = vsel %vm191, %v2207, %v2208
  %v2210 = vrot.slane %v2134, 1
  %v2211 = vrot.slane %v2135, 1
  %v2212 = vsel %vm191, %v2210, %v2211
  %v2213 = vrot.slane %v2136, 1
  %v2214 = vrot.slane %v2137, 1
  %v2215 = vsel %vm191, %v2213, %v2214
  %v2216 = vrot.slane %v2138, 1
  %v2217 = vrot.slane %v2139, 1
  %v2218 = vsel %vm191, %v2216, %v2217
  %v2219 = vrot.slane %v2140, 1
  %v2220 = vrot.slane %v2141, 1
  %v2221 = vsel %vm191, %v2219, %v2220
  %v2222 = vrot.slane %v2142, 1
  %v2223 = vrot.slane %v2143, 1
  %v2224 = vsel %vm191, %v2222, %v2223
  %v2225 = vrot.slane %v2144, 1
  %v2226 = vrot.slane %v2145, 1
  %v2227 = vsel %vm191, %v2225, %v2226
  %v2228 = vrot.slane %v2146, 1
  %v2229 = vrot.slane %v2147, 1
  %v2230 = vsel %vm191, %v2228, %v2229
  %v2231 = vrot.slane %v2148, 1
  %v2232 = vrot.slane %v2149, 1
  %v2233 = vsel %vm191, %v2231, %v2232
  %v2234 = vrot.slane %v2114, 2
  %v2235 = vrot.slane %v2115, 2
  %v2236 = vsel %vm240, %v2234, %v2235
  %v2237 = vrot.slane %v2116, 2
  %v2238 = vrot.slane %v2117, 2
  %v2239 = vsel %vm240, %v2237, %v2238
  %v2240 = vrot.slane %v2118, 2
  %v2241 = vrot.slane %v2119, 2
  %v2242 = vsel %vm240, %v2240, %v2241
  %v2243 = vrot.slane %v2120, 2
  %v2244 = vrot.slane %v2121, 2
  %v2245 = vsel %vm240, %v2243, %v2244
  %v2246 = vrot.slane %v2122, 2
  %v2247 = vrot.slane %v2123, 2
  %v2248 = vsel %vm240, %v2246, %v2247
  %v2249 = vrot.slane %v2124, 2
  %v2250 = vrot.slane %v2125, 2
  %v2251 = vsel %vm240, %v2249, %v2250
  %v2252 = vrot.slane %v2126, 2
  %v2253 = vrot.slane %v2127, 2
  %v2254 = vsel %vm240, %v2252, %v2253
  %v2255 = vrot.slane %v2128, 2
  %v2256 = vrot.slane %v2129, 2
  %v2257 = vsel %vm240, %v2255, %v2256
  %v2258 = vrot.slane %v2134, 2
  %v2259 = vrot.slane %v2135, 2
  %v2260 = vsel %vm240, %v2258, %v2259
  %v2261 = vrot.slane %v2136, 2
  %v2262 = vrot.slane %v2137, 2
  %v2263 = vsel %vm240, %v2261, %v2262
  %v2264 = vrot.slane %v2138, 2
  %v2265 = vrot.slane %v2139, 2
  %v2266 = vsel %vm240, %v2264, %v2265
  %v2267 = vrot.slane %v2140, 2
  %v2268 = vrot.slane %v2141, 2
  %v2269 = vsel %vm240, %v2267, %v2268
  %v2270 = vrot.slane %v2142, 2
  %v2271 = vrot.slane %v2143, 2
  %v2272 = vsel %vm240, %v2270, %v2271
  %v2273 = vrot.slane %v2144, 2
  %v2274 = vrot.slane %v2145, 2
  %v2275 = vsel %vm240, %v2273, %v2274
  %v2276 = vrot.slane %v2146, 2
  %v2277 = vrot.slane %v2147, 2
  %v2278 = vsel %vm240, %v2276, %v2277
  %v2279 = vrot.slane %v2148, 2
  %v2280 = vrot.slane %v2149, 2
  %v2281 = vsel %vm240, %v2279, %v2280
  %v2286 = vrot.slane %v2130, 1
  %v2287 = vrot.slane %v2131, 1
  %v2288 = vsel %vm191, %v2286, %v2287
  %v2289 = vrot.slane %v2150, 1
  %v2290 = vrot.slane %v2151, 1
  %v2291 = vsel %vm191, %v2289, %v2290
  %v2292 = vrot.slane %v2130, 2
  %v2293 = vrot.slane %v2131, 2
  %v2294 = vsel %vm240, %v2292, %v2293
  %v2295 = vrot.slane %v2150, 2
  %v2296 = vrot.slane %v2151, 2
  %v2297 = vsel %vm240, %v2295, %v2296
  %v2302 = vrot.slane %v2132, 1
  %v2303 = vrot.slane %v2133, 1
  %v2304 = vsel %vm191, %v2302, %v2303
  %v2305 = vrot.slane %v2152, 1
  %v2306 = vrot.slane %v2153, 1
  %v2307 = vsel %vm191, %v2305, %v2306
  %v2308 = vrot.slane %v2132, 2
  %v2309 = vrot.slane %v2133, 2
  %v2310 = vsel %vm240, %v2308, %v2309
  %v2311 = vrot.slane %v2152, 2
  %v2312 = vrot.slane %v2153, 2
  %v2313 = vsel %vm240, %v2311, %v2312
  %2314 = vrot.lane.b32.xlu0 %v2188, 8
  %v2315 = vpop.permute.xlu0 %2314
  %2316 = vrot.lane.b32.xlu0 %v2191, 8
  %v2317 = vpop.permute.xlu0 %2316
  %2318 = vrot.lane.b32.xlu0 %v2194, 8
  %v2319 = vpop.permute.xlu0 %2318
  %2320 = vrot.lane.b32.xlu0 %v2197, 8
  %v2321 = vpop.permute.xlu0 %2320
  %2322 = vrot.lane.b32.xlu0 %v2200, 8
  %v2323 = vpop.permute.xlu0 %2322
  %2324 = vrot.lane.b32.xlu0 %v2203, 8
  %v2325 = vpop.permute.xlu0 %2324
  %2326 = vrot.lane.b32.xlu0 %v2206, 8
  %v2327 = vpop.permute.xlu0 %2326
  %2328 = vrot.lane.b32.xlu0 %v2209, 8
  %v2329 = vpop.permute.xlu0 %2328
  %2330 = vrot.lane.b32.xlu0 %v2212, 8
  %v2331 = vpop.permute.xlu0 %2330
  %2332 = vrot.lane.b32.xlu0 %v2215, 8
  %v2333 = vpop.permute.xlu0 %2332
  %2334 = vrot.lane.b32.xlu0 %v2218, 8
  %v2335 = vpop.permute.xlu0 %2334
  %2336 = vrot.lane.b32.xlu0 %v2221, 8
  %v2337 = vpop.permute.xlu0 %2336
  %2338 = vrot.lane.b32.xlu0 %v2224, 8
  %v2339 = vpop.permute.xlu0 %2338
  %2340 = vrot.lane.b32.xlu0 %v2227, 8
  %v2341 = vpop.permute.xlu0 %2340
  %2342 = vrot.lane.b32.xlu0 %v2230, 8
  %v2343 = vpop.permute.xlu0 %2342
  %2344 = vrot.lane.b32.xlu0 %v2233, 8
  %v2345 = vpop.permute.xlu0 %2344
  %2362 = vrot.lane.b32.xlu0 %v2236, 16
  %v2363 = vpop.permute.xlu0 %2362
  %2364 = vrot.lane.b32.xlu0 %v2239, 16
  %v2365 = vpop.permute.xlu0 %2364
  %2366 = vrot.lane.b32.xlu0 %v2242, 16
  %v2367 = vpop.permute.xlu0 %2366
  %2368 = vrot.lane.b32.xlu0 %v2245, 16
  %v2369 = vpop.permute.xlu0 %2368
  %2370 = vrot.lane.b32.xlu0 %v2248, 16
  %v2371 = vpop.permute.xlu0 %2370
  %2372 = vrot.lane.b32.xlu0 %v2251, 16
  %v2373 = vpop.permute.xlu0 %2372
  %2374 = vrot.lane.b32.xlu0 %v2254, 16
  %v2375 = vpop.permute.xlu0 %2374
  %2376 = vrot.lane.b32.xlu0 %v2257, 16
  %v2377 = vpop.permute.xlu0 %2376
  %2378 = vrot.lane.b32.xlu0 %v2260, 16
  %v2379 = vpop.permute.xlu0 %2378
  %2380 = vrot.lane.b32.xlu0 %v2263, 16
  %v2381 = vpop.permute.xlu0 %2380
  %2382 = vrot.lane.b32.xlu0 %v2266, 16
  %v2383 = vpop.permute.xlu0 %2382
  %2384 = vrot.lane.b32.xlu0 %v2269, 16
  %v2385 = vpop.permute.xlu0 %2384
  %2386 = vrot.lane.b32.xlu0 %v2272, 16
  %v2387 = vpop.permute.xlu0 %2386
  %2388 = vrot.lane.b32.xlu0 %v2275, 16
  %v2389 = vpop.permute.xlu0 %2388
  %2390 = vrot.lane.b32.xlu0 %v2278, 16
  %v2391 = vpop.permute.xlu0 %2390
  %2392 = vrot.lane.b32.xlu0 %v2281, 16
  %v2393 = vpop.permute.xlu0 %2392
  %2410 = vrot.lane.b32.xlu0 %v2116, 24
  %v2411 = vpop.permute.xlu0 %2410
  %2412 = vrot.lane.b32.xlu0 %v2118, 24
  %v2413 = vpop.permute.xlu0 %2412
  %2414 = vrot.lane.b32.xlu0 %v2120, 24
  %v2415 = vpop.permute.xlu0 %2414
  %2416 = vrot.lane.b32.xlu0 %v2122, 24
  %v2417 = vpop.permute.xlu0 %2416
  %2418 = vrot.lane.b32.xlu0 %v2124, 24
  %v2419 = vpop.permute.xlu0 %2418
  %2420 = vrot.lane.b32.xlu0 %v2126, 24
  %v2421 = vpop.permute.xlu0 %2420
  %2422 = vrot.lane.b32.xlu0 %v2128, 24
  %v2423 = vpop.permute.xlu0 %2422
  %2424 = vrot.lane.b32.xlu0 %v2130, 24
  %v2425 = vpop.permute.xlu0 %2424
  %2426 = vrot.lane.b32.xlu0 %v2136, 24
  %v2427 = vpop.permute.xlu0 %2426
  %2428 = vrot.lane.b32.xlu0 %v2138, 24
  %v2429 = vpop.permute.xlu0 %2428
  %2430 = vrot.lane.b32.xlu0 %v2140, 24
  %v2431 = vpop.permute.xlu0 %2430
  %2432 = vrot.lane.b32.xlu0 %v2142, 24
  %v2433 = vpop.permute.xlu0 %2432
  %2434 = vrot.lane.b32.xlu0 %v2144, 24
  %v2435 = vpop.permute.xlu0 %2434
  %2436 = vrot.lane.b32.xlu0 %v2146, 24
  %v2437 = vpop.permute.xlu0 %2436
  %2438 = vrot.lane.b32.xlu0 %v2148, 24
  %v2439 = vpop.permute.xlu0 %2438
  %2440 = vrot.lane.b32.xlu0 %v2150, 24
  %v2441 = vpop.permute.xlu0 %2440
  %2458 = vrot.lane.b32.xlu0 %v2191, 32
  %v2459 = vpop.permute.xlu0 %2458
  %2460 = vrot.lane.b32.xlu0 %v2194, 32
  %v2461 = vpop.permute.xlu0 %2460
  %2462 = vrot.lane.b32.xlu0 %v2197, 32
  %v2463 = vpop.permute.xlu0 %2462
  %2464 = vrot.lane.b32.xlu0 %v2200, 32
  %v2465 = vpop.permute.xlu0 %2464
  %2466 = vrot.lane.b32.xlu0 %v2203, 32
  %v2467 = vpop.permute.xlu0 %2466
  %2468 = vrot.lane.b32.xlu0 %v2206, 32
  %v2469 = vpop.permute.xlu0 %2468
  %2470 = vrot.lane.b32.xlu0 %v2209, 32
  %v2471 = vpop.permute.xlu0 %2470
  %2472 = vrot.lane.b32.xlu0 %v2288, 32
  %v2473 = vpop.permute.xlu0 %2472
  %2474 = vrot.lane.b32.xlu0 %v2215, 32
  %v2475 = vpop.permute.xlu0 %2474
  %2476 = vrot.lane.b32.xlu0 %v2218, 32
  %v2477 = vpop.permute.xlu0 %2476
  %2478 = vrot.lane.b32.xlu0 %v2221, 32
  %v2479 = vpop.permute.xlu0 %2478
  %2480 = vrot.lane.b32.xlu0 %v2224, 32
  %v2481 = vpop.permute.xlu0 %2480
  %2482 = vrot.lane.b32.xlu0 %v2227, 32
  %v2483 = vpop.permute.xlu0 %2482
  %2484 = vrot.lane.b32.xlu0 %v2230, 32
  %v2485 = vpop.permute.xlu0 %2484
  %2486 = vrot.lane.b32.xlu0 %v2233, 32
  %v2487 = vpop.permute.xlu0 %2486
  %2488 = vrot.lane.b32.xlu0 %v2291, 32
  %v2489 = vpop.permute.xlu0 %2488
  %2506 = vrot.lane.b32.xlu0 %v2239, 40
  %v2507 = vpop.permute.xlu0 %2506
  %2508 = vrot.lane.b32.xlu0 %v2242, 40
  %v2509 = vpop.permute.xlu0 %2508
  %2510 = vrot.lane.b32.xlu0 %v2245, 40
  %v2511 = vpop.permute.xlu0 %2510
  %2512 = vrot.lane.b32.xlu0 %v2248, 40
  %v2513 = vpop.permute.xlu0 %2512
  %2514 = vrot.lane.b32.xlu0 %v2251, 40
  %v2515 = vpop.permute.xlu0 %2514
  %2516 = vrot.lane.b32.xlu0 %v2254, 40
  %v2517 = vpop.permute.xlu0 %2516
  %2518 = vrot.lane.b32.xlu0 %v2257, 40
  %v2519 = vpop.permute.xlu0 %2518
  %2520 = vrot.lane.b32.xlu0 %v2294, 40
  %v2521 = vpop.permute.xlu0 %2520
  %2522 = vrot.lane.b32.xlu0 %v2263, 40
  %v2523 = vpop.permute.xlu0 %2522
  %2524 = vrot.lane.b32.xlu0 %v2266, 40
  %v2525 = vpop.permute.xlu0 %2524
  %2526 = vrot.lane.b32.xlu0 %v2269, 40
  %v2527 = vpop.permute.xlu0 %2526
  %2528 = vrot.lane.b32.xlu0 %v2272, 40
  %v2529 = vpop.permute.xlu0 %2528
  %2530 = vrot.lane.b32.xlu0 %v2275, 40
  %v2531 = vpop.permute.xlu0 %2530
  %2532 = vrot.lane.b32.xlu0 %v2278, 40
  %v2533 = vpop.permute.xlu0 %2532
  %2534 = vrot.lane.b32.xlu0 %v2281, 40
  %v2535 = vpop.permute.xlu0 %2534
  %2536 = vrot.lane.b32.xlu0 %v2297, 40
  %v2537 = vpop.permute.xlu0 %2536
  %2554 = vrot.lane.b32.xlu0 %v2118, 48
  %v2555 = vpop.permute.xlu0 %2554
  %2556 = vrot.lane.b32.xlu0 %v2120, 48
  %v2557 = vpop.permute.xlu0 %2556
  %2558 = vrot.lane.b32.xlu0 %v2122, 48
  %v2559 = vpop.permute.xlu0 %2558
  %2560 = vrot.lane.b32.xlu0 %v2124, 48
  %v2561 = vpop.permute.xlu0 %2560
  %2562 = vrot.lane.b32.xlu0 %v2126, 48
  %v2563 = vpop.permute.xlu0 %2562
  %2564 = vrot.lane.b32.xlu0 %v2128, 48
  %v2565 = vpop.permute.xlu0 %2564
  %2566 = vrot.lane.b32.xlu0 %v2130, 48
  %v2567 = vpop.permute.xlu0 %2566
  %2568 = vrot.lane.b32.xlu0 %v2132, 48
  %v2569 = vpop.permute.xlu0 %2568
  %2570 = vrot.lane.b32.xlu0 %v2138, 48
  %v2571 = vpop.permute.xlu0 %2570
  %2572 = vrot.lane.b32.xlu0 %v2140, 48
  %v2573 = vpop.permute.xlu0 %2572
  %2574 = vrot.lane.b32.xlu0 %v2142, 48
  %v2575 = vpop.permute.xlu0 %2574
  %2576 = vrot.lane.b32.xlu0 %v2144, 48
  %v2577 = vpop.permute.xlu0 %2576
  %2578 = vrot.lane.b32.xlu0 %v2146, 48
  %v2579 = vpop.permute.xlu0 %2578
  %2580 = vrot.lane.b32.xlu0 %v2148, 48
  %v2581 = vpop.permute.xlu0 %2580
  %2582 = vrot.lane.b32.xlu0 %v2150, 48
  %v2583 = vpop.permute.xlu0 %2582
  %2584 = vrot.lane.b32.xlu0 %v2152, 48
  %v2585 = vpop.permute.xlu0 %2584
  %2602 = vrot.lane.b32.xlu0 %v2194, 56
  %v2603 = vpop.permute.xlu0 %2602
  %2604 = vrot.lane.b32.xlu0 %v2197, 56
  %v2605 = vpop.permute.xlu0 %2604
  %2606 = vrot.lane.b32.xlu0 %v2200, 56
  %v2607 = vpop.permute.xlu0 %2606
  %2608 = vrot.lane.b32.xlu0 %v2203, 56
  %v2609 = vpop.permute.xlu0 %2608
  %2610 = vrot.lane.b32.xlu0 %v2206, 56
  %v2611 = vpop.permute.xlu0 %2610
  %2612 = vrot.lane.b32.xlu0 %v2209, 56
  %v2613 = vpop.permute.xlu0 %2612
  %2614 = vrot.lane.b32.xlu0 %v2288, 56
  %v2615 = vpop.permute.xlu0 %2614
  %2616 = vrot.lane.b32.xlu0 %v2304, 56
  %v2617 = vpop.permute.xlu0 %2616
  %2618 = vrot.lane.b32.xlu0 %v2218, 56
  %v2619 = vpop.permute.xlu0 %2618
  %2620 = vrot.lane.b32.xlu0 %v2221, 56
  %v2621 = vpop.permute.xlu0 %2620
  %2622 = vrot.lane.b32.xlu0 %v2224, 56
  %v2623 = vpop.permute.xlu0 %2622
  %2624 = vrot.lane.b32.xlu0 %v2227, 56
  %v2625 = vpop.permute.xlu0 %2624
  %2626 = vrot.lane.b32.xlu0 %v2230, 56
  %v2627 = vpop.permute.xlu0 %2626
  %2628 = vrot.lane.b32.xlu0 %v2233, 56
  %v2629 = vpop.permute.xlu0 %2628
  %2630 = vrot.lane.b32.xlu0 %v2291, 56
  %v2631 = vpop.permute.xlu0 %2630
  %2632 = vrot.lane.b32.xlu0 %v2307, 56
  %v2633 = vpop.permute.xlu0 %2632
  %2650 = vrot.lane.b32.xlu0 %v2242, 64
  %v2651 = vpop.permute.xlu0 %2650
  %2652 = vrot.lane.b32.xlu0 %v2245, 64
  %v2653 = vpop.permute.xlu0 %2652
  %2654 = vrot.lane.b32.xlu0 %v2248, 64
  %v2655 = vpop.permute.xlu0 %2654
  %2656 = vrot.lane.b32.xlu0 %v2251, 64
  %v2657 = vpop.permute.xlu0 %2656
  %2658 = vrot.lane.b32.xlu0 %v2254, 64
  %v2659 = vpop.permute.xlu0 %2658
  %2660 = vrot.lane.b32.xlu0 %v2257, 64
  %v2661 = vpop.permute.xlu0 %2660
  %2662 = vrot.lane.b32.xlu0 %v2294, 64
  %v2663 = vpop.permute.xlu0 %2662
  %2664 = vrot.lane.b32.xlu0 %v2310, 64
  %v2665 = vpop.permute.xlu0 %2664
  %2666 = vrot.lane.b32.xlu0 %v2266, 64
  %v2667 = vpop.permute.xlu0 %2666
  %2668 = vrot.lane.b32.xlu0 %v2269, 64
  %v2669 = vpop.permute.xlu0 %2668
  %2670 = vrot.lane.b32.xlu0 %v2272, 64
  %v2671 = vpop.permute.xlu0 %2670
  %2672 = vrot.lane.b32.xlu0 %v2275, 64
  %v2673 = vpop.permute.xlu0 %2672
  %2674 = vrot.lane.b32.xlu0 %v2278, 64
  %v2675 = vpop.permute.xlu0 %2674
  %2676 = vrot.lane.b32.xlu0 %v2281, 64
  %v2677 = vpop.permute.xlu0 %2676
  %2678 = vrot.lane.b32.xlu0 %v2297, 64
  %v2679 = vpop.permute.xlu0 %2678
  %2680 = vrot.lane.b32.xlu0 %v2313, 64
  %v2681 = vpop.permute.xlu0 %2680
  %v2698 = vsel %vm32, %v2114, %v2315
  %v2699 = vsel %vm32, %v2116, %v2317
  %v2700 = vsel %vm32, %v2118, %v2319
  %v2701 = vsel %vm32, %v2120, %v2321
  %v2702 = vsel %vm32, %v2122, %v2323
  %v2703 = vsel %vm32, %v2124, %v2325
  %v2704 = vsel %vm32, %v2126, %v2327
  %v2705 = vsel %vm32, %v2128, %v2329
  %v2706 = vsel %vm32, %v2134, %v2331
  %v2707 = vsel %vm32, %v2136, %v2333
  %v2708 = vsel %vm32, %v2138, %v2335
  %v2709 = vsel %vm32, %v2140, %v2337
  %v2710 = vsel %vm32, %v2142, %v2339
  %v2711 = vsel %vm32, %v2144, %v2341
  %v2712 = vsel %vm32, %v2146, %v2343
  %v2713 = vsel %vm32, %v2148, %v2345
  %v2714 = vsel %vm824, %v2698, %v2363
  %v2715 = vsel %vm824, %v2699, %v2365
  %v2716 = vsel %vm824, %v2700, %v2367
  %v2717 = vsel %vm824, %v2701, %v2369
  %v2718 = vsel %vm824, %v2702, %v2371
  %v2719 = vsel %vm824, %v2703, %v2373
  %v2720 = vsel %vm824, %v2704, %v2375
  %v2721 = vsel %vm824, %v2705, %v2377
  %v2722 = vsel %vm824, %v2706, %v2379
  %v2723 = vsel %vm824, %v2707, %v2381
  %v2724 = vsel %vm824, %v2708, %v2383
  %v2725 = vsel %vm824, %v2709, %v2385
  %v2726 = vsel %vm824, %v2710, %v2387
  %v2727 = vsel %vm824, %v2711, %v2389
  %v2728 = vsel %vm824, %v2712, %v2391
  %v2729 = vsel %vm824, %v2713, %v2393
  %v2730 = vsel %vm1801, %v2714, %v2411
  %v2731 = vsel %vm1801, %v2715, %v2413
  %v2732 = vsel %vm1801, %v2716, %v2415
  %v2733 = vsel %vm1801, %v2717, %v2417
  %v2734 = vsel %vm1801, %v2718, %v2419
  %v2735 = vsel %vm1801, %v2719, %v2421
  %v2736 = vsel %vm1801, %v2720, %v2423
  %v2737 = vsel %vm1801, %v2721, %v2425
  %v2738 = vsel %vm1801, %v2722, %v2427
  %v2739 = vsel %vm1801, %v2723, %v2429
  %v2740 = vsel %vm1801, %v2724, %v2431
  %v2741 = vsel %vm1801, %v2725, %v2433
  %v2742 = vsel %vm1801, %v2726, %v2435
  %v2743 = vsel %vm1801, %v2727, %v2437
  %v2744 = vsel %vm1801, %v2728, %v2439
  %v2745 = vsel %vm1801, %v2729, %v2441
  %v2746 = vsel %vm841, %v2730, %v2459
  %v2747 = vsel %vm841, %v2731, %v2461
  %v2748 = vsel %vm841, %v2732, %v2463
  %v2749 = vsel %vm841, %v2733, %v2465
  %v2750 = vsel %vm841, %v2734, %v2467
  %v2751 = vsel %vm841, %v2735, %v2469
  %v2752 = vsel %vm841, %v2736, %v2471
  %v2753 = vsel %vm841, %v2737, %v2473
  %v2754 = vsel %vm841, %v2738, %v2475
  %v2755 = vsel %vm841, %v2739, %v2477
  %v2756 = vsel %vm841, %v2740, %v2479
  %v2757 = vsel %vm841, %v2741, %v2481
  %v2758 = vsel %vm841, %v2742, %v2483
  %v2759 = vsel %vm841, %v2743, %v2485
  %v2760 = vsel %vm841, %v2744, %v2487
  %v2761 = vsel %vm841, %v2745, %v2489
  %v2762 = vsel %vm1834, %v2746, %v2507
  %v2763 = vsel %vm1834, %v2747, %v2509
  %v2764 = vsel %vm1834, %v2748, %v2511
  %v2765 = vsel %vm1834, %v2749, %v2513
  %v2766 = vsel %vm1834, %v2750, %v2515
  %v2767 = vsel %vm1834, %v2751, %v2517
  %v2768 = vsel %vm1834, %v2752, %v2519
  %v2769 = vsel %vm1834, %v2753, %v2521
  %v2770 = vsel %vm1834, %v2754, %v2523
  %v2771 = vsel %vm1834, %v2755, %v2525
  %v2772 = vsel %vm1834, %v2756, %v2527
  %v2773 = vsel %vm1834, %v2757, %v2529
  %v2774 = vsel %vm1834, %v2758, %v2531
  %v2775 = vsel %vm1834, %v2759, %v2533
  %v2776 = vsel %vm1834, %v2760, %v2535
  %v2777 = vsel %vm1834, %v2761, %v2537
  %v2778 = vsel %vm858, %v2762, %v2555
  %v2779 = vsel %vm858, %v2763, %v2557
  %v2780 = vsel %vm858, %v2764, %v2559
  %v2781 = vsel %vm858, %v2765, %v2561
  %v2782 = vsel %vm858, %v2766, %v2563
  %v2783 = vsel %vm858, %v2767, %v2565
  %v2784 = vsel %vm858, %v2768, %v2567
  %v2785 = vsel %vm858, %v2769, %v2569
  %v2786 = vsel %vm858, %v2770, %v2571
  %v2787 = vsel %vm858, %v2771, %v2573
  %v2788 = vsel %vm858, %v2772, %v2575
  %v2789 = vsel %vm858, %v2773, %v2577
  %v2790 = vsel %vm858, %v2774, %v2579
  %v2791 = vsel %vm858, %v2775, %v2581
  %v2792 = vsel %vm858, %v2776, %v2583
  %v2793 = vsel %vm858, %v2777, %v2585
  %v2794 = vsel %vm1867, %v2778, %v2603
  %v2795 = vsel %vm1867, %v2779, %v2605
  %v2796 = vsel %vm1867, %v2780, %v2607
  %v2797 = vsel %vm1867, %v2781, %v2609
  %v2798 = vsel %vm1867, %v2782, %v2611
  %v2799 = vsel %vm1867, %v2783, %v2613
  %v2800 = vsel %vm1867, %v2784, %v2615
  %v2801 = vsel %vm1867, %v2785, %v2617
  %v2802 = vsel %vm1867, %v2786, %v2619
  %v2803 = vsel %vm1867, %v2787, %v2621
  %v2804 = vsel %vm1867, %v2788, %v2623
  %v2805 = vsel %vm1867, %v2789, %v2625
  %v2806 = vsel %vm1867, %v2790, %v2627
  %v2807 = vsel %vm1867, %v2791, %v2629
  %v2808 = vsel %vm1867, %v2792, %v2631
  %v2809 = vsel %vm1867, %v2793, %v2633
  %v2810 = vsel %vm875, %v2794, %v2651
  %v2811 = vsel %vm875, %v2795, %v2653
  %v2812 = vsel %vm875, %v2796, %v2655
  %v2813 = vsel %vm875, %v2797, %v2657
  %v2814 = vsel %vm875, %v2798, %v2659
  %v2815 = vsel %vm875, %v2799, %v2661
  %v2816 = vsel %vm875, %v2800, %v2663
  %v2817 = vsel %vm875, %v2801, %v2665
  %v2818 = vsel %vm875, %v2802, %v2667
  %v2819 = vsel %vm875, %v2803, %v2669
  %v2820 = vsel %vm875, %v2804, %v2671
  %v2821 = vsel %vm875, %v2805, %v2673
  %v2822 = vsel %vm875, %v2806, %v2675
  %v2823 = vsel %vm875, %v2807, %v2677
  %v2824 = vsel %vm875, %v2808, %v2679
  %v2825 = vsel %vm875, %v2809, %v2681
  %v2826 = vsel %vm1900, %v2810, 0.0
  %v2827 = vsel %vm1900, %v2811, 0.0
  %v2828 = vsel %vm1900, %v2812, 0.0
  %v2829 = vsel %vm1900, %v2813, 0.0
  %v2830 = vsel %vm1900, %v2814, 0.0
  %v2831 = vsel %vm1900, %v2815, 0.0
  %v2832 = vsel %vm1900, %v2816, 0.0
  %v2833 = vsel %vm1900, %v2817, 0.0
  %v2834 = vsel %vm1900, %v2818, 0.0
  %v2835 = vsel %vm1900, %v2819, 0.0
  %v2836 = vsel %vm1900, %v2820, 0.0
  %v2837 = vsel %vm1900, %v2821, 0.0
  %v2838 = vsel %vm1900, %v2822, 0.0
  %v2839 = vsel %vm1900, %v2823, 0.0
  %v2840 = vsel %vm1900, %v2824, 0.0
  %v2841 = vsel %vm1900, %v2825, 0.0
  %v2842 = vld [vmem:[%s3] sm:$0xff]
  %v2843 = vld [vmem:[%s3 + $0x8] sm:$0xff]
  %v2844 = vld [vmem:[%s3 + $0x10] sm:$0xff]
  %v2845 = vld [vmem:[%s3 + $0x18] sm:$0xff]
  %v2846 = vld [vmem:[%s3 + $0x20] sm:$0xff]
  %v2847 = vld [vmem:[%s3 + $0x28] sm:$0xff]
  %v2848 = vld [vmem:[%s3 + $0x30] sm:$0xff]
  %v2849 = vld [vmem:[%s3 + $0x38] sm:$0xff]
  %v2850 = vld [vmem:[%s3 + $0x40] sm:$0xff]
  %v2851 = vld [vmem:[%s3 + $0x48] sm:$0xff]
  %v2852 = vld [vmem:[%s3 + $0x50] sm:$0xff]
  %v2853 = vld [vmem:[%s3 + $0x58] sm:$0xff]
  %v2854 = vld [vmem:[%s3 + $0x60] sm:$0xff]
  %v2855 = vld [vmem:[%s3 + $0x68] sm:$0xff]
  %v2856 = vld [vmem:[%s3 + $0x70] sm:$0xff]
  %v2857 = vld [vmem:[%s3 + $0x78] sm:$0xff]
  %v2858 = vlaneseq
  %v2859 = vshrl.u32 %v2858, 7
  %v2860 = vsub.s32 2, %v2859
  %v2861 = vrot.slane %v31, %v2860
  %2862 = vmatprep.subr.mxu0 0.0
  %2863 = vmatpush1.msra.mxu0 %v2842
  %2864 = vmatprep.subr.mxu0 0.0
  %2865 = vmatpush1.msra.mxu0 %v2843
  %2866 = vmatprep.subr.mxu0 0.0
  %2867 = vmatpush1.msra.mxu0 %v2844
  %2868 = vmatprep.subr.mxu0 0.0
  %2869 = vmatpush1.msra.mxu0 %v2845
  %2870 = vmatprep.subr.mxu0 0.0
  %2871 = vmatpush1.msra.mxu0 %v2846
  %2872 = vmatprep.subr.mxu0 0.0
  %2873 = vmatpush1.msra.mxu0 %v2847
  %2874 = vmatprep.subr.mxu0 0.0
  %2875 = vmatpush1.msra.mxu0 %v2848
  %2876 = vmatprep.subr.mxu0 0.0
  %2877 = vmatpush1.msra.mxu0 %v2849
  %2878 = vmatprep.subr.mxu0 0.0
  %2879 = vmatpush1.msra.mxu0 %v2850
  %2880 = vmatprep.subr.mxu0 0.0
  %2881 = vmatpush1.msra.mxu0 %v2851
  %2882 = vmatprep.subr.mxu0 0.0
  %2883 = vmatpush1.msra.mxu0 %v2852
  %2884 = vmatprep.subr.mxu0 0.0
  %2885 = vmatpush1.msra.mxu0 %v2853
  %2886 = vmatprep.subr.mxu0 0.0
  %2887 = vmatpush1.msra.mxu0 %v2854
  %2888 = vmatprep.subr.mxu0 0.0
  %2889 = vmatpush1.msra.mxu0 %v2855
  %2890 = vmatprep.subr.mxu0 0.0
  %2891 = vmatpush1.msra.mxu0 %v2856
  %2892 = vmatprep.subr.mxu0 0.0
  %2893 = vmatpush1.msra.mxu0 %v2857
  %2894 = vmatprep.subr.mxu0 0.0
  %2895 = vmatpush1.msra.mxu0 0.0
  %2896 = vmatprep.subr.mxu0 0.0
  %2897 = vmatpush1.msra.mxu0 0.0
  %2898 = vmatprep.subr.mxu0 0.0
  %2899 = vmatpush1.msra.mxu0 0.0
  %2900 = vmatprep.subr.mxu0 0.0
  %2901 = vmatpush1.msra.mxu0 0.0
  %2902 = vmatprep.subr.mxu0 0.0
  %2903 = vmatpush1.msra.mxu0 0.0
  %2904 = vmatprep.subr.mxu0 0.0
  %2905 = vmatpush1.msra.mxu0 0.0
  %2906 = vmatprep.subr.mxu0 0.0
  %2907 = vmatpush1.msra.mxu0 0.0
  %2908 = vmatprep.subr.mxu0 0.0
  %2909 = vmatpush1.msra.mxu0 0.0
  %2910 = vmatprep.subr.mxu0 0.0
  %2911 = vmatpush1.msra.mxu0 0.0
  %2912 = vmatprep.subr.mxu0 0.0
  %2913 = vmatpush1.msra.mxu0 0.0
  %2914 = vmatprep.subr.mxu0 0.0
  %2915 = vmatpush1.msra.mxu0 0.0
  %2916 = vmatprep.subr.mxu0 0.0
  %2917 = vmatpush1.msra.mxu0 0.0
  %2918 = vmatprep.subr.mxu0 0.0
  %2919 = vmatpush1.msra.mxu0 0.0
  %2920 = vmatprep.subr.mxu0 0.0
  %2921 = vmatpush1.msra.mxu0 0.0
  %2922 = vmatprep.subr.mxu0 0.0
  %2923 = vmatpush1.msra.mxu0 0.0
  %2924 = vmatprep.subr.mxu0 0.0
  %2925 = vmatpush1.msra.mxu0 0.0
  %2926 = vmatprep.mubr.f32.mxu0 0.0
  %2927 = vmatmul.mubr.f32.gmra.mrb[0].mxu0 %v2826
  %v2928 = vpop.f32.mrb[0].mxu0
  %v2929 = vadd.f32 %v2861, %v2928
  %v2930 = vpop.f32.mrb[0].mxu0
  %2931 = vmatprep.mubr.f32.mxu0 0.0
  %2932 = vmatmul.mubr.f32.gmra.mrb[0].mxu0 %v2827
  %v2933 = vpop.f32.mrb[0].mxu0
  %v2934 = vadd.f32 %v2861, %v2933
  %v2935 = vpop.f32.mrb[0].mxu0
  %2936 = vmatprep.mubr.f32.mxu0 0.0
  %2937 = vmatmul.mubr.f32.gmra.mrb[0].mxu0 %v2828
  %v2938 = vpop.f32.mrb[0].mxu0
  %v2939 = vadd.f32 %v2861, %v2938
  %v2940 = vpop.f32.mrb[0].mxu0
  %2941 = vmatprep.mubr.f32.mxu0 0.0
  %2942 = vmatmul.mubr.f32.gmra.mrb[0].mxu0 %v2829
  %v2943 = vpop.f32.mrb[0].mxu0
  %v2944 = vadd.f32 %v2861, %v2943
  %v2945 = vpop.f32.mrb[0].mxu0
  %2946 = vmatprep.mubr.f32.mxu0 0.0
  %2947 = vmatmul.mubr.f32.gmra.mrb[0].mxu0 %v2830
  %v2948 = vpop.f32.mrb[0].mxu0
  %v2949 = vadd.f32 %v2861, %v2948
  %v2950 = vpop.f32.mrb[0].mxu0
  %2951 = vmatprep.mubr.f32.mxu0 0.0
  %2952 = vmatmul.mubr.f32.gmra.mrb[0].mxu0 %v2831
  %v2953 = vpop.f32.mrb[0].mxu0
  %v2954 = vadd.f32 %v2861, %v2953
  %v2955 = vpop.f32.mrb[0].mxu0
  %2956 = vmatprep.mubr.f32.mxu0 0.0
  %2957 = vmatmul.mubr.f32.gmra.mrb[0].mxu0 %v2832
  %v2958 = vpop.f32.mrb[0].mxu0
  %v2959 = vadd.f32 %v2861, %v2958
  %v2960 = vpop.f32.mrb[0].mxu0
  %2961 = vmatprep.mubr.f32.mxu0 0.0
  %2962 = vmatmul.mubr.f32.gmra.mrb[0].mxu0 %v2833
  %v2963 = vpop.f32.mrb[0].mxu0
  %v2964 = vadd.f32 %v2861, %v2963
  %v2965 = vpop.f32.mrb[0].mxu0
  %2966 = vmatprep.mubr.f32.mxu0 0.0
  %2967 = vmatmul.mubr.f32.gmra.mrb[0].mxu0 %v2834
  %v2968 = vpop.f32.mrb[0].mxu0
  %v2969 = vadd.f32 %v2861, %v2968
  %v2970 = vpop.f32.mrb[0].mxu0
  %2971 = vmatprep.mubr.f32.mxu0 0.0
  %2972 = vmatmul.mubr.f32.gmra.mrb[0].mxu0 %v2835
  %v2973 = vpop.f32.mrb[0].mxu0
  %v2974 = vadd.f32 %v2861, %v2973
  %v2975 = vpop.f32.mrb[0].mxu0
  %2976 = vmatprep.mubr.f32.mxu0 0.0
  %2977 = vmatmul.mubr.f32.gmra.mrb[0].mxu0 %v2836
  %v2978 = vpop.f32.mrb[0].mxu0
  %v2979 = vadd.f32 %v2861, %v2978
  %v2980 = vpop.f32.mrb[0].mxu0
  %2981 = vmatprep.mubr.f32.mxu0 0.0
  %2982 = vmatmul.mubr.f32.gmra.mrb[0].mxu0 %v2837
  %v2983 = vpop.f32.mrb[0].mxu0
  %v2984 = vadd.f32 %v2861, %v2983
  %v2985 = vpop.f32.mrb[0].mxu0
  %2986 = vmatprep.mubr.f32.mxu0 0.0
  %2987 = vmatmul.mubr.f32.gmra.mrb[0].mxu0 %v2838
  %v2988 = vpop.f32.mrb[0].mxu0
  %v2989 = vadd.f32 %v2861, %v2988
  %v2990 = vpop.f32.mrb[0].mxu0
  %2991 = vmatprep.mubr.f32.mxu0 0.0
  %2992 = vmatmul.mubr.f32.gmra.mrb[0].mxu0 %v2839
  %v2993 = vpop.f32.mrb[0].mxu0
  %v2994 = vadd.f32 %v2861, %v2993
  %v2995 = vpop.f32.mrb[0].mxu0
  %2996 = vmatprep.mubr.f32.mxu0 0.0
  %2997 = vmatmul.mubr.f32.gmra.mrb[0].mxu0 %v2840
  %v2998 = vpop.f32.mrb[0].mxu0
  %v2999 = vadd.f32 %v2861, %v2998
  %v3000 = vpop.f32.mrb[0].mxu0
  %3001 = vmatprep.mubr.f32.mxu0 0.0
  %3002 = vmatmul.mubr.f32.gmra.mrb[0].mxu0 %v2841
  %v3003 = vpop.f32.mrb[0].mxu0
  %v3004 = vadd.f32 %v2861, %v3003
  %v3005 = vpop.f32.mrb[0].mxu0
  %3006 = vdwg.mxu0
  %v3007 = vadd.f32 %v2929, %v1152
  %v3008 = vadd.f32 %v2934, %v1153
  %v3009 = vadd.f32 %v2939, %v1154
  %v3010 = vadd.f32 %v2944, %v1155
  %v3011 = vadd.f32 %v2949, %v1156
  %v3012 = vadd.f32 %v2954, %v1157
  %v3013 = vadd.f32 %v2959, %v1158
  %v3014 = vadd.f32 %v2964, %v1159
  %v3015 = vadd.f32 %v2969, %v1160
  %v3016 = vadd.f32 %v2974, %v1161
  %v3017 = vadd.f32 %v2979, %v1162
  %v3018 = vadd.f32 %v2984, %v1163
  %v3019 = vadd.f32 %v2989, %v1164
  %v3020 = vadd.f32 %v2994, %v1165
  %v3021 = vadd.f32 %v2999, %v1166
  %v3022 = vadd.f32 %v3004, %v1167
  %v3023 = vmax.f32 %v3007, 0.0
  %v3024 = vmax.f32 %v3008, 0.0
  %v3025 = vmax.f32 %v3009, 0.0
  %v3026 = vmax.f32 %v3010, 0.0
  %v3027 = vmax.f32 %v3011, 0.0
  %v3028 = vmax.f32 %v3012, 0.0
  %v3029 = vmax.f32 %v3013, 0.0
  %v3030 = vmax.f32 %v3014, 0.0
  %v3031 = vmax.f32 %v3015, 0.0
  %v3032 = vmax.f32 %v3016, 0.0
  %v3033 = vmax.f32 %v3017, 0.0
  %v3034 = vmax.f32 %v3018, 0.0
  %v3035 = vmax.f32 %v3019, 0.0
  %v3036 = vmax.f32 %v3020, 0.0
  %v3037 = vmax.f32 %v3021, 0.0
  %v3038 = vmax.f32 %v3022, 0.0
  %v3055 = vrot.slane %v3024, 7
  %vm3056 = vcmask 1041409
  %v3057 = vsel %vm3056, %v3055, %v3023
  %v3058 = vrot.slane %v3025, 6
  %vm3059 = vcmask 1042434
  %v3060 = vsel %vm3059, %v3058, %v3057
  %v3061 = vrot.slane %v3026, 5
  %vm3062 = vcmask 1043459
  %v3063 = vsel %vm3062, %v3061, %v3060
  %v3064 = vrot.slane %v3027, 4
  %vm3065 = vcmask 1044484
  %v3066 = vsel %vm3065, %v3064, %v3063
  %v3067 = vrot.slane %v3028, 3
  %vm3068 = vcmask 1045509
  %v3069 = vsel %vm3068, %v3067, %v3066
  %v3070 = vrot.slane %v3029, 2
  %vm3071 = vcmask 1046534
  %v3072 = vsel %vm3071, %v3070, %v3069
  %v3073 = vrot.slane %v3030, 1
  %vm3074 = vcmask 1047559
  %v3075 = vsel %vm3074, %v3073, %v3072
  %v3076 = vrot.slane %v3032, 7
  %v3077 = vsel %vm3056, %v3076, %v3031
  %v3078 = vrot.slane %v3033, 6
  %v3079 = vsel %vm3059, %v3078, %v3077
  %v3080 = vrot.slane %v3034, 5
  %v3081 = vsel %vm3062, %v3080, %v3079
  %v3082 = vrot.slane %v3035, 4
  %v3083 = vsel %vm3065, %v3082, %v3081
  %v3084 = vrot.slane %v3036, 3
  %v3085 = vsel %vm3068, %v3084, %v3083
  %v3086 = vrot.slane %v3037, 2
  %v3087 = vsel %vm3071, %v3086, %v3085
  %v3088 = vrot.slane %v3038, 1
  %v3089 = vsel %vm3074, %v3088, %v3087
  %v3092 = vrot.slane %v3023, 1
  %v3093 = vsel %vm3056, %v3024, %v3092
  %v3094 = vrot.slane %v3025, 7
  %v3095 = vsel %vm3059, %v3094, %v3093
  %v3096 = vrot.slane %v3026, 6
  %v3097 = vsel %vm3062, %v3096, %v3095
  %v3098 = vrot.slane %v3027, 5
  %v3099 = vsel %vm3065, %v3098, %v3097
  %v3100 = vrot.slane %v3028, 4
  %v3101 = vsel %vm3068, %v3100, %v3099
  %v3102 = vrot.slane %v3029, 3
  %v3103 = vsel %vm3071, %v3102, %v3101
  %v3104 = vrot.slane %v3030, 2
  %v3105 = vsel %vm3074, %v3104, %v3103
  %v3106 = vrot.slane %v3031, 1
  %v3107 = vsel %vm3056, %v3032, %v3106
  %v3108 = vrot.slane %v3033, 7
  %v3109 = vsel %vm3059, %v3108, %v3107
  %v3110 = vrot.slane %v3034, 6
  %v3111 = vsel %vm3062, %v3110, %v3109
  %v3112 = vrot.slane %v3035, 5
  %v3113 = vsel %vm3065, %v3112, %v3111
  %v3114 = vrot.slane %v3036, 4
  %v3115 = vsel %vm3068, %v3114, %v3113
  %v3116 = vrot.slane %v3037, 3
  %v3117 = vsel %vm3071, %v3116, %v3115
  %v3118 = vrot.slane %v3038, 2
  %v3119 = vsel %vm3074, %v3118, %v3117
  %3120 = vrot.lane.b32.xlu0 %v3105, 8
  %v3121 = vpop.permute.xlu0 %3120
  %3122 = vrot.lane.b32.xlu0 %v3119, 8
  %v3123 = vpop.permute.xlu0 %3122
  %v3126 = vrot.slane %v3023, 2
  %v3127 = vrot.slane %v3024, 1
  %v3128 = vsel %vm3056, %v3127, %v3126
  %v3129 = vsel %vm3059, %v3025, %v3128
  %v3130 = vrot.slane %v3026, 7
  %v3131 = vsel %vm3062, %v3130, %v3129
  %v3132 = vrot.slane %v3027, 6
  %v3133 = vsel %vm3065, %v3132, %v3131
  %v3134 = vrot.slane %v3028, 5
  %v3135 = vsel %vm3068, %v3134, %v3133
  %v3136 = vrot.slane %v3029, 4
  %v3137 = vsel %vm3071, %v3136, %v3135
  %v3138 = vrot.slane %v3030, 3
  %v3139 = vsel %vm3074, %v3138, %v3137
  %v3140 = vrot.slane %v3031, 2
  %v3141 = vrot.slane %v3032, 1
  %v3142 = vsel %vm3056, %v3141, %v3140
  %v3143 = vsel %vm3059, %v3033, %v3142
  %v3144 = vrot.slane %v3034, 7
  %v3145 = vsel %vm3062, %v3144, %v3143
  %v3146 = vrot.slane %v3035, 6
  %v3147 = vsel %vm3065, %v3146, %v3145
  %v3148 = vrot.slane %v3036, 5
  %v3149 = vsel %vm3068, %v3148, %v3147
  %v3150 = vrot.slane %v3037, 4
  %v3151 = vsel %vm3071, %v3150, %v3149
  %v3152 = vrot.slane %v3038, 3
  %v3153 = vsel %vm3074, %v3152, %v3151
  %3154 = vrot.lane.b32.xlu0 %v3139, 16
  %v3155 = vpop.permute.xlu0 %3154
  %3156 = vrot.lane.b32.xlu0 %v3153, 16
  %v3157 = vpop.permute.xlu0 %3156
  %v3160 = vrot.slane %v3023, 3
  %v3161 = vrot.slane %v3024, 2
  %v3162 = vsel %vm3056, %v3161, %v3160
  %v3163 = vrot.slane %v3025, 1
  %v3164 = vsel %vm3059, %v3163, %v3162
  %v3165 = vsel %vm3062, %v3026, %v3164
  %v3166 = vrot.slane %v3027, 7
  %v3167 = vsel %vm3065, %v3166, %v3165
  %v3168 = vrot.slane %v3028, 6
  %v3169 = vsel %vm3068, %v3168, %v3167
  %v3170 = vrot.slane %v3029, 5
  %v3171 = vsel %vm3071, %v3170, %v3169
  %v3172 = vrot.slane %v3030, 4
  %v3173 = vsel %vm3074, %v3172, %v3171
  %v3174 = vrot.slane %v3031, 3
  %v3175 = vrot.slane %v3032, 2
  %v3176 = vsel %vm3056, %v3175, %v3174
  %v3177 = vrot.slane %v3033, 1
  %v3178 = vsel %vm3059, %v3177, %v3176
  %v3179 = vsel %vm3062, %v3034, %v3178
  %v3180 = vrot.slane %v3035, 7
  %v3181 = vsel %vm3065, %v3180, %v3179
  %v3182 = vrot.slane %v3036, 6
  %v3183 = vsel %vm3068, %v3182, %v3181
  %v3184 = vrot.slane %v3037, 5
  %v3185 = vsel %vm3071, %v3184, %v3183
  %v3186 = vrot.slane %v3038, 4
  %v3187 = vsel %vm3074, %v3186, %v3185
  %3188 = vrot.lane.b32.xlu0 %v3173, 24
  %v3189 = vpop.permute.xlu0 %3188
  %3190 = vrot.lane.b32.xlu0 %v3187, 24
  %v3191 = vpop.permute.xlu0 %3190
  %v3194 = vrot.slane %v3023, 4
  %v3195 = vrot.slane %v3024, 3
  %v3196 = vsel %vm3056, %v3195, %v3194
  %v3197 = vrot.slane %v3025, 2
  %v3198 = vsel %vm3059, %v3197, %v3196
  %v3199 = vrot.slane %v3026, 1
  %v3200 = vsel %vm3062, %v3199, %v3198
  %v3201 = vsel %vm3065, %v3027, %v3200
  %v3202 = vrot.slane %v3028, 7
  %v3203 = vsel %vm3068, %v3202, %v3201
  %v3204 = vrot.slane %v3029, 6
  %v3205 = vsel %vm3071, %v3204, %v3203
  %v3206 = vrot.slane %v3030, 5
  %v3207 = vsel %vm3074, %v3206, %v3205
  %v3208 = vrot.slane %v3031, 4
  %v3209 = vrot.slane %v3032, 3
  %v3210 = vsel %vm3056, %v3209, %v3208
  %v3211 = vrot.slane %v3033, 2
  %v3212 = vsel %vm3059, %v3211, %v3210
  %v3213 = vrot.slane %v3034, 1
  %v3214 = vsel %vm3062, %v3213, %v3212
  %v3215 = vsel %vm3065, %v3035, %v3214
  %v3216 = vrot.slane %v3036, 7
  %v3217 = vsel %vm3068, %v3216, %v3215
  %v3218 = vrot.slane %v3037, 6
  %v3219 = vsel %vm3071, %v3218, %v3217
  %v3220 = vrot.slane %v3038, 5
  %v3221 = vsel %vm3074, %v3220, %v3219
  %3222 = vrot.lane.b32.xlu0 %v3207, 32
  %v3223 = vpop.permute.xlu0 %3222
  %3224 = vrot.lane.b32.xlu0 %v3221, 32
  %v3225 = vpop.permute.xlu0 %3224
  %v3228 = vrot.slane %v3023, 5
  %v3229 = vrot.slane %v3024, 4
  %v3230 = vsel %vm3056, %v3229, %v3228
  %v3231 = vrot.slane %v3025, 3
  %v3232 = vsel %vm3059, %v3231, %v3230
  %v3233 = vrot.slane %v3026, 2
  %v3234 = vsel %vm3062, %v3233, %v3232
  %v3235 = vrot.slane %v3027, 1
  %v3236 = vsel %vm3065, %v3235, %v3234
  %v3237 = vsel %vm3068, %v3028, %v3236
  %v3238 = vrot.slane %v3029, 7
  %v3239 = vsel %vm3071, %v3238, %v3237
  %v3240 = vrot.slane %v3030, 6
  %v3241 = vsel %vm3074, %v3240, %v3239
  %v3242 = vrot.slane %v3031, 5
  %v3243 = vrot.slane %v3032, 4
  %v3244 = vsel %vm3056, %v3243, %v3242
  %v3245 = vrot.slane %v3033, 3
  %v3246 = vsel %vm3059, %v3245, %v3244
  %v3247 = vrot.slane %v3034, 2
  %v3248 = vsel %vm3062, %v3247, %v3246
  %v3249 = vrot.slane %v3035, 1
  %v3250 = vsel %vm3065, %v3249, %v3248
  %v3251 = vsel %vm3068, %v3036, %v3250
  %v3252 = vrot.slane %v3037, 7
  %v3253 = vsel %vm3071, %v3252, %v3251
  %v3254 = vrot.slane %v3038, 6
  %v3255 = vsel %vm3074, %v3254, %v3253
  %3256 = vrot.lane.b32.xlu0 %v3241, 40
  %v3257 = vpop.permute.xlu0 %3256
  %3258 = vrot.lane.b32.xlu0 %v3255, 40
  %v3259 = vpop.permute.xlu0 %3258
  %v3262 = vrot.slane %v3023, 6
  %v3263 = vrot.slane %v3024, 5
  %v3264 = vsel %vm3056, %v3263, %v3262
  %v3265 = vrot.slane %v3025, 4
  %v3266 = vsel %vm3059, %v3265, %v3264
  %v3267 = vrot.slane %v3026, 3
  %v3268 = vsel %vm3062, %v3267, %v3266
  %v3269 = vrot.slane %v3027, 2
  %v3270 = vsel %vm3065, %v3269, %v3268
  %v3271 = vrot.slane %v3028, 1
  %v3272 = vsel %vm3068, %v3271, %v3270
  %v3273 = vsel %vm3071, %v3029, %v3272
  %v3274 = vrot.slane %v3030, 7
  %v3275 = vsel %vm3074, %v3274, %v3273
  %v3276 = vrot.slane %v3031, 6
  %v3277 = vrot.slane %v3032, 5
  %v3278 = vsel %vm3056, %v3277, %v3276
  %v3279 = vrot.slane %v3033, 4
  %v3280 = vsel %vm3059, %v3279, %v3278
  %v3281 = vrot.slane %v3034, 3
  %v3282 = vsel %vm3062, %v3281, %v3280
  %v3283 = vrot.slane %v3035, 2
  %v3284 = vsel %vm3065, %v3283, %v3282
  %v3285 = vrot.slane %v3036, 1
  %v3286 = vsel %vm3068, %v3285, %v3284
  %v3287 = vsel %vm3071, %v3037, %v3286
  %v3288 = vrot.slane %v3038, 7
  %v3289 = vsel %vm3074, %v3288, %v3287
  %3290 = vrot.lane.b32.xlu0 %v3275, 48
  %v3291 = vpop.permute.xlu0 %3290
  %3292 = vrot.lane.b32.xlu0 %v3289, 48
  %v3293 = vpop.permute.xlu0 %3292
  %v3296 = vrot.slane %v3023, 7
  %v3297 = vrot.slane %v3024, 6
  %v3298 = vsel %vm3056, %v3297, %v3296
  %v3299 = vrot.slane %v3025, 5
  %v3300 = vsel %vm3059, %v3299, %v3298
  %v3301 = vrot.slane %v3026, 4
  %v3302 = vsel %vm3062, %v3301, %v3300
  %v3303 = vrot.slane %v3027, 3
  %v3304 = vsel %vm3065, %v3303, %v3302
  %v3305 = vrot.slane %v3028, 2
  %v3306 = vsel %vm3068, %v3305, %v3304
  %v3307 = vrot.slane %v3029, 1
  %v3308 = vsel %vm3071, %v3307, %v3306
  %v3309 = vsel %vm3074, %v3030, %v3308
  %v3310 = vrot.slane %v3031, 7
  %v3311 = vrot.slane %v3032, 6
  %v3312 = vsel %vm3056, %v3311, %v3310
  %v3313 = vrot.slane %v3033, 5
  %v3314 = vsel %vm3059, %v3313, %v3312
  %v3315 = vrot.slane %v3034, 4
  %v3316 = vsel %vm3062, %v3315, %v3314
  %v3317 = vrot.slane %v3035, 3
  %v3318 = vsel %vm3065, %v3317, %v3316
  %v3319 = vrot.slane %v3036, 2
  %v3320 = vsel %vm3068, %v3319, %v3318
  %v3321 = vrot.slane %v3037, 1
  %v3322 = vsel %vm3071, %v3321, %v3320
  %v3323 = vsel %vm3074, %v3038, %v3322
  %3324 = vrot.lane.b32.xlu0 %v3309, 56
  %v3325 = vpop.permute.xlu0 %3324
  %3326 = vrot.lane.b32.xlu0 %v3323, 56
  %v3327 = vpop.permute.xlu0 %3326
  %v3330 = vsel %vm32, %v3075, %v3121
  %v3331 = vsel %vm32, %v3089, %v3123
  %v3332 = vsel %vm824, %v3330, %v3155
  %v3333 = vsel %vm824, %v3331, %v3157
  %v3334 = vsel %vm1801, %v3332, %v3189
  %v3335 = vsel %vm1801, %v3333, %v3191
  %v3336 = vsel %vm841, %v3334, %v3223
  %v3337 = vsel %vm841, %v3335, %v3225
  %v3338 = vsel %vm1834, %v3336, %v3257
  %v3339 = vsel %vm1834, %v3337, %v3259
  %v3340 = vsel %vm858, %v3338, %v3291
  %v3341 = vsel %vm858, %v3339, %v3293
  %v3342 = vsel %vm1867, %v3340, %v3325
  %v3343 = vsel %vm1867, %v3341, %v3327
  %v3346 = vrot.slane %v3343, 7
  %v3347 = vsel %vm3056, %v3346, %v3342
  %v3349 = vrot.slane %v3342, 1
  %v3350 = vsel %vm3056, %v3343, %v3349
  %3351 = vrot.lane.b32.xlu0 %v3350, 64
  %v3352 = vpop.permute.xlu0 %3351
  %v3354 = vrot.slane %v3342, 2
  %v3355 = vrot.slane %v3343, 1
  %v3356 = vsel %vm3056, %v3355, %v3354
  %v3358 = vrot.slane %v3342, 3
  %v3359 = vrot.slane %v3343, 2
  %v3360 = vsel %vm3056, %v3359, %v3358
  %3361 = vrot.lane.b32.xlu0 %v3360, 64
  %v3362 = vpop.permute.xlu0 %3361
  %v3364 = vrot.slane %v3342, 4
  %v3365 = vrot.slane %v3343, 3
  %v3366 = vsel %vm3056, %v3365, %v3364
  %v3368 = vrot.slane %v3342, 5
  %v3369 = vrot.slane %v3343, 4
  %v3370 = vsel %vm3056, %v3369, %v3368
  %3371 = vrot.lane.b32.xlu0 %v3370, 64
  %v3372 = vpop.permute.xlu0 %3371
  %v3374 = vrot.slane %v3342, 6
  %v3375 = vrot.slane %v3343, 5
  %v3376 = vsel %vm3056, %v3375, %v3374
  %v3378 = vrot.slane %v3342, 7
  %v3379 = vrot.slane %v3343, 6
  %v3380 = vsel %vm3056, %v3379, %v3378
  %3381 = vrot.lane.b32.xlu0 %v3380, 64
  %v3382 = vpop.permute.xlu0 %3381
  %v3384 = vsel %vm875, %v3347, %v3352
  %v3385 = vsel %vm875, %v3356, %v3362
  %v3386 = vsel %vm875, %v3366, %v3372
  %v3387 = vsel %vm875, %v3376, %v3382
  %v3392 = vcombine.low %v3384, %v3385
  %v3393 = vcombine.low %v3386, %v3387
  %v3395 = vunpack.c.l.s4 1983009808
  %v3396 = vunpack.c.0.s8 %v3395
  %v3397 = vlaneseq
  %v3398 = vshrl.u32 %v3397, 7
  %v3399 = vsub.s32 %v3396, %v3398
  %v3400 = vrot.slane %v3392, %v3399
  %v3402 = vunpack.c.l.s4 1983009808
  %v3403 = vunpack.c.0.s8 %v3402
  %v3404 = vlaneseq
  %v3405 = vshrl.u32 %v3404, 7
  %v3406 = vsub.s32 %v3403, %v3405
  %v3407 = vrot.slane %v3393, %v3406
  %v3408 = vcombine.low %v3400, %v3407
  %3410 = vst [vmem:[%s8] sm:$0xff] %v3408
  %3411 = vst.msk [vmem:[%s1168 + $0x1] sm:$0xff] %vm32, %v3023
  %3412 = vst.msk [vmem:[%s1168 + $0x11] sm:$0xff] %vm32, %v3024
  %3413 = vst.msk [vmem:[%s1168 + $0x21] sm:$0xff] %vm32, %v3025
  %3414 = vst.msk [vmem:[%s1168 + $0x31] sm:$0xff] %vm32, %v3026
  %3415 = vst.msk [vmem:[%s1168 + $0x41] sm:$0xff] %vm32, %v3027
  %3416 = vst.msk [vmem:[%s1168 + $0x51] sm:$0xff] %vm32, %v3028
  %3417 = vst.msk [vmem:[%s1168 + $0x61] sm:$0xff] %vm32, %v3029
  %3418 = vst.msk [vmem:[%s1168 + $0x71] sm:$0xff] %vm32, %v3030
  %3419 = vst.msk [vmem:[%s1168 + $0xa1] sm:$0xff] %vm32, %v3031
  %3420 = vst.msk [vmem:[%s1168 + $0xb1] sm:$0xff] %vm32, %v3032
  %3421 = vst.msk [vmem:[%s1168 + $0xc1] sm:$0xff] %vm32, %v3033
  %3422 = vst.msk [vmem:[%s1168 + $0xd1] sm:$0xff] %vm32, %v3034
  %3423 = vst.msk [vmem:[%s1168 + $0xe1] sm:$0xff] %vm32, %v3035
  %3424 = vst.msk [vmem:[%s1168 + $0xf1] sm:$0xff] %vm32, %v3036
  %3425 = vst.msk [vmem:[%s1168 + $0x101] sm:$0xff] %vm32, %v3037
  %3426 = vst.msk [vmem:[%s1168 + $0x111] sm:$0xff] %vm32, %v3038
  %v3427 = vld [vmem:[#allocation2] sm:$0xff]
  %v3428 = vld [vmem:[#allocation2 + $0x8] sm:$0x3]
  %v3429 = vld [vmem:[#allocation2 + $0x10] sm:$0xff]
  %v3430 = vld [vmem:[#allocation2 + $0x18] sm:$0x3]
  %v3431 = vld [vmem:[#allocation2 + $0x20] sm:$0xff]
  %v3432 = vld [vmem:[#allocation2 + $0x28] sm:$0x3]
  %v3433 = vld [vmem:[#allocation2 + $0x30] sm:$0xff]
  %v3434 = vld [vmem:[#allocation2 + $0x38] sm:$0x3]
  %v3435 = vld [vmem:[#allocation2 + $0x40] sm:$0xff]
  %v3436 = vld [vmem:[#allocation2 + $0x48] sm:$0x3]
  %v3437 = vld [vmem:[#allocation2 + $0x50] sm:$0xff]
  %v3438 = vld [vmem:[#allocation2 + $0x58] sm:$0x3]
  %v3439 = vld [vmem:[#allocation2 + $0x60] sm:$0xff]
  %v3440 = vld [vmem:[#allocation2 + $0x68] sm:$0x3]
  %v3441 = vld [vmem:[#allocation2 + $0x70] sm:$0xff]
  %v3442 = vld [vmem:[#allocation2 + $0x78] sm:$0x3]
  %v3443 = vld [vmem:[#allocation2 + $0x80] sm:$0xff]
  %v3444 = vld [vmem:[#allocation2 + $0x88] sm:$0x3]
  %v3445 = vld [vmem:[#allocation2 + $0x90] sm:$0xff]
  %v3446 = vld [vmem:[#allocation2 + $0x98] sm:$0x3]
  %v3447 = vld [vmem:[#allocation2 + $0xa0] sm:$0xff]
  %v3448 = vld [vmem:[#allocation2 + $0xa8] sm:$0x3]
  %v3449 = vld [vmem:[#allocation2 + $0xb0] sm:$0xff]
  %v3450 = vld [vmem:[#allocation2 + $0xb8] sm:$0x3]
  %v3451 = vld [vmem:[#allocation2 + $0xc0] sm:$0xff]
  %v3452 = vld [vmem:[#allocation2 + $0xc8] sm:$0x3]
  %v3453 = vld [vmem:[#allocation2 + $0xd0] sm:$0xff]
  %v3454 = vld [vmem:[#allocation2 + $0xd8] sm:$0x3]
  %v3455 = vld [vmem:[#allocation2 + $0xe0] sm:$0xff]
  %v3456 = vld [vmem:[#allocation2 + $0xe8] sm:$0x3]
  %v3457 = vld [vmem:[#allocation2 + $0xf0] sm:$0xff]
  %v3458 = vld [vmem:[#allocation2 + $0xf8] sm:$0x3]
  %v3459 = vld [vmem:[#allocation2 + $0x100] sm:$0xff]
  %v3460 = vld [vmem:[#allocation2 + $0x108] sm:$0x3]
  %v3461 = vld [vmem:[#allocation2 + $0x110] sm:$0xff]
  %v3462 = vld [vmem:[#allocation2 + $0x118] sm:$0x3]
  %v3463 = vld [vmem:[#allocation2 + $0x120] sm:$0xff]
  %v3464 = vld [vmem:[#allocation2 + $0x128] sm:$0x3]
  %v3465 = vld [vmem:[#allocation2 + $0x130] sm:$0xff]
  %v3466 = vld [vmem:[#allocation2 + $0x138] sm:$0x3]
  %v3499 = vrot.slane %v3427, 1
  %v3500 = vrot.slane %v3428, 1
  %v3501 = vsel %vm191, %v3499, %v3500
  %v3502 = vrot.slane %v3429, 1
  %v3503 = vrot.slane %v3430, 1
  %v3504 = vsel %vm191, %v3502, %v3503
  %v3505 = vrot.slane %v3431, 1
  %v3506 = vrot.slane %v3432, 1
  %v3507 = vsel %vm191, %v3505, %v3506
  %v3508 = vrot.slane %v3433, 1
  %v3509 = vrot.slane %v3434, 1
  %v3510 = vsel %vm191, %v3508, %v3509
  %v3511 = vrot.slane %v3435, 1
  %v3512 = vrot.slane %v3436, 1
  %v3513 = vsel %vm191, %v3511, %v3512
  %v3514 = vrot.slane %v3437, 1
  %v3515 = vrot.slane %v3438, 1
  %v3516 = vsel %vm191, %v3514, %v3515
  %v3517 = vrot.slane %v3439, 1
  %v3518 = vrot.slane %v3440, 1
  %v3519 = vsel %vm191, %v3517, %v3518
  %v3520 = vrot.slane %v3441, 1
  %v3521 = vrot.slane %v3442, 1
  %v3522 = vsel %vm191, %v3520, %v3521
  %v3523 = vrot.slane %v3447, 1
  %v3524 = vrot.slane %v3448, 1
  %v3525 = vsel %vm191, %v3523, %v3524
  %v3526 = vrot.slane %v3449, 1
  %v3527 = vrot.slane %v3450, 1
  %v3528 = vsel %vm191, %v3526, %v3527
  %v3529 = vrot.slane %v3451, 1
  %v3530 = vrot.slane %v3452, 1
  %v3531 = vsel %vm191, %v3529, %v3530
  %v3532 = vrot.slane %v3453, 1
  %v3533 = vrot.slane %v3454, 1
  %v3534 = vsel %vm191, %v3532, %v3533
  %v3535 = vrot.slane %v3455, 1
  %v3536 = vrot.slane %v3456, 1
  %v3537 = vsel %vm191, %v3535, %v3536
  %v3538 = vrot.slane %v3457, 1
  %v3539 = vrot.slane %v3458, 1
  %v3540 = vsel %vm191, %v3538, %v3539
  %v3541 = vrot.slane %v3459, 1
  %v3542 = vrot.slane %v3460, 1
  %v3543 = vsel %vm191, %v3541, %v3542
  %v3544 = vrot.slane %v3461, 1
  %v3545 = vrot.slane %v3462, 1
  %v3546 = vsel %vm191, %v3544, %v3545
  %v3547 = vrot.slane %v3427, 2
  %v3548 = vrot.slane %v3428, 2
  %v3549 = vsel %vm240, %v3547, %v3548
  %v3550 = vrot.slane %v3429, 2
  %v3551 = vrot.slane %v3430, 2
  %v3552 = vsel %vm240, %v3550, %v3551
  %v3553 = vrot.slane %v3431, 2
  %v3554 = vrot.slane %v3432, 2
  %v3555 = vsel %vm240, %v3553, %v3554
  %v3556 = vrot.slane %v3433, 2
  %v3557 = vrot.slane %v3434, 2
  %v3558 = vsel %vm240, %v3556, %v3557
  %v3559 = vrot.slane %v3435, 2
  %v3560 = vrot.slane %v3436, 2
  %v3561 = vsel %vm240, %v3559, %v3560
  %v3562 = vrot.slane %v3437, 2
  %v3563 = vrot.slane %v3438, 2
  %v3564 = vsel %vm240, %v3562, %v3563
  %v3565 = vrot.slane %v3439, 2
  %v3566 = vrot.slane %v3440, 2
  %v3567 = vsel %vm240, %v3565, %v3566
  %v3568 = vrot.slane %v3441, 2
  %v3569 = vrot.slane %v3442, 2
  %v3570 = vsel %vm240, %v3568, %v3569
  %v3571 = vrot.slane %v3447, 2
  %v3572 = vrot.slane %v3448, 2
  %v3573 = vsel %vm240, %v3571, %v3572
  %v3574 = vrot.slane %v3449, 2
  %v3575 = vrot.slane %v3450, 2
  %v3576 = vsel %vm240, %v3574, %v3575
  %v3577 = vrot.slane %v3451, 2
  %v3578 = vrot.slane %v3452, 2
  %v3579 = vsel %vm240, %v3577, %v3578
  %v3580 = vrot.slane %v3453, 2
  %v3581 = vrot.slane %v3454, 2
  %v3582 = vsel %vm240, %v3580, %v3581
  %v3583 = vrot.slane %v3455, 2
  %v3584 = vrot.slane %v3456, 2
  %v3585 = vsel %vm240, %v3583, %v3584
  %v3586 = vrot.slane %v3457, 2
  %v3587 = vrot.slane %v3458, 2
  %v3588 = vsel %vm240, %v3586, %v3587
  %v3589 = vrot.slane %v3459, 2
  %v3590 = vrot.slane %v3460, 2
  %v3591 = vsel %vm240, %v3589, %v3590
  %v3592 = vrot.slane %v3461, 2
  %v3593 = vrot.slane %v3462, 2
  %v3594 = vsel %vm240, %v3592, %v3593
  %v3599 = vrot.slane %v3443, 1
  %v3600 = vrot.slane %v3444, 1
  %v3601 = vsel %vm191, %v3599, %v3600
  %v3602 = vrot.slane %v3463, 1
  %v3603 = vrot.slane %v3464, 1
  %v3604 = vsel %vm191, %v3602, %v3603
  %v3605 = vrot.slane %v3443, 2
  %v3606 = vrot.slane %v3444, 2
  %v3607 = vsel %vm240, %v3605, %v3606
  %v3608 = vrot.slane %v3463, 2
  %v3609 = vrot.slane %v3464, 2
  %v3610 = vsel %vm240, %v3608, %v3609
  %v3615 = vrot.slane %v3445, 1
  %v3616 = vrot.slane %v3446, 1
  %v3617 = vsel %vm191, %v3615, %v3616
  %v3618 = vrot.slane %v3465, 1
  %v3619 = vrot.slane %v3466, 1
  %v3620 = vsel %vm191, %v3618, %v3619
  %v3621 = vrot.slane %v3445, 2
  %v3622 = vrot.slane %v3446, 2
  %v3623 = vsel %vm240, %v3621, %v3622
  %v3624 = vrot.slane %v3465, 2
  %v3625 = vrot.slane %v3466, 2
  %v3626 = vsel %vm240, %v3624, %v3625
  %3627 = vrot.lane.b32.xlu0 %v3501, 8
  %v3628 = vpop.permute.xlu0 %3627
  %3629 = vrot.lane.b32.xlu0 %v3504, 8
  %v3630 = vpop.permute.xlu0 %3629
  %3631 = vrot.lane.b32.xlu0 %v3507, 8
  %v3632 = vpop.permute.xlu0 %3631
  %3633 = vrot.lane.b32.xlu0 %v3510, 8
  %v3634 = vpop.permute.xlu0 %3633
  %3635 = vrot.lane.b32.xlu0 %v3513, 8
  %v3636 = vpop.permute.xlu0 %3635
  %3637 = vrot.lane.b32.xlu0 %v3516, 8
  %v3638 = vpop.permute.xlu0 %3637
  %3639 = vrot.lane.b32.xlu0 %v3519, 8
  %v3640 = vpop.permute.xlu0 %3639
  %3641 = vrot.lane.b32.xlu0 %v3522, 8
  %v3642 = vpop.permute.xlu0 %3641
  %3643 = vrot.lane.b32.xlu0 %v3525, 8
  %v3644 = vpop.permute.xlu0 %3643
  %3645 = vrot.lane.b32.xlu0 %v3528, 8
  %v3646 = vpop.permute.xlu0 %3645
  %3647 = vrot.lane.b32.xlu0 %v3531, 8
  %v3648 = vpop.permute.xlu0 %3647
  %3649 = vrot.lane.b32.xlu0 %v3534, 8
  %v3650 = vpop.permute.xlu0 %3649
  %3651 = vrot.lane.b32.xlu0 %v3537, 8
  %v3652 = vpop.permute.xlu0 %3651
  %3653 = vrot.lane.b32.xlu0 %v3540, 8
  %v3654 = vpop.permute.xlu0 %3653
  %3655 = vrot.lane.b32.xlu0 %v3543, 8
  %v3656 = vpop.permute.xlu0 %3655
  %3657 = vrot.lane.b32.xlu0 %v3546, 8
  %v3658 = vpop.permute.xlu0 %3657
  %3675 = vrot.lane.b32.xlu0 %v3549, 16
  %v3676 = vpop.permute.xlu0 %3675
  %3677 = vrot.lane.b32.xlu0 %v3552, 16
  %v3678 = vpop.permute.xlu0 %3677
  %3679 = vrot.lane.b32.xlu0 %v3555, 16
  %v3680 = vpop.permute.xlu0 %3679
  %3681 = vrot.lane.b32.xlu0 %v3558, 16
  %v3682 = vpop.permute.xlu0 %3681
  %3683 = vrot.lane.b32.xlu0 %v3561, 16
  %v3684 = vpop.permute.xlu0 %3683
  %3685 = vrot.lane.b32.xlu0 %v3564, 16
  %v3686 = vpop.permute.xlu0 %3685
  %3687 = vrot.lane.b32.xlu0 %v3567, 16
  %v3688 = vpop.permute.xlu0 %3687
  %3689 = vrot.lane.b32.xlu0 %v3570, 16
  %v3690 = vpop.permute.xlu0 %3689
  %3691 = vrot.lane.b32.xlu0 %v3573, 16
  %v3692 = vpop.permute.xlu0 %3691
  %3693 = vrot.lane.b32.xlu0 %v3576, 16
  %v3694 = vpop.permute.xlu0 %3693
  %3695 = vrot.lane.b32.xlu0 %v3579, 16
  %v3696 = vpop.permute.xlu0 %3695
  %3697 = vrot.lane.b32.xlu0 %v3582, 16
  %v3698 = vpop.permute.xlu0 %3697
  %3699 = vrot.lane.b32.xlu0 %v3585, 16
  %v3700 = vpop.permute.xlu0 %3699
  %3701 = vrot.lane.b32.xlu0 %v3588, 16
  %v3702 = vpop.permute.xlu0 %3701
  %3703 = vrot.lane.b32.xlu0 %v3591, 16
  %v3704 = vpop.permute.xlu0 %3703
  %3705 = vrot.lane.b32.xlu0 %v3594, 16
  %v3706 = vpop.permute.xlu0 %3705
  %3723 = vrot.lane.b32.xlu0 %v3429, 24
  %v3724 = vpop.permute.xlu0 %3723
  %3725 = vrot.lane.b32.xlu0 %v3431, 24
  %v3726 = vpop.permute.xlu0 %3725
  %3727 = vrot.lane.b32.xlu0 %v3433, 24
  %v3728 = vpop.permute.xlu0 %3727
  %3729 = vrot.lane.b32.xlu0 %v3435, 24
  %v3730 = vpop.permute.xlu0 %3729
  %3731 = vrot.lane.b32.xlu0 %v3437, 24
  %v3732 = vpop.permute.xlu0 %3731
  %3733 = vrot.lane.b32.xlu0 %v3439, 24
  %v3734 = vpop.permute.xlu0 %3733
  %3735 = vrot.lane.b32.xlu0 %v3441, 24
  %v3736 = vpop.permute.xlu0 %3735
  %3737 = vrot.lane.b32.xlu0 %v3443, 24
  %v3738 = vpop.permute.xlu0 %3737
  %3739 = vrot.lane.b32.xlu0 %v3449, 24
  %v3740 = vpop.permute.xlu0 %3739
  %3741 = vrot.lane.b32.xlu0 %v3451, 24
  %v3742 = vpop.permute.xlu0 %3741
  %3743 = vrot.lane.b32.xlu0 %v3453, 24
  %v3744 = vpop.permute.xlu0 %3743
  %3745 = vrot.lane.b32.xlu0 %v3455, 24
  %v3746 = vpop.permute.xlu0 %3745
  %3747 = vrot.lane.b32.xlu0 %v3457, 24
  %v3748 = vpop.permute.xlu0 %3747
  %3749 = vrot.lane.b32.xlu0 %v3459, 24
  %v3750 = vpop.permute.xlu0 %3749
  %3751 = vrot.lane.b32.xlu0 %v3461, 24
  %v3752 = vpop.permute.xlu0 %3751
  %3753 = vrot.lane.b32.xlu0 %v3463, 24
  %v3754 = vpop.permute.xlu0 %3753
  %3771 = vrot.lane.b32.xlu0 %v3504, 32
  %v3772 = vpop.permute.xlu0 %3771
  %3773 = vrot.lane.b32.xlu0 %v3507, 32
  %v3774 = vpop.permute.xlu0 %3773
  %3775 = vrot.lane.b32.xlu0 %v3510, 32
  %v3776 = vpop.permute.xlu0 %3775
  %3777 = vrot.lane.b32.xlu0 %v3513, 32
  %v3778 = vpop.permute.xlu0 %3777
  %3779 = vrot.lane.b32.xlu0 %v3516, 32
  %v3780 = vpop.permute.xlu0 %3779
  %3781 = vrot.lane.b32.xlu0 %v3519, 32
  %v3782 = vpop.permute.xlu0 %3781
  %3783 = vrot.lane.b32.xlu0 %v3522, 32
  %v3784 = vpop.permute.xlu0 %3783
  %3785 = vrot.lane.b32.xlu0 %v3601, 32
  %v3786 = vpop.permute.xlu0 %3785
  %3787 = vrot.lane.b32.xlu0 %v3528, 32
  %v3788 = vpop.permute.xlu0 %3787
  %3789 = vrot.lane.b32.xlu0 %v3531, 32
  %v3790 = vpop.permute.xlu0 %3789
  %3791 = vrot.lane.b32.xlu0 %v3534, 32
  %v3792 = vpop.permute.xlu0 %3791
  %3793 = vrot.lane.b32.xlu0 %v3537, 32
  %v3794 = vpop.permute.xlu0 %3793
  %3795 = vrot.lane.b32.xlu0 %v3540, 32
  %v3796 = vpop.permute.xlu0 %3795
  %3797 = vrot.lane.b32.xlu0 %v3543, 32
  %v3798 = vpop.permute.xlu0 %3797
  %3799 = vrot.lane.b32.xlu0 %v3546, 32
  %v3800 = vpop.permute.xlu0 %3799
  %3801 = vrot.lane.b32.xlu0 %v3604, 32
  %v3802 = vpop.permute.xlu0 %3801
  %3819 = vrot.lane.b32.xlu0 %v3552, 40
  %v3820 = vpop.permute.xlu0 %3819
  %3821 = vrot.lane.b32.xlu0 %v3555, 40
  %v3822 = vpop.permute.xlu0 %3821
  %3823 = vrot.lane.b32.xlu0 %v3558, 40
  %v3824 = vpop.permute.xlu0 %3823
  %3825 = vrot.lane.b32.xlu0 %v3561, 40
  %v3826 = vpop.permute.xlu0 %3825
  %3827 = vrot.lane.b32.xlu0 %v3564, 40
  %v3828 = vpop.permute.xlu0 %3827
  %3829 = vrot.lane.b32.xlu0 %v3567, 40
  %v3830 = vpop.permute.xlu0 %3829
  %3831 = vrot.lane.b32.xlu0 %v3570, 40
  %v3832 = vpop.permute.xlu0 %3831
  %3833 = vrot.lane.b32.xlu0 %v3607, 40
  %v3834 = vpop.permute.xlu0 %3833
  %3835 = vrot.lane.b32.xlu0 %v3576, 40
  %v3836 = vpop.permute.xlu0 %3835
  %3837 = vrot.lane.b32.xlu0 %v3579, 40
  %v3838 = vpop.permute.xlu0 %3837
  %3839 = vrot.lane.b32.xlu0 %v3582, 40
  %v3840 = vpop.permute.xlu0 %3839
  %3841 = vrot.lane.b32.xlu0 %v3585, 40
  %v3842 = vpop.permute.xlu0 %3841
  %3843 = vrot.lane.b32.xlu0 %v3588, 40
  %v3844 = vpop.permute.xlu0 %3843
  %3845 = vrot.lane.b32.xlu0 %v3591, 40
  %v3846 = vpop.permute.xlu0 %3845
  %3847 = vrot.lane.b32.xlu0 %v3594, 40
  %v3848 = vpop.permute.xlu0 %3847
  %3849 = vrot.lane.b32.xlu0 %v3610, 40
  %v3850 = vpop.permute.xlu0 %3849
  %3867 = vrot.lane.b32.xlu0 %v3431, 48
  %v3868 = vpop.permute.xlu0 %3867
  %3869 = vrot.lane.b32.xlu0 %v3433, 48
  %v3870 = vpop.permute.xlu0 %3869
  %3871 = vrot.lane.b32.xlu0 %v3435, 48
  %v3872 = vpop.permute.xlu0 %3871
  %3873 = vrot.lane.b32.xlu0 %v3437, 48
  %v3874 = vpop.permute.xlu0 %3873
  %3875 = vrot.lane.b32.xlu0 %v3439, 48
  %v3876 = vpop.permute.xlu0 %3875
  %3877 = vrot.lane.b32.xlu0 %v3441, 48
  %v3878 = vpop.permute.xlu0 %3877
  %3879 = vrot.lane.b32.xlu0 %v3443, 48
  %v3880 = vpop.permute.xlu0 %3879
  %3881 = vrot.lane.b32.xlu0 %v3445, 48
  %v3882 = vpop.permute.xlu0 %3881
  %3883 = vrot.lane.b32.xlu0 %v3451, 48
  %v3884 = vpop.permute.xlu0 %3883
  %3885 = vrot.lane.b32.xlu0 %v3453, 48
  %v3886 = vpop.permute.xlu0 %3885
  %3887 = vrot.lane.b32.xlu0 %v3455, 48
  %v3888 = vpop.permute.xlu0 %3887
  %3889 = vrot.lane.b32.xlu0 %v3457, 48
  %v3890 = vpop.permute.xlu0 %3889
  %3891 = vrot.lane.b32.xlu0 %v3459, 48
  %v3892 = vpop.permute.xlu0 %3891
  %3893 = vrot.lane.b32.xlu0 %v3461, 48
  %v3894 = vpop.permute.xlu0 %3893
  %3895 = vrot.lane.b32.xlu0 %v3463, 48
  %v3896 = vpop.permute.xlu0 %3895
  %3897 = vrot.lane.b32.xlu0 %v3465, 48
  %v3898 = vpop.permute.xlu0 %3897
  %3915 = vrot.lane.b32.xlu0 %v3507, 56
  %v3916 = vpop.permute.xlu0 %3915
  %3917 = vrot.lane.b32.xlu0 %v3510, 56
  %v3918 = vpop.permute.xlu0 %3917
  %3919 = vrot.lane.b32.xlu0 %v3513, 56
  %v3920 = vpop.permute.xlu0 %3919
  %3921 = vrot.lane.b32.xlu0 %v3516, 56
  %v3922 = vpop.permute.xlu0 %3921
  %3923 = vrot.lane.b32.xlu0 %v3519, 56
  %v3924 = vpop.permute.xlu0 %3923
  %3925 = vrot.lane.b32.xlu0 %v3522, 56
  %v3926 = vpop.permute.xlu0 %3925
  %3927 = vrot.lane.b32.xlu0 %v3601, 56
  %v3928 = vpop.permute.xlu0 %3927
  %3929 = vrot.lane.b32.xlu0 %v3617, 56
  %v3930 = vpop.permute.xlu0 %3929
  %3931 = vrot.lane.b32.xlu0 %v3531, 56
  %v3932 = vpop.permute.xlu0 %3931
  %3933 = vrot.lane.b32.xlu0 %v3534, 56
  %v3934 = vpop.permute.xlu0 %3933
  %3935 = vrot.lane.b32.xlu0 %v3537, 56
  %v3936 = vpop.permute.xlu0 %3935
  %3937 = vrot.lane.b32.xlu0 %v3540, 56
  %v3938 = vpop.permute.xlu0 %3937
  %3939 = vrot.lane.b32.xlu0 %v3543, 56
  %v3940 = vpop.permute.xlu0 %3939
  %3941 = vrot.lane.b32.xlu0 %v3546, 56
  %v3942 = vpop.permute.xlu0 %3941
  %3943 = vrot.lane.b32.xlu0 %v3604, 56
  %v3944 = vpop.permute.xlu0 %3943
  %3945 = vrot.lane.b32.xlu0 %v3620, 56
  %v3946 = vpop.permute.xlu0 %3945
  %3963 = vrot.lane.b32.xlu0 %v3555, 64
  %v3964 = vpop.permute.xlu0 %3963
  %3965 = vrot.lane.b32.xlu0 %v3558, 64
  %v3966 = vpop.permute.xlu0 %3965
  %3967 = vrot.lane.b32.xlu0 %v3561, 64
  %v3968 = vpop.permute.xlu0 %3967
  %3969 = vrot.lane.b32.xlu0 %v3564, 64
  %v3970 = vpop.permute.xlu0 %3969
  %3971 = vrot.lane.b32.xlu0 %v3567, 64
  %v3972 = vpop.permute.xlu0 %3971
  %3973 = vrot.lane.b32.xlu0 %v3570, 64
  %v3974 = vpop.permute.xlu0 %3973
  %3975 = vrot.lane.b32.xlu0 %v3607, 64
  %v3976 = vpop.permute.xlu0 %3975
  %3977 = vrot.lane.b32.xlu0 %v3623, 64
  %v3978 = vpop.permute.xlu0 %3977
  %3979 = vrot.lane.b32.xlu0 %v3579, 64
  %v3980 = vpop.permute.xlu0 %3979
  %3981 = vrot.lane.b32.xlu0 %v3582, 64
  %v3982 = vpop.permute.xlu0 %3981
  %3983 = vrot.lane.b32.xlu0 %v3585, 64
  %v3984 = vpop.permute.xlu0 %3983
  %3985 = vrot.lane.b32.xlu0 %v3588, 64
  %v3986 = vpop.permute.xlu0 %3985
  %3987 = vrot.lane.b32.xlu0 %v3591, 64
  %v3988 = vpop.permute.xlu0 %3987
  %3989 = vrot.lane.b32.xlu0 %v3594, 64
  %v3990 = vpop.permute.xlu0 %3989
  %3991 = vrot.lane.b32.xlu0 %v3610, 64
  %v3992 = vpop.permute.xlu0 %3991
  %3993 = vrot.lane.b32.xlu0 %v3626, 64
  %v3994 = vpop.permute.xlu0 %3993
  %v4011 = vsel %vm32, %v3427, %v3628
  %v4012 = vsel %vm32, %v3429, %v3630
  %v4013 = vsel %vm32, %v3431, %v3632
  %v4014 = vsel %vm32, %v3433, %v3634
  %v4015 = vsel %vm32, %v3435, %v3636
  %v4016 = vsel %vm32, %v3437, %v3638
  %v4017 = vsel %vm32, %v3439, %v3640
  %v4018 = vsel %vm32, %v3441, %v3642
  %v4019 = vsel %vm32, %v3447, %v3644
  %v4020 = vsel %vm32, %v3449, %v3646
  %v4021 = vsel %vm32, %v3451, %v3648
  %v4022 = vsel %vm32, %v3453, %v3650
  %v4023 = vsel %vm32, %v3455, %v3652
  %v4024 = vsel %vm32, %v3457, %v3654
  %v4025 = vsel %vm32, %v3459, %v3656
  %v4026 = vsel %vm32, %v3461, %v3658
  %v4027 = vsel %vm824, %v4011, %v3676
  %v4028 = vsel %vm824, %v4012, %v3678
  %v4029 = vsel %vm824, %v4013, %v3680
  %v4030 = vsel %vm824, %v4014, %v3682
  %v4031 = vsel %vm824, %v4015, %v3684
  %v4032 = vsel %vm824, %v4016, %v3686
  %v4033 = vsel %vm824, %v4017, %v3688
  %v4034 = vsel %vm824, %v4018, %v3690
  %v4035 = vsel %vm824, %v4019, %v3692
  %v4036 = vsel %vm824, %v4020, %v3694
  %v4037 = vsel %vm824, %v4021, %v3696
  %v4038 = vsel %vm824, %v4022, %v3698
  %v4039 = vsel %vm824, %v4023, %v3700
  %v4040 = vsel %vm824, %v4024, %v3702
  %v4041 = vsel %vm824, %v4025, %v3704
  %v4042 = vsel %vm824, %v4026, %v3706
  %v4043 = vsel %vm1801, %v4027, %v3724
  %v4044 = vsel %vm1801, %v4028, %v3726
  %v4045 = vsel %vm1801, %v4029, %v3728
  %v4046 = vsel %vm1801, %v4030, %v3730
  %v4047 = vsel %vm1801, %v4031, %v3732
  %v4048 = vsel %vm1801, %v4032, %v3734
  %v4049 = vsel %vm1801, %v4033, %v3736
  %v4050 = vsel %vm1801, %v4034, %v3738
  %v4051 = vsel %vm1801, %v4035, %v3740
  %v4052 = vsel %vm1801, %v4036, %v3742
  %v4053 = vsel %vm1801, %v4037, %v3744
  %v4054 = vsel %vm1801, %v4038, %v3746
  %v4055 = vsel %vm1801, %v4039, %v3748
  %v4056 = vsel %vm1801, %v4040, %v3750
  %v4057 = vsel %vm1801, %v4041, %v3752
  %v4058 = vsel %vm1801, %v4042, %v3754
  %v4059 = vsel %vm841, %v4043, %v3772
  %v4060 = vsel %vm841, %v4044, %v3774
  %v4061 = vsel %vm841, %v4045, %v3776
  %v4062 = vsel %vm841, %v4046, %v3778
  %v4063 = vsel %vm841, %v4047, %v3780
  %v4064 = vsel %vm841, %v4048, %v3782
  %v4065 = vsel %vm841, %v4049, %v3784
  %v4066 = vsel %vm841, %v4050, %v3786
  %v4067 = vsel %vm841, %v4051, %v3788
  %v4068 = vsel %vm841, %v4052, %v3790
  %v4069 = vsel %vm841, %v4053, %v3792
  %v4070 = vsel %vm841, %v4054, %v3794
  %v4071 = vsel %vm841, %v4055, %v3796
  %v4072 = vsel %vm841, %v4056, %v3798
  %v4073 = vsel %vm841, %v4057, %v3800
  %v4074 = vsel %vm841, %v4058, %v3802
  %v4075 = vsel %vm1834, %v4059, %v3820
  %v4076 = vsel %vm1834, %v4060, %v3822
  %v4077 = vsel %vm1834, %v4061, %v3824
  %v4078 = vsel %vm1834, %v4062, %v3826
  %v4079 = vsel %vm1834, %v4063, %v3828
  %v4080 = vsel %vm1834, %v4064, %v3830
  %v4081 = vsel %vm1834, %v4065, %v3832
  %v4082 = vsel %vm1834, %v4066, %v3834
  %v4083 = vsel %vm1834, %v4067, %v3836
  %v4084 = vsel %vm1834, %v4068, %v3838
  %v4085 = vsel %vm1834, %v4069, %v3840
  %v4086 = vsel %vm1834, %v4070, %v3842
  %v4087 = vsel %vm1834, %v4071, %v3844
  %v4088 = vsel %vm1834, %v4072, %v3846
  %v4089 = vsel %vm1834, %v4073, %v3848
  %v4090 = vsel %vm1834, %v4074, %v3850
  %v4091 = vsel %vm858, %v4075, %v3868
  %v4092 = vsel %vm858, %v4076, %v3870
  %v4093 = vsel %vm858, %v4077, %v3872
  %v4094 = vsel %vm858, %v4078, %v3874
  %v4095 = vsel %vm858, %v4079, %v3876
  %v4096 = vsel %vm858, %v4080, %v3878
  %v4097 = vsel %vm858, %v4081, %v3880
  %v4098 = vsel %vm858, %v4082, %v3882
  %v4099 = vsel %vm858, %v4083, %v3884
  %v4100 = vsel %vm858, %v4084, %v3886
  %v4101 = vsel %vm858, %v4085, %v3888
  %v4102 = vsel %vm858, %v4086, %v3890
  %v4103 = vsel %vm858, %v4087, %v3892
  %v4104 = vsel %vm858, %v4088, %v3894
  %v4105 = vsel %vm858, %v4089, %v3896
  %v4106 = vsel %vm858, %v4090, %v3898
  %v4107 = vsel %vm1867, %v4091, %v3916
  %v4108 = vsel %vm1867, %v4092, %v3918
  %v4109 = vsel %vm1867, %v4093, %v3920
  %v4110 = vsel %vm1867, %v4094, %v3922
  %v4111 = vsel %vm1867, %v4095, %v3924
  %v4112 = vsel %vm1867, %v4096, %v3926
  %v4113 = vsel %vm1867, %v4097, %v3928
  %v4114 = vsel %vm1867, %v4098, %v3930
  %v4115 = vsel %vm1867, %v4099, %v3932
  %v4116 = vsel %vm1867, %v4100, %v3934
  %v4117 = vsel %vm1867, %v4101, %v3936
  %v4118 = vsel %vm1867, %v4102, %v3938
  %v4119 = vsel %vm1867, %v4103, %v3940
  %v4120 = vsel %vm1867, %v4104, %v3942
  %v4121 = vsel %vm1867, %v4105, %v3944
  %v4122 = vsel %vm1867, %v4106, %v3946
  %v4123 = vsel %vm875, %v4107, %v3964
  %v4124 = vsel %vm875, %v4108, %v3966
  %v4125 = vsel %vm875, %v4109, %v3968
  %v4126 = vsel %vm875, %v4110, %v3970
  %v4127 = vsel %vm875, %v4111, %v3972
  %v4128 = vsel %vm875, %v4112, %v3974
  %v4129 = vsel %vm875, %v4113, %v3976
  %v4130 = vsel %vm875, %v4114, %v3978
  %v4131 = vsel %vm875, %v4115, %v3980
  %v4132 = vsel %vm875, %v4116, %v3982
  %v4133 = vsel %vm875, %v4117, %v3984
  %v4134 = vsel %vm875, %v4118, %v3986
  %v4135 = vsel %vm875, %v4119, %v3988
  %v4136 = vsel %vm875, %v4120, %v3990
  %v4137 = vsel %vm875, %v4121, %v3992
  %v4138 = vsel %vm875, %v4122, %v3994
  %v4139 = vsel %vm1900, %v4123, 0.0
  %v4140 = vsel %vm1900, %v4124, 0.0
  %v4141 = vsel %vm1900, %v4125, 0.0
  %v4142 = vsel %vm1900, %v4126, 0.0
  %v4143 = vsel %vm1900, %v4127, 0.0
  %v4144 = vsel %vm1900, %v4128, 0.0
  %v4145 = vsel %vm1900, %v4129, 0.0
  %v4146 = vsel %vm1900, %v4130, 0.0
  %v4147 = vsel %vm1900, %v4131, 0.0
  %v4148 = vsel %vm1900, %v4132, 0.0
  %v4149 = vsel %vm1900, %v4133, 0.0
  %v4150 = vsel %vm1900, %v4134, 0.0
  %v4151 = vsel %vm1900, %v4135, 0.0
  %v4152 = vsel %vm1900, %v4136, 0.0
  %v4153 = vsel %vm1900, %v4137, 0.0
  %v4154 = vsel %vm1900, %v4138, 0.0
  %v4155 = vld [vmem:[%s4] sm:$0xff]
  %v4156 = vld [vmem:[%s4 + $0x8] sm:$0xff]
  %v4157 = vld [vmem:[%s4 + $0x10] sm:$0xff]
  %v4158 = vld [vmem:[%s4 + $0x18] sm:$0xff]
  %v4159 = vld [vmem:[%s4 + $0x20] sm:$0xff]
  %v4160 = vld [vmem:[%s4 + $0x28] sm:$0xff]
  %v4161 = vld [vmem:[%s4 + $0x30] sm:$0xff]
  %v4162 = vld [vmem:[%s4 + $0x38] sm:$0xff]
  %v4163 = vld [vmem:[%s4 + $0x40] sm:$0xff]
  %v4164 = vld [vmem:[%s4 + $0x48] sm:$0xff]
  %v4165 = vld [vmem:[%s4 + $0x50] sm:$0xff]
  %v4166 = vld [vmem:[%s4 + $0x58] sm:$0xff]
  %v4167 = vld [vmem:[%s4 + $0x60] sm:$0xff]
  %v4168 = vld [vmem:[%s4 + $0x68] sm:$0xff]
  %v4169 = vld [vmem:[%s4 + $0x70] sm:$0xff]
  %v4170 = vld [vmem:[%s4 + $0x78] sm:$0xff]
  %v4171 = vlaneseq
  %v4172 = vshrl.u32 %v4171, 7
  %v4173 = vsub.s32 3, %v4172
  %v4174 = vrot.slane %v31, %v4173
  %4175 = vmatprep.subr.mxu0 0.0
  %4176 = vmatpush1.msra.mxu0 %v4155
  %4177 = vmatprep.subr.mxu0 0.0
  %4178 = vmatpush1.msra.mxu0 %v4156
  %4179 = vmatprep.subr.mxu0 0.0
  %4180 = vmatpush1.msra.mxu0 %v4157
  %4181 = vmatprep.subr.mxu0 0.0
  %4182 = vmatpush1.msra.mxu0 %v4158
  %4183 = vmatprep.subr.mxu0 0.0
  %4184 = vmatpush1.msra.mxu0 %v4159
  %4185 = vmatprep.subr.mxu0 0.0
  %4186 = vmatpush1.msra.mxu0 %v4160
  %4187 = vmatprep.subr.mxu0 0.0
  %4188 = vmatpush1.msra.mxu0 %v4161
  %4189 = vmatprep.subr.mxu0 0.0
  %4190 = vmatpush1.msra.mxu0 %v4162
  %4191 = vmatprep.subr.mxu0 0.0
  %4192 = vmatpush1.msra.mxu0 %v4163
  %4193 = vmatprep.subr.mxu0 0.0
  %4194 = vmatpush1.msra.mxu0 %v4164
  %4195 = vmatprep.subr.mxu0 0.0
  %4196 = vmatpush1.msra.mxu0 %v4165
  %4197 = vmatprep.subr.mxu0 0.0
  %4198 = vmatpush1.msra.mxu0 %v4166
  %4199 = vmatprep.subr.mxu0 0.0
  %4200 = vmatpush1.msra.mxu0 %v4167
  %4201 = vmatprep.subr.mxu0 0.0
  %4202 = vmatpush1.msra.mxu0 %v4168
  %4203 = vmatprep.subr.mxu0 0.0
  %4204 = vmatpush1.msra.mxu0 %v4169
  %4205 = vmatprep.subr.mxu0 0.0
  %4206 = vmatpush1.msra.mxu0 %v4170
  %4207 = vmatprep.subr.mxu0 0.0
  %4208 = vmatpush1.msra.mxu0 0.0
  %4209 = vmatprep.subr.mxu0 0.0
  %4210 = vmatpush1.msra.mxu0 0.0
  %4211 = vmatprep.subr.mxu0 0.0
  %4212 = vmatpush1.msra.mxu0 0.0
  %4213 = vmatprep.subr.mxu0 0.0
  %4214 = vmatpush1.msra.mxu0 0.0
  %4215 = vmatprep.subr.mxu0 0.0
  %4216 = vmatpush1.msra.mxu0 0.0
  %4217 = vmatprep.subr.mxu0 0.0
  %4218 = vmatpush1.msra.mxu0 0.0
  %4219 = vmatprep.subr.mxu0 0.0
  %4220 = vmatpush1.msra.mxu0 0.0
  %4221 = vmatprep.subr.mxu0 0.0
  %4222 = vmatpush1.msra.mxu0 0.0
  %4223 = vmatprep.subr.mxu0 0.0
  %4224 = vmatpush1.msra.mxu0 0.0
  %4225 = vmatprep.subr.mxu0 0.0
  %4226 = vmatpush1.msra.mxu0 0.0
  %4227 = vmatprep.subr.mxu0 0.0
  %4228 = vmatpush1.msra.mxu0 0.0
  %4229 = vmatprep.subr.mxu0 0.0
  %4230 = vmatpush1.msra.mxu0 0.0
  %4231 = vmatprep.subr.mxu0 0.0
  %4232 = vmatpush1.msra.mxu0 0.0
  %4233 = vmatprep.subr.mxu0 0.0
  %4234 = vmatpush1.msra.mxu0 0.0
  %4235 = vmatprep.subr.mxu0 0.0
  %4236 = vmatpush1.msra.mxu0 0.0
  %4237 = vmatprep.subr.mxu0 0.0
  %4238 = vmatpush1.msra.mxu0 0.0
  %4239 = vmatprep.mubr.f32.mxu0 0.0
  %4240 = vmatmul.mubr.f32.gmra.mrb[0].mxu0 %v4139
  %v4241 = vpop.f32.mrb[0].mxu0
  %v4242 = vadd.f32 %v4174, %v4241
  %v4243 = vpop.f32.mrb[0].mxu0
  %4244 = vmatprep.mubr.f32.mxu0 0.0
  %4245 = vmatmul.mubr.f32.gmra.mrb[0].mxu0 %v4140
  %v4246 = vpop.f32.mrb[0].mxu0
  %v4247 = vpop.f32.mrb[0].mxu0
  %4248 = vmatprep.mubr.f32.mxu0 0.0
  %4249 = vmatmul.mubr.f32.gmra.mrb[0].mxu0 %v4141
  %v4250 = vpop.f32.mrb[0].mxu0
  %v4251 = vadd.f32 %v4174, %v4250
  %v4252 = vpop.f32.mrb[0].mxu0
  %4253 = vmatprep.mubr.f32.mxu0 0.0
  %4254 = vmatmul.mubr.f32.gmra.mrb[0].mxu0 %v4142
  %v4255 = vpop.f32.mrb[0].mxu0
  %v4256 = vpop.f32.mrb[0].mxu0
  %4257 = vmatprep.mubr.f32.mxu0 0.0
  %4258 = vmatmul.mubr.f32.gmra.mrb[0].mxu0 %v4143
  %v4259 = vpop.f32.mrb[0].mxu0
  %v4260 = vadd.f32 %v4174, %v4259
  %v4261 = vpop.f32.mrb[0].mxu0
  %4262 = vmatprep.mubr.f32.mxu0 0.0
  %4263 = vmatmul.mubr.f32.gmra.mrb[0].mxu0 %v4144
  %v4264 = vpop.f32.mrb[0].mxu0
  %v4265 = vpop.f32.mrb[0].mxu0
  %4266 = vmatprep.mubr.f32.mxu0 0.0
  %4267 = vmatmul.mubr.f32.gmra.mrb[0].mxu0 %v4145
  %v4268 = vpop.f32.mrb[0].mxu0
  %v4269 = vadd.f32 %v4174, %v4268
  %v4270 = vpop.f32.mrb[0].mxu0
  %4271 = vmatprep.mubr.f32.mxu0 0.0
  %4272 = vmatmul.mubr.f32.gmra.mrb[0].mxu0 %v4146
  %v4273 = vpop.f32.mrb[0].mxu0
  %v4274 = vpop.f32.mrb[0].mxu0
  %4275 = vmatprep.mubr.f32.mxu0 0.0
  %4276 = vmatmul.mubr.f32.gmra.mrb[0].mxu0 %v4147
  %v4277 = vpop.f32.mrb[0].mxu0
  %v4278 = vadd.f32 %v4174, %v4277
  %v4279 = vpop.f32.mrb[0].mxu0
  %4280 = vmatprep.mubr.f32.mxu0 0.0
  %4281 = vmatmul.mubr.f32.gmra.mrb[0].mxu0 %v4148
  %v4282 = vpop.f32.mrb[0].mxu0
  %v4283 = vpop.f32.mrb[0].mxu0
  %4284 = vmatprep.mubr.f32.mxu0 0.0
  %4285 = vmatmul.mubr.f32.gmra.mrb[0].mxu0 %v4149
  %v4286 = vpop.f32.mrb[0].mxu0
  %v4287 = vadd.f32 %v4174, %v4286
  %v4288 = vpop.f32.mrb[0].mxu0
  %4289 = vmatprep.mubr.f32.mxu0 0.0
  %4290 = vmatmul.mubr.f32.gmra.mrb[0].mxu0 %v4150
  %v4291 = vpop.f32.mrb[0].mxu0
  %v4292 = vpop.f32.mrb[0].mxu0
  %4293 = vmatprep.mubr.f32.mxu0 0.0
  %4294 = vmatmul.mubr.f32.gmra.mrb[0].mxu0 %v4151
  %v4295 = vpop.f32.mrb[0].mxu0
  %v4296 = vadd.f32 %v4174, %v4295
  %v4297 = vpop.f32.mrb[0].mxu0
  %4298 = vmatprep.mubr.f32.mxu0 0.0
  %4299 = vmatmul.mubr.f32.gmra.mrb[0].mxu0 %v4152
  %v4300 = vpop.f32.mrb[0].mxu0
  %v4301 = vpop.f32.mrb[0].mxu0
  %4302 = vmatprep.mubr.f32.mxu0 0.0
  %4303 = vmatmul.mubr.f32.gmra.mrb[0].mxu0 %v4153
  %v4304 = vpop.f32.mrb[0].mxu0
  %v4305 = vadd.f32 %v4174, %v4304
  %v4306 = vpop.f32.mrb[0].mxu0
  %4307 = vmatprep.mubr.f32.mxu0 0.0
  %4308 = vmatmul.mubr.f32.gmra.mrb[0].mxu0 %v4154
  %v4309 = vpop.f32.mrb[0].mxu0
  %v4310 = vpop.f32.mrb[0].mxu0
  %4311 = vdwg.mxu0
  %v4320 = vcombine.high %v4242, %v4242
  %v4322 = vunpack.c.l.s4 1983009808
  %v4323 = vunpack.c.0.s8 %v4322
  %v4324 = vlaneseq
  %v4325 = vshrl.u32 %v4324, 7
  %v4326 = vsub.s32 %v4323, %v4325
  %v4327 = vrot.slane %v4242, %v4326
  %v4329 = vunpack.c.l.s4 1983009808
  %v4330 = vunpack.c.0.s8 %v4329
  %v4331 = vlaneseq
  %v4332 = vshrl.u32 %v4331, 7
  %v4333 = vsub.s32 %v4330, %v4332
  %v4334 = vrot.slane %v4320, %v4333
  %v4335 = vcombine.high %v4327, %v4327
  %v4336 = vcombine.high %v4334, %v4334
  %v4337 = vcombine.high %v4251, %v4251
  %v4339 = vunpack.c.l.s4 1983009808
  %v4340 = vunpack.c.0.s8 %v4339
  %v4341 = vlaneseq
  %v4342 = vshrl.u32 %v4341, 7
  %v4343 = vsub.s32 %v4340, %v4342
  %v4344 = vrot.slane %v4251, %v4343
  %v4346 = vunpack.c.l.s4 1983009808
  %v4347 = vunpack.c.0.s8 %v4346
  %v4348 = vlaneseq
  %v4349 = vshrl.u32 %v4348, 7
  %v4350 = vsub.s32 %v4347, %v4349
  %v4351 = vrot.slane %v4337, %v4350
  %v4352 = vcombine.high %v4344, %v4344
  %v4353 = vcombine.high %v4351, %v4351
  %v4354 = vcombine.high %v4260, %v4260
  %v4356 = vunpack.c.l.s4 1983009808
  %v4357 = vunpack.c.0.s8 %v4356
  %v4358 = vlaneseq
  %v4359 = vshrl.u32 %v4358, 7
  %v4360 = vsub.s32 %v4357, %v4359
  %v4361 = vrot.slane %v4260, %v4360
  %v4363 = vunpack.c.l.s4 1983009808
  %v4364 = vunpack.c.0.s8 %v4363
  %v4365 = vlaneseq
  %v4366 = vshrl.u32 %v4365, 7
  %v4367 = vsub.s32 %v4364, %v4366
  %v4368 = vrot.slane %v4354, %v4367
  %v4369 = vcombine.high %v4361, %v4361
  %v4370 = vcombine.high %v4368, %v4368
  %v4371 = vcombine.high %v4269, %v4269
  %v4373 = vunpack.c.l.s4 1983009808
  %v4374 = vunpack.c.0.s8 %v4373
  %v4375 = vlaneseq
  %v4376 = vshrl.u32 %v4375, 7
  %v4377 = vsub.s32 %v4374, %v4376
  %v4378 = vrot.slane %v4269, %v4377
  %v4380 = vunpack.c.l.s4 1983009808
  %v4381 = vunpack.c.0.s8 %v4380
  %v4382 = vlaneseq
  %v4383 = vshrl.u32 %v4382, 7
  %v4384 = vsub.s32 %v4381, %v4383
  %v4385 = vrot.slane %v4371, %v4384
  %v4386 = vcombine.high %v4378, %v4378
  %v4387 = vcombine.high %v4385, %v4385
  %v4388 = vcombine.high %v4278, %v4278
  %v4390 = vunpack.c.l.s4 1983009808
  %v4391 = vunpack.c.0.s8 %v4390
  %v4392 = vlaneseq
  %v4393 = vshrl.u32 %v4392, 7
  %v4394 = vsub.s32 %v4391, %v4393
  %v4395 = vrot.slane %v4278, %v4394
  %v4397 = vunpack.c.l.s4 1983009808
  %v4398 = vunpack.c.0.s8 %v4397
  %v4399 = vlaneseq
  %v4400 = vshrl.u32 %v4399, 7
  %v4401 = vsub.s32 %v4398, %v4400
  %v4402 = vrot.slane %v4388, %v4401
  %v4403 = vcombine.high %v4395, %v4395
  %v4404 = vcombine.high %v4402, %v4402
  %v4405 = vcombine.high %v4287, %v4287
  %v4407 = vunpack.c.l.s4 1983009808
  %v4408 = vunpack.c.0.s8 %v4407
  %v4409 = vlaneseq
  %v4410 = vshrl.u32 %v4409, 7
  %v4411 = vsub.s32 %v4408, %v4410
  %v4412 = vrot.slane %v4287, %v4411
  %v4414 = vunpack.c.l.s4 1983009808
  %v4415 = vunpack.c.0.s8 %v4414
  %v4416 = vlaneseq
  %v4417 = vshrl.u32 %v4416, 7
  %v4418 = vsub.s32 %v4415, %v4417
  %v4419 = vrot.slane %v4405, %v4418
  %v4420 = vcombine.high %v4412, %v4412
  %v4421 = vcombine.high %v4419, %v4419
  %v4422 = vcombine.high %v4296, %v4296
  %v4424 = vunpack.c.l.s4 1983009808
  %v4425 = vunpack.c.0.s8 %v4424
  %v4426 = vlaneseq
  %v4427 = vshrl.u32 %v4426, 7
  %v4428 = vsub.s32 %v4425, %v4427
  %v4429 = vrot.slane %v4296, %v4428
  %v4431 = vunpack.c.l.s4 1983009808
  %v4432 = vunpack.c.0.s8 %v4431
  %v4433 = vlaneseq
  %v4434 = vshrl.u32 %v4433, 7
  %v4435 = vsub.s32 %v4432, %v4434
  %v4436 = vrot.slane %v4422, %v4435
  %v4437 = vcombine.high %v4429, %v4429
  %v4438 = vcombine.high %v4436, %v4436
  %v4439 = vcombine.high %v4305, %v4305
  %v4441 = vunpack.c.l.s4 1983009808
  %v4442 = vunpack.c.0.s8 %v4441
  %v4443 = vlaneseq
  %v4444 = vshrl.u32 %v4443, 7
  %v4445 = vsub.s32 %v4442, %v4444
  %v4446 = vrot.slane %v4305, %v4445
  %v4448 = vunpack.c.l.s4 1983009808
  %v4449 = vunpack.c.0.s8 %v4448
  %v4450 = vlaneseq
  %v4451 = vshrl.u32 %v4450, 7
  %v4452 = vsub.s32 %v4449, %v4451
  %v4453 = vrot.slane %v4439, %v4452
  %v4454 = vcombine.high %v4446, %v4446
  %v4455 = vcombine.high %v4453, %v4453
  %v4488 = vmax.f32 %v4327, 0.0
  %v4489 = vmax.f32 %v4335, 0.0
  %v4490 = vmax.f32 %v4334, 0.0
  %v4491 = vmax.f32 %v4336, 0.0
  %v4492 = vmax.f32 %v4344, 0.0
  %v4493 = vmax.f32 %v4352, 0.0
  %v4494 = vmax.f32 %v4351, 0.0
  %v4495 = vmax.f32 %v4353, 0.0
  %v4496 = vmax.f32 %v4361, 0.0
  %v4497 = vmax.f32 %v4369, 0.0
  %v4498 = vmax.f32 %v4368, 0.0
  %v4499 = vmax.f32 %v4370, 0.0
  %v4500 = vmax.f32 %v4378, 0.0
  %v4501 = vmax.f32 %v4386, 0.0
  %v4502 = vmax.f32 %v4385, 0.0
  %v4503 = vmax.f32 %v4387, 0.0
  %v4504 = vmax.f32 %v4395, 0.0
  %v4505 = vmax.f32 %v4403, 0.0
  %v4506 = vmax.f32 %v4402, 0.0
  %v4507 = vmax.f32 %v4404, 0.0
  %v4508 = vmax.f32 %v4412, 0.0
  %v4509 = vmax.f32 %v4420, 0.0
  %v4510 = vmax.f32 %v4419, 0.0
  %v4511 = vmax.f32 %v4421, 0.0
  %v4512 = vmax.f32 %v4429, 0.0
  %v4513 = vmax.f32 %v4437, 0.0
  %v4514 = vmax.f32 %v4436, 0.0
  %v4515 = vmax.f32 %v4438, 0.0
  %v4516 = vmax.f32 %v4446, 0.0
  %v4517 = vmax.f32 %v4454, 0.0
  %v4518 = vmax.f32 %v4453, 0.0
  %v4519 = vmax.f32 %v4455, 0.0
  %v4520 = vcombine.high %v3023, %v3023
  %v4522 = vunpack.c.l.s4 1983009808
  %v4523 = vunpack.c.0.s8 %v4522
  %v4524 = vlaneseq
  %v4525 = vshrl.u32 %v4524, 7
  %v4526 = vsub.s32 %v4523, %v4525
  %v4527 = vrot.slane %v3023, %v4526
  %v4529 = vunpack.c.l.s4 1983009808
  %v4530 = vunpack.c.0.s8 %v4529
  %v4531 = vlaneseq
  %v4532 = vshrl.u32 %v4531, 7
  %v4533 = vsub.s32 %v4530, %v4532
  %v4534 = vrot.slane %v4520, %v4533
  %v4535 = vcombine.high %v4527, %v4527
  %v4536 = vcombine.high %v4534, %v4534
  %v4537 = vcombine.high %v3025, %v3025
  %v4539 = vunpack.c.l.s4 1983009808
  %v4540 = vunpack.c.0.s8 %v4539
  %v4541 = vlaneseq
  %v4542 = vshrl.u32 %v4541, 7
  %v4543 = vsub.s32 %v4540, %v4542
  %v4544 = vrot.slane %v3025, %v4543
  %v4546 = vunpack.c.l.s4 1983009808
  %v4547 = vunpack.c.0.s8 %v4546
  %v4548 = vlaneseq
  %v4549 = vshrl.u32 %v4548, 7
  %v4550 = vsub.s32 %v4547, %v4549
  %v4551 = vrot.slane %v4537, %v4550
  %v4552 = vcombine.high %v4544, %v4544
  %v4553 = vcombine.high %v4551, %v4551
  %v4554 = vcombine.high %v3027, %v3027
  %v4556 = vunpack.c.l.s4 1983009808
  %v4557 = vunpack.c.0.s8 %v4556
  %v4558 = vlaneseq
  %v4559 = vshrl.u32 %v4558, 7
  %v4560 = vsub.s32 %v4557, %v4559
  %v4561 = vrot.slane %v3027, %v4560
  %v4563 = vunpack.c.l.s4 1983009808
  %v4564 = vunpack.c.0.s8 %v4563
  %v4565 = vlaneseq
  %v4566 = vshrl.u32 %v4565, 7
  %v4567 = vsub.s32 %v4564, %v4566
  %v4568 = vrot.slane %v4554, %v4567
  %v4569 = vcombine.high %v4561, %v4561
  %v4570 = vcombine.high %v4568, %v4568
  %v4571 = vcombine.high %v3029, %v3029
  %v4573 = vunpack.c.l.s4 1983009808
  %v4574 = vunpack.c.0.s8 %v4573
  %v4575 = vlaneseq
  %v4576 = vshrl.u32 %v4575, 7
  %v4577 = vsub.s32 %v4574, %v4576
  %v4578 = vrot.slane %v3029, %v4577
  %v4580 = vunpack.c.l.s4 1983009808
  %v4581 = vunpack.c.0.s8 %v4580
  %v4582 = vlaneseq
  %v4583 = vshrl.u32 %v4582, 7
  %v4584 = vsub.s32 %v4581, %v4583
  %v4585 = vrot.slane %v4571, %v4584
  %v4586 = vcombine.high %v4578, %v4578
  %v4587 = vcombine.high %v4585, %v4585
  %v4588 = vcombine.high %v3031, %v3031
  %v4590 = vunpack.c.l.s4 1983009808
  %v4591 = vunpack.c.0.s8 %v4590
  %v4592 = vlaneseq
  %v4593 = vshrl.u32 %v4592, 7
  %v4594 = vsub.s32 %v4591, %v4593
  %v4595 = vrot.slane %v3031, %v4594
  %v4597 = vunpack.c.l.s4 1983009808
  %v4598 = vunpack.c.0.s8 %v4597
  %v4599 = vlaneseq
  %v4600 = vshrl.u32 %v4599, 7
  %v4601 = vsub.s32 %v4598, %v4600
  %v4602 = vrot.slane %v4588, %v4601
  %v4603 = vcombine.high %v4595, %v4595
  %v4604 = vcombine.high %v4602, %v4602
  %v4605 = vcombine.high %v3033, %v3033
  %v4607 = vunpack.c.l.s4 1983009808
  %v4608 = vunpack.c.0.s8 %v4607
  %v4609 = vlaneseq
  %v4610 = vshrl.u32 %v4609, 7
  %v4611 = vsub.s32 %v4608, %v4610
  %v4612 = vrot.slane %v3033, %v4611
  %v4614 = vunpack.c.l.s4 1983009808
  %v4615 = vunpack.c.0.s8 %v4614
  %v4616 = vlaneseq
  %v4617 = vshrl.u32 %v4616, 7
  %v4618 = vsub.s32 %v4615, %v4617
  %v4619 = vrot.slane %v4605, %v4618
  %v4620 = vcombine.high %v4612, %v4612
  %v4621 = vcombine.high %v4619, %v4619
  %v4622 = vcombine.high %v3035, %v3035
  %v4624 = vunpack.c.l.s4 1983009808
  %v4625 = vunpack.c.0.s8 %v4624
  %v4626 = vlaneseq
  %v4627 = vshrl.u32 %v4626, 7
  %v4628 = vsub.s32 %v4625, %v4627
  %v4629 = vrot.slane %v3035, %v4628
  %v4631 = vunpack.c.l.s4 1983009808
  %v4632 = vunpack.c.0.s8 %v4631
  %v4633 = vlaneseq
  %v4634 = vshrl.u32 %v4633, 7
  %v4635 = vsub.s32 %v4632, %v4634
  %v4636 = vrot.slane %v4622, %v4635
  %v4637 = vcombine.high %v4629, %v4629
  %v4638 = vcombine.high %v4636, %v4636
  %v4639 = vcombine.high %v3037, %v3037
  %v4641 = vunpack.c.l.s4 1983009808
  %v4642 = vunpack.c.0.s8 %v4641
  %v4643 = vlaneseq
  %v4644 = vshrl.u32 %v4643, 7
  %v4645 = vsub.s32 %v4642, %v4644
  %v4646 = vrot.slane %v3037, %v4645
  %v4648 = vunpack.c.l.s4 1983009808
  %v4649 = vunpack.c.0.s8 %v4648
  %v4650 = vlaneseq
  %v4651 = vshrl.u32 %v4650, 7
  %v4652 = vsub.s32 %v4649, %v4651
  %v4653 = vrot.slane %v4639, %v4652
  %v4654 = vcombine.high %v4646, %v4646
  %v4655 = vcombine.high %v4653, %v4653
  %v4656 = vld [vmem:[%s6] sm:$0xff]
  %v4657 = vlaneseq
  %v4658 = vshrl.u32 %v4657, 7
  %v4659 = vsub.s32 5, %v4658
  %v4660 = vrot.slane %v31, %v4659
  %v4661 = vlaneseq
  %v4662 = vshrl.u32 %v4661, 7
  %v4663 = vsub.s32 0, %v4662
  %v4664 = vrot.slane %v4527, %v4663
  %v4665 = vlaneseq
  %v4666 = vshrl.u32 %v4665, 7
  %v4667 = vsub.s32 0, %v4666
  %v4668 = vrot.slane %v4535, %v4667
  %v4669 = vlaneseq
  %v4670 = vshrl.u32 %v4669, 7
  %v4671 = vsub.s32 0, %v4670
  %v4672 = vrot.slane %v4534, %v4671
  %v4673 = vlaneseq
  %v4674 = vshrl.u32 %v4673, 7
  %v4675 = vsub.s32 0, %v4674
  %v4676 = vrot.slane %v4536, %v4675
  %v4677 = vlaneseq
  %v4678 = vshrl.u32 %v4677, 7
  %v4679 = vsub.s32 0, %v4678
  %v4680 = vrot.slane %v4544, %v4679
  %v4681 = vlaneseq
  %v4682 = vshrl.u32 %v4681, 7
  %v4683 = vsub.s32 0, %v4682
  %v4684 = vrot.slane %v4552, %v4683
  %v4685 = vlaneseq
  %v4686 = vshrl.u32 %v4685, 7
  %v4687 = vsub.s32 0, %v4686
  %v4688 = vrot.slane %v4551, %v4687
  %v4689 = vlaneseq
  %v4690 = vshrl.u32 %v4689, 7
  %v4691 = vsub.s32 0, %v4690
  %v4692 = vrot.slane %v4553, %v4691
  %v4693 = vlaneseq
  %v4694 = vshrl.u32 %v4693, 7
  %v4695 = vsub.s32 0, %v4694
  %v4696 = vrot.slane %v4561, %v4695
  %v4697 = vlaneseq
  %v4698 = vshrl.u32 %v4697, 7
  %v4699 = vsub.s32 0, %v4698
  %v4700 = vrot.slane %v4569, %v4699
  %v4701 = vlaneseq
  %v4702 = vshrl.u32 %v4701, 7
  %v4703 = vsub.s32 0, %v4702
  %v4704 = vrot.slane %v4568, %v4703
  %v4705 = vlaneseq
  %v4706 = vshrl.u32 %v4705, 7
  %v4707 = vsub.s32 0, %v4706
  %v4708 = vrot.slane %v4570, %v4707
  %v4709 = vlaneseq
  %v4710 = vshrl.u32 %v4709, 7
  %v4711 = vsub.s32 0, %v4710
  %v4712 = vrot.slane %v4578, %v4711
  %v4713 = vlaneseq
  %v4714 = vshrl.u32 %v4713, 7
  %v4715 = vsub.s32 0, %v4714
  %v4716 = vrot.slane %v4586, %v4715
  %v4717 = vlaneseq
  %v4718 = vshrl.u32 %v4717, 7
  %v4719 = vsub.s32 0, %v4718
  %v4720 = vrot.slane %v4585, %v4719
  %v4721 = vlaneseq
  %v4722 = vshrl.u32 %v4721, 7
  %v4723 = vsub.s32 0, %v4722
  %v4724 = vrot.slane %v4587, %v4723
  %v4725 = vlaneseq
  %v4726 = vshrl.u32 %v4725, 7
  %v4727 = vsub.s32 0, %v4726
  %v4728 = vrot.slane %v4595, %v4727
  %v4729 = vlaneseq
  %v4730 = vshrl.u32 %v4729, 7
  %v4731 = vsub.s32 0, %v4730
  %v4732 = vrot.slane %v4603, %v4731
  %v4733 = vlaneseq
  %v4734 = vshrl.u32 %v4733, 7
  %v4735 = vsub.s32 0, %v4734
  %v4736 = vrot.slane %v4602, %v4735
  %v4737 = vlaneseq
  %v4738 = vshrl.u32 %v4737, 7
  %v4739 = vsub.s32 0, %v4738
  %v4740 = vrot.slane %v4604, %v4739
  %v4741 = vlaneseq
  %v4742 = vshrl.u32 %v4741, 7
  %v4743 = vsub.s32 0, %v4742
  %v4744 = vrot.slane %v4612, %v4743
  %v4745 = vlaneseq
  %v4746 = vshrl.u32 %v4745, 7
  %v4747 = vsub.s32 0, %v4746
  %v4748 = vrot.slane %v4620, %v4747
  %v4749 = vlaneseq
  %v4750 = vshrl.u32 %v4749, 7
  %v4751 = vsub.s32 0, %v4750
  %v4752 = vrot.slane %v4619, %v4751
  %v4753 = vlaneseq
  %v4754 = vshrl.u32 %v4753, 7
  %v4755 = vsub.s32 0, %v4754
  %v4756 = vrot.slane %v4621, %v4755
  %v4757 = vlaneseq
  %v4758 = vshrl.u32 %v4757, 7
  %v4759 = vsub.s32 0, %v4758
  %v4760 = vrot.slane %v4629, %v4759
  %v4761 = vlaneseq
  %v4762 = vshrl.u32 %v4761, 7
  %v4763 = vsub.s32 0, %v4762
  %v4764 = vrot.slane %v4637, %v4763
  %v4765 = vlaneseq
  %v4766 = vshrl.u32 %v4765, 7
  %v4767 = vsub.s32 0, %v4766
  %v4768 = vrot.slane %v4636, %v4767
  %v4769 = vlaneseq
  %v4770 = vshrl.u32 %v4769, 7
  %v4771 = vsub.s32 0, %v4770
  %v4772 = vrot.slane %v4638, %v4771
  %v4773 = vlaneseq
  %v4774 = vshrl.u32 %v4773, 7
  %v4775 = vsub.s32 0, %v4774
  %v4776 = vrot.slane %v4646, %v4775
  %v4777 = vlaneseq
  %v4778 = vshrl.u32 %v4777, 7
  %v4779 = vsub.s32 0, %v4778
  %v4780 = vrot.slane %v4654, %v4779
  %v4781 = vlaneseq
  %v4782 = vshrl.u32 %v4781, 7
  %v4783 = vsub.s32 0, %v4782
  %v4784 = vrot.slane %v4653, %v4783
  %v4785 = vlaneseq
  %v4786 = vshrl.u32 %v4785, 7
  %v4787 = vsub.s32 0, %v4786
  %v4788 = vrot.slane %v4655, %v4787
  %v4789 = vsel %vm3056, %v4668, %v4664
  %v4790 = vsel %vm3059, %v4672, %v4789
  %v4791 = vsel %vm3062, %v4676, %v4790
  %v4792 = vsel %vm3065, %v4680, %v4791
  %v4793 = vsel %vm3068, %v4684, %v4792
  %v4794 = vsel %vm3071, %v4688, %v4793
  %v4795 = vsel %vm3074, %v4692, %v4794
  %v4796 = vsel %vm3056, %v4700, %v4696
  %v4797 = vsel %vm3059, %v4704, %v4796
  %v4798 = vsel %vm3062, %v4708, %v4797
  %v4799 = vsel %vm3065, %v4712, %v4798
  %v4800 = vsel %vm3068, %v4716, %v4799
  %v4801 = vsel %vm3071, %v4720, %v4800
  %v4802 = vsel %vm3074, %v4724, %v4801
  %v4803 = vsel %vm3056, %v4732, %v4728
  %v4804 = vsel %vm3059, %v4736, %v4803
  %v4805 = vsel %vm3062, %v4740, %v4804
  %v4806 = vsel %vm3065, %v4744, %v4805
  %v4807 = vsel %vm3068, %v4748, %v4806
  %v4808 = vsel %vm3071, %v4752, %v4807
  %v4809 = vsel %vm3074, %v4756, %v4808
  %v4810 = vsel %vm3056, %v4764, %v4760
  %v4811 = vsel %vm3059, %v4768, %v4810
  %v4812 = vsel %vm3062, %v4772, %v4811
  %v4813 = vsel %vm3065, %v4776, %v4812
  %v4814 = vsel %vm3068, %v4780, %v4813
  %v4815 = vsel %vm3071, %v4784, %v4814
  %v4816 = vsel %vm3074, %v4788, %v4815
  %v4817 = vsel %vm32, %v4795, 0
  %v4819 = vsel %vm32, %v4802, 0
  %v4821 = vsel %vm32, %v4809, 0
  %v4823 = vsel %vm32, %v4816, 0
  %4825 = vmatprep.subr.mxu0 0.0
  %4826 = vmatpush1.msra.mxu0 %v4656
  %4827 = vmatprep.subr.mxu0 0.0
  %4828 = vmatpush1.msra.mxu0 0.0
  %4829 = vmatprep.subr.mxu0 0.0
  %4830 = vmatpush1.msra.mxu0 0.0
  %4831 = vmatprep.subr.mxu0 0.0
  %4832 = vmatpush1.msra.mxu0 0.0
  %4833 = vmatprep.subr.mxu0 0.0
  %4834 = vmatpush1.msra.mxu0 0.0
  %4835 = vmatprep.subr.mxu0 0.0
  %4836 = vmatpush1.msra.mxu0 0.0
  %4837 = vmatprep.subr.mxu0 0.0
  %4838 = vmatpush1.msra.mxu0 0.0
  %4839 = vmatprep.subr.mxu0 0.0
  %4840 = vmatpush1.msra.mxu0 0.0
  %4841 = vmatprep.subr.mxu0 0.0
  %4842 = vmatpush1.msra.mxu0 0.0
  %4843 = vmatprep.subr.mxu0 0.0
  %4844 = vmatpush1.msra.mxu0 0.0
  %4845 = vmatprep.subr.mxu0 0.0
  %4846 = vmatpush1.msra.mxu0 0.0
  %4847 = vmatprep.subr.mxu0 0.0
  %4848 = vmatpush1.msra.mxu0 0.0
  %4849 = vmatprep.subr.mxu0 0.0
  %4850 = vmatpush1.msra.mxu0 0.0
  %4851 = vmatprep.subr.mxu0 0.0
  %4852 = vmatpush1.msra.mxu0 0.0
  %4853 = vmatprep.subr.mxu0 0.0
  %4854 = vmatpush1.msra.mxu0 0.0
  %4855 = vmatprep.subr.mxu0 0.0
  %4856 = vmatpush1.msra.mxu0 0.0
  %4857 = vmatprep.subr.mxu0 0.0
  %4858 = vmatpush1.msra.mxu0 0.0
  %4859 = vmatprep.subr.mxu0 0.0
  %4860 = vmatpush1.msra.mxu0 0.0
  %4861 = vmatprep.subr.mxu0 0.0
  %4862 = vmatpush1.msra.mxu0 0.0
  %4863 = vmatprep.subr.mxu0 0.0
  %4864 = vmatpush1.msra.mxu0 0.0
  %4865 = vmatprep.subr.mxu0 0.0
  %4866 = vmatpush1.msra.mxu0 0.0
  %4867 = vmatprep.subr.mxu0 0.0
  %4868 = vmatpush1.msra.mxu0 0.0
  %4869 = vmatprep.subr.mxu0 0.0
  %4870 = vmatpush1.msra.mxu0 0.0
  %4871 = vmatprep.subr.mxu0 0.0
  %4872 = vmatpush1.msra.mxu0 0.0
  %4873 = vmatprep.subr.mxu0 0.0
  %4874 = vmatpush1.msra.mxu0 0.0
  %4875 = vmatprep.subr.mxu0 0.0
  %4876 = vmatpush1.msra.mxu0 0.0
  %4877 = vmatprep.subr.mxu0 0.0
  %4878 = vmatpush1.msra.mxu0 0.0
  %4879 = vmatprep.subr.mxu0 0.0
  %4880 = vmatpush1.msra.mxu0 0.0
  %4881 = vmatprep.subr.mxu0 0.0
  %4882 = vmatpush1.msra.mxu0 0.0
  %4883 = vmatprep.subr.mxu0 0.0
  %4884 = vmatpush1.msra.mxu0 0.0
  %4885 = vmatprep.subr.mxu0 0.0
  %4886 = vmatpush1.msra.mxu0 0.0
  %4887 = vmatprep.subr.mxu0 0.0
  %4888 = vmatpush1.msra.mxu0 0.0
  %4889 = vmatprep.mubr.f32.mxu0 0.0
  %4890 = vmatmul.mubr.f32.gmra.mrb[0].mxu0 %v4817
  %v4891 = vpop.f32.mrb[0].mxu0
  %v4892 = vadd.f32 %v4660, %v4891
  %v4893 = vpop.f32.mrb[0].mxu0
  %4894 = vmatprep.mubr.f32.mxu0 0.0
  %4895 = vmatmul.mubr.f32.gmra.mrb[0].mxu0 %v4819
  %v4896 = vpop.f32.mrb[0].mxu0
  %v4897 = vadd.f32 %v4660, %v4896
  %v4898 = vpop.f32.mrb[0].mxu0
  %4899 = vmatprep.mubr.f32.mxu0 0.0
  %4900 = vmatmul.mubr.f32.gmra.mrb[0].mxu0 %v4821
  %v4901 = vpop.f32.mrb[0].mxu0
  %v4902 = vadd.f32 %v4660, %v4901
  %v4903 = vpop.f32.mrb[0].mxu0
  %4904 = vmatprep.mubr.f32.mxu0 0.0
  %4905 = vmatmul.mubr.f32.gmra.mrb[0].mxu0 %v4823
  %v4906 = vpop.f32.mrb[0].mxu0
  %v4907 = vadd.f32 %v4660, %v4906
  %v4908 = vpop.f32.mrb[0].mxu0
  %4909 = vdwg.mxu0
  %v4942 = vlaneseq
  %v4943 = vshrl.u32 %v4942, 7
  %v4944 = vsub.s32 0, %v4943
  %v4945 = vrot.slane %v4488, %v4944
  %v4946 = vlaneseq
  %v4947 = vshrl.u32 %v4946, 7
  %v4948 = vsub.s32 0, %v4947
  %v4949 = vrot.slane %v4489, %v4948
  %v4950 = vlaneseq
  %v4951 = vshrl.u32 %v4950, 7
  %v4952 = vsub.s32 0, %v4951
  %v4953 = vrot.slane %v4490, %v4952
  %v4954 = vlaneseq
  %v4955 = vshrl.u32 %v4954, 7
  %v4956 = vsub.s32 0, %v4955
  %v4957 = vrot.slane %v4491, %v4956
  %v4958 = vlaneseq
  %v4959 = vshrl.u32 %v4958, 7
  %v4960 = vsub.s32 0, %v4959
  %v4961 = vrot.slane %v4492, %v4960
  %v4962 = vlaneseq
  %v4963 = vshrl.u32 %v4962, 7
  %v4964 = vsub.s32 0, %v4963
  %v4965 = vrot.slane %v4493, %v4964
  %v4966 = vlaneseq
  %v4967 = vshrl.u32 %v4966, 7
  %v4968 = vsub.s32 0, %v4967
  %v4969 = vrot.slane %v4494, %v4968
  %v4970 = vlaneseq
  %v4971 = vshrl.u32 %v4970, 7
  %v4972 = vsub.s32 0, %v4971
  %v4973 = vrot.slane %v4495, %v4972
  %v4974 = vlaneseq
  %v4975 = vshrl.u32 %v4974, 7
  %v4976 = vsub.s32 0, %v4975
  %v4977 = vrot.slane %v4496, %v4976
  %v4978 = vlaneseq
  %v4979 = vshrl.u32 %v4978, 7
  %v4980 = vsub.s32 0, %v4979
  %v4981 = vrot.slane %v4497, %v4980
  %v4982 = vlaneseq
  %v4983 = vshrl.u32 %v4982, 7
  %v4984 = vsub.s32 0, %v4983
  %v4985 = vrot.slane %v4498, %v4984
  %v4986 = vlaneseq
  %v4987 = vshrl.u32 %v4986, 7
  %v4988 = vsub.s32 0, %v4987
  %v4989 = vrot.slane %v4499, %v4988
  %v4990 = vlaneseq
  %v4991 = vshrl.u32 %v4990, 7
  %v4992 = vsub.s32 0, %v4991
  %v4993 = vrot.slane %v4500, %v4992
  %v4994 = vlaneseq
  %v4995 = vshrl.u32 %v4994, 7
  %v4996 = vsub.s32 0, %v4995
  %v4997 = vrot.slane %v4501, %v4996
  %v4998 = vlaneseq
  %v4999 = vshrl.u32 %v4998, 7
  %v5000 = vsub.s32 0, %v4999
  %v5001 = vrot.slane %v4502, %v5000
  %v5002 = vlaneseq
  %v5003 = vshrl.u32 %v5002, 7
  %v5004 = vsub.s32 0, %v5003
  %v5005 = vrot.slane %v4503, %v5004
  %v5006 = vlaneseq
  %v5007 = vshrl.u32 %v5006, 7
  %v5008 = vsub.s32 0, %v5007
  %v5009 = vrot.slane %v4504, %v5008
  %v5010 = vlaneseq
  %v5011 = vshrl.u32 %v5010, 7
  %v5012 = vsub.s32 0, %v5011
  %v5013 = vrot.slane %v4505, %v5012
  %v5014 = vlaneseq
  %v5015 = vshrl.u32 %v5014, 7
  %v5016 = vsub.s32 0, %v5015
  %v5017 = vrot.slane %v4506, %v5016
  %v5018 = vlaneseq
  %v5019 = vshrl.u32 %v5018, 7
  %v5020 = vsub.s32 0, %v5019
  %v5021 = vrot.slane %v4507, %v5020
  %v5022 = vlaneseq
  %v5023 = vshrl.u32 %v5022, 7
  %v5024 = vsub.s32 0, %v5023
  %v5025 = vrot.slane %v4508, %v5024
  %v5026 = vlaneseq
  %v5027 = vshrl.u32 %v5026, 7
  %v5028 = vsub.s32 0, %v5027
  %v5029 = vrot.slane %v4509, %v5028
  %v5030 = vlaneseq
  %v5031 = vshrl.u32 %v5030, 7
  %v5032 = vsub.s32 0, %v5031
  %v5033 = vrot.slane %v4510, %v5032
  %v5034 = vlaneseq
  %v5035 = vshrl.u32 %v5034, 7
  %v5036 = vsub.s32 0, %v5035
  %v5037 = vrot.slane %v4511, %v5036
  %v5038 = vlaneseq
  %v5039 = vshrl.u32 %v5038, 7
  %v5040 = vsub.s32 0, %v5039
  %v5041 = vrot.slane %v4512, %v5040
  %v5042 = vlaneseq
  %v5043 = vshrl.u32 %v5042, 7
  %v5044 = vsub.s32 0, %v5043
  %v5045 = vrot.slane %v4513, %v5044
  %v5046 = vlaneseq
  %v5047 = vshrl.u32 %v5046, 7
  %v5048 = vsub.s32 0, %v5047
  %v5049 = vrot.slane %v4514, %v5048
  %v5050 = vlaneseq
  %v5051 = vshrl.u32 %v5050, 7
  %v5052 = vsub.s32 0, %v5051
  %v5053 = vrot.slane %v4515, %v5052
  %v5054 = vlaneseq
  %v5055 = vshrl.u32 %v5054, 7
  %v5056 = vsub.s32 0, %v5055
  %v5057 = vrot.slane %v4516, %v5056
  %v5058 = vlaneseq
  %v5059 = vshrl.u32 %v5058, 7
  %v5060 = vsub.s32 0, %v5059
  %v5061 = vrot.slane %v4517, %v5060
  %v5062 = vlaneseq
  %v5063 = vshrl.u32 %v5062, 7
  %v5064 = vsub.s32 0, %v5063
  %v5065 = vrot.slane %v4518, %v5064
  %v5066 = vlaneseq
  %v5067 = vshrl.u32 %v5066, 7
  %v5068 = vsub.s32 0, %v5067
  %v5069 = vrot.slane %v4519, %v5068
  %v5070 = vsel %vm3056, %v4949, %v4945
  %v5071 = vsel %vm3059, %v4953, %v5070
  %v5072 = vsel %vm3062, %v4957, %v5071
  %v5073 = vsel %vm3056, %v4965, %v4961
  %v5074 = vsel %vm3059, %v4969, %v5073
  %v5075 = vsel %vm3062, %v4973, %v5074
  %v5076 = vsel %vm3056, %v4981, %v4977
  %v5077 = vsel %vm3059, %v4985, %v5076
  %v5078 = vsel %vm3062, %v4989, %v5077
  %v5079 = vsel %vm3056, %v4997, %v4993
  %v5080 = vsel %vm3059, %v5001, %v5079
  %v5081 = vsel %vm3062, %v5005, %v5080
  %v5082 = vsel %vm3056, %v5013, %v5009
  %v5083 = vsel %vm3059, %v5017, %v5082
  %v5084 = vsel %vm3062, %v5021, %v5083
  %v5085 = vsel %vm3056, %v5029, %v5025
  %v5086 = vsel %vm3059, %v5033, %v5085
  %v5087 = vsel %vm3062, %v5037, %v5086
  %v5088 = vsel %vm3056, %v5045, %v5041
  %v5089 = vsel %vm3059, %v5049, %v5088
  %v5090 = vsel %vm3062, %v5053, %v5089
  %v5091 = vsel %vm3056, %v5061, %v5057
  %v5092 = vsel %vm3059, %v5065, %v5091
  %v5093 = vsel %vm3062, %v5069, %v5092
  %s5102 = scalar_lea.vmem [#allocation3], 8
  %vm5103 = vcmask 125952
  %5104 = vst.msk [vmem:[%s5102 + $0x1] sm:$0xf] %vm5103, %v5072
  %5105 = vst.msk [vmem:[%s5102 + $0x9] sm:$0xf] %vm5103, %v5075
  %5106 = vst.msk [vmem:[%s5102 + $0x11] sm:$0xf] %vm5103, %v5078
  %5107 = vst.msk [vmem:[%s5102 + $0x19] sm:$0xf] %vm5103, %v5081
  %5108 = vst.msk [vmem:[%s5102 + $0x31] sm:$0xf] %vm5103, %v5084
  %5109 = vst.msk [vmem:[%s5102 + $0x39] sm:$0xf] %vm5103, %v5087
  %5110 = vst.msk [vmem:[%s5102 + $0x41] sm:$0xf] %vm5103, %v5090
  %5111 = vst.msk [vmem:[%s5102 + $0x49] sm:$0xf] %vm5103, %v5093
  %v5112 = vld [vmem:[#allocation3] sm:$0x3f]
  %v5113 = vld [vmem:[#allocation3 + $0x8] sm:$0x3f]
  %v5114 = vld [vmem:[#allocation3 + $0x10] sm:$0x3f]
  %v5115 = vld [vmem:[#allocation3 + $0x18] sm:$0x3f]
  %v5116 = vld [vmem:[#allocation3 + $0x20] sm:$0x3f]
  %v5117 = vld [vmem:[#allocation3 + $0x28] sm:$0x3f]
  %v5118 = vld [vmem:[#allocation3 + $0x30] sm:$0x3f]
  %v5119 = vld [vmem:[#allocation3 + $0x38] sm:$0x3f]
  %v5120 = vld [vmem:[#allocation3 + $0x40] sm:$0x3f]
  %v5121 = vld [vmem:[#allocation3 + $0x48] sm:$0x3f]
  %v5122 = vld [vmem:[#allocation3 + $0x50] sm:$0x3f]
  %v5123 = vld [vmem:[#allocation3 + $0x58] sm:$0x3f]
  %v5132 = vcombine.high %v5112, %v5112
  %v5133 = vcombine.high %v5113, %v5113
  %v5134 = vcombine.high %v5114, %v5114
  %v5135 = vcombine.high %v5115, %v5115
  %v5136 = vcombine.high %v5118, %v5118
  %v5137 = vcombine.high %v5119, %v5119
  %v5138 = vcombine.high %v5120, %v5120
  %v5139 = vcombine.high %v5121, %v5121
  %vm5140 = vcmask 1042432
  %vm5141 = vcmask 1046532
  %vm5142 = vmor %vm5140, %vm5141
  %v5143 = vrot.slane %v5112, 5
  %v5144 = vrot.slane %v5143, 4
  %v5145 = vrot.slane %v5132, 5
  %v5146 = vsel %vm5142, %v5144, %v5145
  %v5147 = vrot.slane %v5113, 5
  %v5148 = vrot.slane %v5147, 4
  %v5149 = vrot.slane %v5133, 5
  %v5150 = vsel %vm5142, %v5148, %v5149
  %v5151 = vrot.slane %v5114, 5
  %v5152 = vrot.slane %v5151, 4
  %v5153 = vrot.slane %v5134, 5
  %v5154 = vsel %vm5142, %v5152, %v5153
  %v5155 = vrot.slane %v5115, 5
  %v5156 = vrot.slane %v5155, 4
  %v5157 = vrot.slane %v5135, 5
  %v5158 = vsel %vm5142, %v5156, %v5157
  %v5159 = vrot.slane %v5118, 5
  %v5160 = vrot.slane %v5159, 4
  %v5161 = vrot.slane %v5136, 5
  %v5162 = vsel %vm5142, %v5160, %v5161
  %v5163 = vrot.slane %v5119, 5
  %v5164 = vrot.slane %v5163, 4
  %v5165 = vrot.slane %v5137, 5
  %v5166 = vsel %vm5142, %v5164, %v5165
  %v5167 = vrot.slane %v5120, 5
  %v5168 = vrot.slane %v5167, 4
  %v5169 = vrot.slane %v5138, 5
  %v5170 = vsel %vm5142, %v5168, %v5169
  %v5171 = vrot.slane %v5121, 5
  %v5172 = vrot.slane %v5171, 4
  %v5173 = vrot.slane %v5139, 5
  %v5174 = vsel %vm5142, %v5172, %v5173
  %vm5175 = vcmask 1041408
  %vm5176 = vcmask 1045508
  %vm5177 = vmor %vm5175, %vm5176
  %v5178 = vrot.slane %v5112, 6
  %v5179 = vrot.slane %v5178, 4
  %v5180 = vrot.slane %v5132, 6
  %v5181 = vsel %vm5177, %v5179, %v5180
  %v5182 = vrot.slane %v5113, 6
  %v5183 = vrot.slane %v5182, 4
  %v5184 = vrot.slane %v5133, 6
  %v5185 = vsel %vm5177, %v5183, %v5184
  %v5186 = vrot.slane %v5114, 6
  %v5187 = vrot.slane %v5186, 4
  %v5188 = vrot.slane %v5134, 6
  %v5189 = vsel %vm5177, %v5187, %v5188
  %v5190 = vrot.slane %v5115, 6
  %v5191 = vrot.slane %v5190, 4
  %v5192 = vrot.slane %v5135, 6
  %v5193 = vsel %vm5177, %v5191, %v5192
  %v5194 = vrot.slane %v5118, 6
  %v5195 = vrot.slane %v5194, 4
  %v5196 = vrot.slane %v5136, 6
  %v5197 = vsel %vm5177, %v5195, %v5196
  %v5198 = vrot.slane %v5119, 6
  %v5199 = vrot.slane %v5198, 4
  %v5200 = vrot.slane %v5137, 6
  %v5201 = vsel %vm5177, %v5199, %v5200
  %v5202 = vrot.slane %v5120, 6
  %v5203 = vrot.slane %v5202, 4
  %v5204 = vrot.slane %v5138, 6
  %v5205 = vsel %vm5177, %v5203, %v5204
  %v5206 = vrot.slane %v5121, 6
  %v5207 = vrot.slane %v5206, 4
  %v5208 = vrot.slane %v5139, 6
  %v5209 = vsel %vm5177, %v5207, %v5208
  %v5212 = vcombine.high %v5116, %v5116
  %v5213 = vcombine.high %v5122, %v5122
  %v5214 = vrot.slane %v5116, 5
  %v5215 = vrot.slane %v5214, 4
  %v5216 = vrot.slane %v5212, 5
  %v5217 = vsel %vm5142, %v5215, %v5216
  %v5218 = vrot.slane %v5122, 5
  %v5219 = vrot.slane %v5218, 4
  %v5220 = vrot.slane %v5213, 5
  %v5221 = vsel %vm5142, %v5219, %v5220
  %v5222 = vrot.slane %v5116, 6
  %v5223 = vrot.slane %v5222, 4
  %v5224 = vrot.slane %v5212, 6
  %v5225 = vsel %vm5177, %v5223, %v5224
  %v5226 = vrot.slane %v5122, 6
  %v5227 = vrot.slane %v5226, 4
  %v5228 = vrot.slane %v5213, 6
  %v5229 = vsel %vm5177, %v5227, %v5228
  %v5232 = vcombine.high %v5117, %v5117
  %v5233 = vcombine.high %v5123, %v5123
  %v5234 = vrot.slane %v5117, 5
  %v5235 = vrot.slane %v5234, 4
  %v5236 = vrot.slane %v5232, 5
  %v5237 = vsel %vm5142, %v5235, %v5236
  %v5238 = vrot.slane %v5123, 5
  %v5239 = vrot.slane %v5238, 4
  %v5240 = vrot.slane %v5233, 5
  %v5241 = vsel %vm5142, %v5239, %v5240
  %v5242 = vrot.slane %v5117, 6
  %v5243 = vrot.slane %v5242, 4
  %v5244 = vrot.slane %v5232, 6
  %v5245 = vsel %vm5177, %v5243, %v5244
  %v5246 = vrot.slane %v5123, 6
  %v5247 = vrot.slane %v5246, 4
  %v5248 = vrot.slane %v5233, 6
  %v5249 = vsel %vm5177, %v5247, %v5248
  %v5250 = vcombine.low %v5112, %v5113
  %v5251 = vcombine.low %v5114, %v5115
  %v5252 = vcombine.low %v5118, %v5119
  %v5253 = vcombine.low %v5120, %v5121
  %v5258 = vcombine.low %v5146, %v5150
  %v5259 = vcombine.low %v5154, %v5158
  %v5260 = vcombine.low %v5162, %v5166
  %v5261 = vcombine.low %v5170, %v5174
  %5262 = vrot.lane.b32.xlu0 %v5258, 16
  %v5263 = vpop.permute.xlu0 %5262
  %5264 = vrot.lane.b32.xlu0 %v5259, 16
  %v5265 = vpop.permute.xlu0 %5264
  %5266 = vrot.lane.b32.xlu0 %v5260, 16
  %v5267 = vpop.permute.xlu0 %5266
  %5268 = vrot.lane.b32.xlu0 %v5261, 16
  %v5269 = vpop.permute.xlu0 %5268
  %v5274 = vcombine.low %v5181, %v5185
  %v5275 = vcombine.low %v5189, %v5193
  %v5276 = vcombine.low %v5197, %v5201
  %v5277 = vcombine.low %v5205, %v5209
  %5278 = vrot.lane.b32.xlu0 %v5274, 32
  %v5279 = vpop.permute.xlu0 %5278
  %5280 = vrot.lane.b32.xlu0 %v5275, 32
  %v5281 = vpop.permute.xlu0 %5280
  %5282 = vrot.lane.b32.xlu0 %v5276, 32
  %v5283 = vpop.permute.xlu0 %5282
  %5284 = vrot.lane.b32.xlu0 %v5277, 32
  %v5285 = vpop.permute.xlu0 %5284
  %v5290 = vcombine.low %v5113, %v5114
  %v5291 = vcombine.low %v5115, %v5116
  %v5292 = vcombine.low %v5119, %v5120
  %v5293 = vcombine.low %v5121, %v5122
  %5294 = vrot.lane.b32.xlu0 %v5290, 48
  %v5295 = vpop.permute.xlu0 %5294
  %5296 = vrot.lane.b32.xlu0 %v5291, 48
  %v5297 = vpop.permute.xlu0 %5296
  %5298 = vrot.lane.b32.xlu0 %v5292, 48
  %v5299 = vpop.permute.xlu0 %5298
  %5300 = vrot.lane.b32.xlu0 %v5293, 48
  %v5301 = vpop.permute.xlu0 %5300
  %v5306 = vcombine.low %v5150, %v5154
  %v5307 = vcombine.low %v5158, %v5217
  %v5308 = vcombine.low %v5166, %v5170
  %v5309 = vcombine.low %v5174, %v5221
  %5310 = vrot.lane.b32.xlu0 %v5306, 64
  %v5311 = vpop.permute.xlu0 %5310
  %5312 = vrot.lane.b32.xlu0 %v5307, 64
  %v5313 = vpop.permute.xlu0 %5312
  %5314 = vrot.lane.b32.xlu0 %v5308, 64
  %v5315 = vpop.permute.xlu0 %5314
  %5316 = vrot.lane.b32.xlu0 %v5309, 64
  %v5317 = vpop.permute.xlu0 %5316
  %v5322 = vcombine.low %v5185, %v5189
  %v5323 = vcombine.low %v5193, %v5225
  %v5324 = vcombine.low %v5201, %v5205
  %v5325 = vcombine.low %v5209, %v5229
  %5326 = vrot.lane.b32.xlu0 %v5322, 80
  %v5327 = vpop.permute.xlu0 %5326
  %5328 = vrot.lane.b32.xlu0 %v5323, 80
  %v5329 = vpop.permute.xlu0 %5328
  %5330 = vrot.lane.b32.xlu0 %v5324, 80
  %v5331 = vpop.permute.xlu0 %5330
  %5332 = vrot.lane.b32.xlu0 %v5325, 80
  %v5333 = vpop.permute.xlu0 %5332
  %v5338 = vcombine.low %v5116, %v5117
  %v5339 = vcombine.low %v5122, %v5123
  %5340 = vrot.lane.b32.xlu0 %v5251, 96
  %v5341 = vpop.permute.xlu0 %5340
  %5342 = vrot.lane.b32.xlu0 %v5338, 96
  %v5343 = vpop.permute.xlu0 %5342
  %5344 = vrot.lane.b32.xlu0 %v5253, 96
  %v5345 = vpop.permute.xlu0 %5344
  %5346 = vrot.lane.b32.xlu0 %v5339, 96
  %v5347 = vpop.permute.xlu0 %5346
  %v5352 = vcombine.low %v5217, %v5237
  %v5353 = vcombine.low %v5221, %v5241
  %5354 = vrot.lane.b32.xlu0 %v5259, 112
  %v5355 = vpop.permute.xlu0 %5354
  %5356 = vrot.lane.b32.xlu0 %v5352, 112
  %v5357 = vpop.permute.xlu0 %5356
  %5358 = vrot.lane.b32.xlu0 %v5261, 112
  %v5359 = vpop.permute.xlu0 %5358
  %5360 = vrot.lane.b32.xlu0 %v5353, 112
  %v5361 = vpop.permute.xlu0 %5360
  %v5366 = vcombine.low %v5225, %v5245
  %v5367 = vcombine.low %v5229, %v5249
  %v5372 = vsel %vm824, %v5250, %v5263
  %v5373 = vsel %vm824, %v5251, %v5265
  %v5374 = vsel %vm824, %v5252, %v5267
  %v5375 = vsel %vm824, %v5253, %v5269
  %v5376 = vsel %vm841, %v5372, %v5279
  %v5377 = vsel %vm841, %v5373, %v5281
  %v5378 = vsel %vm841, %v5374, %v5283
  %v5379 = vsel %vm841, %v5375, %v5285
  %v5380 = vsel %vm858, %v5376, %v5295
  %v5381 = vsel %vm858, %v5377, %v5297
  %v5382 = vsel %vm858, %v5378, %v5299
  %v5383 = vsel %vm858, %v5379, %v5301
  %v5384 = vsel %vm875, %v5380, %v5311
  %v5385 = vsel %vm875, %v5381, %v5313
  %v5386 = vsel %vm875, %v5382, %v5315
  %v5387 = vsel %vm875, %v5383, %v5317
  %v5388 = vsel %vm892, %v5384, %v5327
  %v5389 = vsel %vm892, %v5385, %v5329
  %v5390 = vsel %vm892, %v5386, %v5331
  %v5391 = vsel %vm892, %v5387, %v5333
  %v5392 = vsel %vm909, %v5388, %v5341
  %v5393 = vsel %vm909, %v5389, %v5343
  %v5394 = vsel %vm909, %v5390, %v5345
  %v5395 = vsel %vm909, %v5391, %v5347
  %v5396 = vsel %vm926, %v5392, %v5355
  %v5397 = vsel %vm926, %v5393, %v5357
  %v5398 = vsel %vm926, %v5394, %v5359
  %v5399 = vsel %vm926, %v5395, %v5361
  %v5400 = vsel %vm824, %v5275, 0.0
  %v5401 = vsel %vm824, %v5366, 0.0
  %v5402 = vsel %vm824, %v5277, 0.0
  %v5403 = vsel %vm824, %v5367, 0.0
  %v5404 = vld [vmem:[%s5] sm:$0xff]
  %v5405 = vld [vmem:[%s5 + $0x8] sm:$0xff]
  %v5406 = vld [vmem:[%s5 + $0x10] sm:$0xff]
  %v5407 = vld [vmem:[%s5 + $0x18] sm:$0xff]
  %v5408 = vld [vmem:[%s5 + $0x20] sm:$0xff]
  %v5409 = vld [vmem:[%s5 + $0x28] sm:$0xff]
  %v5410 = vld [vmem:[%s5 + $0x30] sm:$0xff]
  %v5411 = vld [vmem:[%s5 + $0x38] sm:$0xff]
  %v5412 = vld [vmem:[%s5 + $0x40] sm:$0xff]
  %v5413 = vld [vmem:[%s5 + $0x48] sm:$0xff]
  %v5414 = vld [vmem:[%s5 + $0x50] sm:$0xff]
  %v5415 = vld [vmem:[%s5 + $0x58] sm:$0xff]
  %v5416 = vld [vmem:[%s5 + $0x60] sm:$0xff]
  %v5417 = vld [vmem:[%s5 + $0x68] sm:$0xff]
  %v5418 = vld [vmem:[%s5 + $0x70] sm:$0xff]
  %v5419 = vld [vmem:[%s5 + $0x78] sm:$0xff]
  %v5420 = vld [vmem:[%s5 + $0x80] sm:$0xff]
  %v5421 = vld [vmem:[%s5 + $0x88] sm:$0xff]
  %v5422 = vld [vmem:[%s5 + $0x90] sm:$0xff]
  %v5423 = vld [vmem:[%s5 + $0x98] sm:$0xff]
  %v5424 = vld [vmem:[%s5 + $0xa0] sm:$0xff]
  %v5425 = vld [vmem:[%s5 + $0xa8] sm:$0xff]
  %v5426 = vld [vmem:[%s5 + $0xb0] sm:$0xff]
  %v5427 = vld [vmem:[%s5 + $0xb8] sm:$0xff]
  %v5428 = vld [vmem:[%s5 + $0xc0] sm:$0xff]
  %v5429 = vld [vmem:[%s5 + $0xc8] sm:$0xff]
  %v5430 = vld [vmem:[%s5 + $0xd0] sm:$0xff]
  %v5431 = vld [vmem:[%s5 + $0xd8] sm:$0xff]
  %v5432 = vld [vmem:[%s5 + $0xe0] sm:$0xff]
  %v5433 = vld [vmem:[%s5 + $0xe8] sm:$0xff]
  %v5434 = vld [vmem:[%s5 + $0xf0] sm:$0xff]
  %v5435 = vld [vmem:[%s5 + $0xf8] sm:$0xff]
  %v5436 = vlaneseq
  %v5437 = vshrl.u32 %v5436, 7
  %v5438 = vsub.s32 4, %v5437
  %v5439 = vrot.slane %v31, %v5438
  %5440 = vmatprep.subr.mxu0 0.0
  %5441 = vmatpush1.msra.mxu0 %v5404
  %5442 = vmatprep.subr.mxu0 0.0
  %5443 = vmatpush1.msra.mxu0 %v5405
  %5444 = vmatprep.subr.mxu0 0.0
  %5445 = vmatpush1.msra.mxu0 %v5406
  %5446 = vmatprep.subr.mxu0 0.0
  %5447 = vmatpush1.msra.mxu0 %v5407
  %5448 = vmatprep.subr.mxu0 0.0
  %5449 = vmatpush1.msra.mxu0 %v5408
  %5450 = vmatprep.subr.mxu0 0.0
  %5451 = vmatpush1.msra.mxu0 %v5409
  %5452 = vmatprep.subr.mxu0 0.0
  %5453 = vmatpush1.msra.mxu0 %v5410
  %5454 = vmatprep.subr.mxu0 0.0
  %5455 = vmatpush1.msra.mxu0 %v5411
  %5456 = vmatprep.subr.mxu0 0.0
  %5457 = vmatpush1.msra.mxu0 %v5412
  %5458 = vmatprep.subr.mxu0 0.0
  %5459 = vmatpush1.msra.mxu0 %v5413
  %5460 = vmatprep.subr.mxu0 0.0
  %5461 = vmatpush1.msra.mxu0 %v5414
  %5462 = vmatprep.subr.mxu0 0.0
  %5463 = vmatpush1.msra.mxu0 %v5415
  %5464 = vmatprep.subr.mxu0 0.0
  %5465 = vmatpush1.msra.mxu0 %v5416
  %5466 = vmatprep.subr.mxu0 0.0
  %5467 = vmatpush1.msra.mxu0 %v5417
  %5468 = vmatprep.subr.mxu0 0.0
  %5469 = vmatpush1.msra.mxu0 %v5418
  %5470 = vmatprep.subr.mxu0 0.0
  %5471 = vmatpush1.msra.mxu0 %v5419
  %5472 = vmatprep.subr.mxu0 0.0
  %5473 = vmatpush1.msra.mxu0 %v5420
  %5474 = vmatprep.subr.mxu0 0.0
  %5475 = vmatpush1.msra.mxu0 %v5421
  %5476 = vmatprep.subr.mxu0 0.0
  %5477 = vmatpush1.msra.mxu0 %v5422
  %5478 = vmatprep.subr.mxu0 0.0
  %5479 = vmatpush1.msra.mxu0 %v5423
  %5480 = vmatprep.subr.mxu0 0.0
  %5481 = vmatpush1.msra.mxu0 %v5424
  %5482 = vmatprep.subr.mxu0 0.0
  %5483 = vmatpush1.msra.mxu0 %v5425
  %5484 = vmatprep.subr.mxu0 0.0
  %5485 = vmatpush1.msra.mxu0 %v5426
  %5486 = vmatprep.subr.mxu0 0.0
  %5487 = vmatpush1.msra.mxu0 %v5427
  %5488 = vmatprep.subr.mxu0 0.0
  %5489 = vmatpush1.msra.mxu0 %v5428
  %5490 = vmatprep.subr.mxu0 0.0
  %5491 = vmatpush1.msra.mxu0 %v5429
  %5492 = vmatprep.subr.mxu0 0.0
  %5493 = vmatpush1.msra.mxu0 %v5430
  %5494 = vmatprep.subr.mxu0 0.0
  %5495 = vmatpush1.msra.mxu0 %v5431
  %5496 = vmatprep.subr.mxu0 0.0
  %5497 = vmatpush1.msra.mxu0 %v5432
  %5498 = vmatprep.subr.mxu0 0.0
  %5499 = vmatpush1.msra.mxu0 %v5433
  %5500 = vmatprep.subr.mxu0 0.0
  %5501 = vmatpush1.msra.mxu0 %v5434
  %5502 = vmatprep.subr.mxu0 0.0
  %5503 = vmatpush1.msra.mxu0 %v5435
  %5504 = vmatprep.mubr.f32.mxu0 %v5400
  %5505 = vmatmul.mubr.f32.gmra.mrb[0].mxu0 %v5396
  %v5506 = vpop.f32.mrb[0].mxu0
  %v5507 = vadd.f32 %v5439, %v5506
  %v5508 = vpop.f32.mrb[0].mxu0
  %5509 = vmatprep.mubr.f32.mxu0 %v5401
  %5510 = vmatmul.mubr.f32.gmra.mrb[0].mxu0 %v5397
  %v5511 = vpop.f32.mrb[0].mxu0
  %v5512 = vadd.f32 %v5439, %v5511
  %v5513 = vpop.f32.mrb[0].mxu0
  %5514 = vmatprep.mubr.f32.mxu0 %v5402
  %5515 = vmatmul.mubr.f32.gmra.mrb[0].mxu0 %v5398
  %v5516 = vpop.f32.mrb[0].mxu0
  %v5517 = vadd.f32 %v5439, %v5516
  %v5518 = vpop.f32.mrb[0].mxu0
  %5519 = vmatprep.mubr.f32.mxu0 %v5403
  %5520 = vmatmul.mubr.f32.gmra.mrb[0].mxu0 %v5399
  %v5521 = vpop.f32.mrb[0].mxu0
  %v5522 = vadd.f32 %v5439, %v5521
  %v5523 = vpop.f32.mrb[0].mxu0
  %5524 = vdwg.mxu0
  %v5525 = vadd.f32 %v5507, %v4892
  %v5526 = vadd.f32 %v5512, %v4897
  %v5527 = vadd.f32 %v5517, %v4902
  %v5528 = vadd.f32 %v5522, %v4907
  %v5529 = vmax.f32 %v5525, 0.0
  %v5530 = vmax.f32 %v5526, 0.0
  %v5531 = vmax.f32 %v5527, 0.0
  %v5532 = vmax.f32 %v5528, 0.0
  %v5537 = vcombine.high %v5529, %v5529
  %v5538 = vcombine.high %v5530, %v5530
  %v5539 = vcombine.high %v5531, %v5531
  %v5540 = vcombine.high %v5532, %v5532
  %v5541 = vlaneseq
  %v5542 = vshrl.u32 %v5541, 7
  %v5543 = vsub.s32 0, %v5542
  %v5544 = vrot.slane %v5529, %v5543
  %v5545 = vlaneseq
  %v5546 = vshrl.u32 %v5545, 7
  %v5547 = vsub.s32 0, %v5546
  %v5548 = vrot.slane %v5537, %v5547
  %v5549 = vlaneseq
  %v5550 = vshrl.u32 %v5549, 7
  %v5551 = vsub.s32 0, %v5550
  %v5552 = vrot.slane %v5530, %v5551
  %v5553 = vlaneseq
  %v5554 = vshrl.u32 %v5553, 7
  %v5555 = vsub.s32 0, %v5554
  %v5556 = vrot.slane %v5538, %v5555
  %v5557 = vlaneseq
  %v5558 = vshrl.u32 %v5557, 7
  %v5559 = vsub.s32 0, %v5558
  %v5560 = vrot.slane %v5531, %v5559
  %v5561 = vlaneseq
  %v5562 = vshrl.u32 %v5561, 7
  %v5563 = vsub.s32 0, %v5562
  %v5564 = vrot.slane %v5539, %v5563
  %v5565 = vlaneseq
  %v5566 = vshrl.u32 %v5565, 7
  %v5567 = vsub.s32 0, %v5566
  %v5568 = vrot.slane %v5532, %v5567
  %v5569 = vlaneseq
  %v5570 = vshrl.u32 %v5569, 7
  %v5571 = vsub.s32 0, %v5570
  %v5572 = vrot.slane %v5540, %v5571
  %v5573 = vsel %vm3056, %v5548, %v5544
  %v5574 = vsel %vm3059, %v5552, %v5573
  %v5575 = vsel %vm3062, %v5556, %v5574
  %v5576 = vsel %vm3056, %v5564, %v5560
  %v5577 = vsel %vm3059, %v5568, %v5576
  %v5578 = vsel %vm3062, %v5572, %v5577
  %v5581 = vlaneseq
  %v5582 = vshrl.u32 %v5581, 7
  %v5583 = vsub.s32 1, %v5582
  %v5584 = vrot.slane %v5529, %v5583
  %v5585 = vlaneseq
  %v5586 = vshrl.u32 %v5585, 7
  %v5587 = vsub.s32 1, %v5586
  %v5588 = vrot.slane %v5537, %v5587
  %v5589 = vlaneseq
  %v5590 = vshrl.u32 %v5589, 7
  %v5591 = vsub.s32 1, %v5590
  %v5592 = vrot.slane %v5530, %v5591
  %v5593 = vlaneseq
  %v5594 = vshrl.u32 %v5593, 7
  %v5595 = vsub.s32 1, %v5594
  %v5596 = vrot.slane %v5538, %v5595
  %v5597 = vlaneseq
  %v5598 = vshrl.u32 %v5597, 7
  %v5599 = vsub.s32 1, %v5598
  %v5600 = vrot.slane %v5531, %v5599
  %v5601 = vlaneseq
  %v5602 = vshrl.u32 %v5601, 7
  %v5603 = vsub.s32 1, %v5602
  %v5604 = vrot.slane %v5539, %v5603
  %v5605 = vlaneseq
  %v5606 = vshrl.u32 %v5605, 7
  %v5607 = vsub.s32 1, %v5606
  %v5608 = vrot.slane %v5532, %v5607
  %v5609 = vlaneseq
  %v5610 = vshrl.u32 %v5609, 7
  %v5611 = vsub.s32 1, %v5610
  %v5612 = vrot.slane %v5540, %v5611
  %v5613 = vsel %vm3056, %v5588, %v5584
  %v5614 = vsel %vm3059, %v5592, %v5613
  %v5615 = vsel %vm3062, %v5596, %v5614
  %v5616 = vsel %vm3056, %v5604, %v5600
  %v5617 = vsel %vm3059, %v5608, %v5616
  %v5618 = vsel %vm3062, %v5612, %v5617
  %5619 = vrot.lane.b32.xlu0 %v5615, 16
  %v5620 = vpop.permute.xlu0 %5619
  %5621 = vrot.lane.b32.xlu0 %v5618, 16
  %v5622 = vpop.permute.xlu0 %5621
  %v5625 = vlaneseq
  %v5626 = vshrl.u32 %v5625, 7
  %v5627 = vsub.s32 2, %v5626
  %v5628 = vrot.slane %v5529, %v5627
  %v5629 = vlaneseq
  %v5630 = vshrl.u32 %v5629, 7
  %v5631 = vsub.s32 2, %v5630
  %v5632 = vrot.slane %v5537, %v5631
  %v5633 = vlaneseq
  %v5634 = vshrl.u32 %v5633, 7
  %v5635 = vsub.s32 2, %v5634
  %v5636 = vrot.slane %v5530, %v5635
  %v5637 = vlaneseq
  %v5638 = vshrl.u32 %v5637, 7
  %v5639 = vsub.s32 2, %v5638
  %v5640 = vrot.slane %v5538, %v5639
  %v5641 = vlaneseq
  %v5642 = vshrl.u32 %v5641, 7
  %v5643 = vsub.s32 2, %v5642
  %v5644 = vrot.slane %v5531, %v5643
  %v5645 = vlaneseq
  %v5646 = vshrl.u32 %v5645, 7
  %v5647 = vsub.s32 2, %v5646
  %v5648 = vrot.slane %v5539, %v5647
  %v5649 = vlaneseq
  %v5650 = vshrl.u32 %v5649, 7
  %v5651 = vsub.s32 2, %v5650
  %v5652 = vrot.slane %v5532, %v5651
  %v5653 = vlaneseq
  %v5654 = vshrl.u32 %v5653, 7
  %v5655 = vsub.s32 2, %v5654
  %v5656 = vrot.slane %v5540, %v5655
  %v5657 = vsel %vm3056, %v5632, %v5628
  %v5658 = vsel %vm3059, %v5636, %v5657
  %v5659 = vsel %vm3062, %v5640, %v5658
  %v5660 = vsel %vm3056, %v5648, %v5644
  %v5661 = vsel %vm3059, %v5652, %v5660
  %v5662 = vsel %vm3062, %v5656, %v5661
  %5663 = vrot.lane.b32.xlu0 %v5659, 32
  %v5664 = vpop.permute.xlu0 %5663
  %5665 = vrot.lane.b32.xlu0 %v5662, 32
  %v5666 = vpop.permute.xlu0 %5665
  %v5669 = vlaneseq
  %v5670 = vshrl.u32 %v5669, 7
  %v5671 = vsub.s32 3, %v5670
  %v5672 = vrot.slane %v5529, %v5671
  %v5673 = vlaneseq
  %v5674 = vshrl.u32 %v5673, 7
  %v5675 = vsub.s32 3, %v5674
  %v5676 = vrot.slane %v5537, %v5675
  %v5677 = vlaneseq
  %v5678 = vshrl.u32 %v5677, 7
  %v5679 = vsub.s32 3, %v5678
  %v5680 = vrot.slane %v5530, %v5679
  %v5681 = vlaneseq
  %v5682 = vshrl.u32 %v5681, 7
  %v5683 = vsub.s32 3, %v5682
  %v5684 = vrot.slane %v5538, %v5683
  %v5685 = vlaneseq
  %v5686 = vshrl.u32 %v5685, 7
  %v5687 = vsub.s32 3, %v5686
  %v5688 = vrot.slane %v5531, %v5687
  %v5689 = vlaneseq
  %v5690 = vshrl.u32 %v5689, 7
  %v5691 = vsub.s32 3, %v5690
  %v5692 = vrot.slane %v5539, %v5691
  %v5693 = vlaneseq
  %v5694 = vshrl.u32 %v5693, 7
  %v5695 = vsub.s32 3, %v5694
  %v5696 = vrot.slane %v5532, %v5695
  %v5697 = vlaneseq
  %v5698 = vshrl.u32 %v5697, 7
  %v5699 = vsub.s32 3, %v5698
  %v5700 = vrot.slane %v5540, %v5699
  %v5701 = vsel %vm3056, %v5676, %v5672
  %v5702 = vsel %vm3059, %v5680, %v5701
  %v5703 = vsel %vm3062, %v5684, %v5702
  %v5704 = vsel %vm3056, %v5692, %v5688
  %v5705 = vsel %vm3059, %v5696, %v5704
  %v5706 = vsel %vm3062, %v5700, %v5705
  %5707 = vrot.lane.b32.xlu0 %v5703, 48
  %v5708 = vpop.permute.xlu0 %5707
  %5709 = vrot.lane.b32.xlu0 %v5706, 48
  %v5710 = vpop.permute.xlu0 %5709
  %v5713 = vsel %vm824, %v5575, %v5620
  %v5714 = vsel %vm824, %v5578, %v5622
  %v5715 = vsel %vm841, %v5713, %v5664
  %v5716 = vsel %vm841, %v5714, %v5666
  %v5717 = vsel %vm858, %v5715, %v5708
  %v5718 = vsel %vm858, %v5716, %v5710
  %v5721 = vrot.slane %v5718, 7
  %v5722 = vsel %vm3056, %v5721, %v5717
  %v5724 = vrot.slane %v5717, 1
  %v5725 = vsel %vm3056, %v5718, %v5724
  %5726 = vrot.lane.b32.xlu0 %v5725, 64
  %v5727 = vpop.permute.xlu0 %5726
  %v5729 = vrot.slane %v5717, 2
  %v5730 = vrot.slane %v5718, 1
  %v5731 = vsel %vm3056, %v5730, %v5729
  %v5733 = vrot.slane %v5717, 3
  %v5734 = vrot.slane %v5718, 2
  %v5735 = vsel %vm3056, %v5734, %v5733
  %5736 = vrot.lane.b32.xlu0 %v5735, 64
  %v5737 = vpop.permute.xlu0 %5736
  %v5739 = vsel %vm875, %v5722, %v5727
  %v5740 = vsel %vm875, %v5731, %v5737
  %v5743 = vcombine.low %v5739, %v5740
  %v5745 = vunpack.c.l.s4 1983009808
  %v5746 = vunpack.c.0.s8 %v5745
  %v5747 = vlaneseq
  %v5748 = vshrl.u32 %v5747, 7
  %v5749 = vsub.s32 %v5746, %v5748
  %v5750 = vrot.slane %v5743, %v5749
  %5752 = vst [vmem:[%s9] sm:$0xf] %v5750
  // Predicated region
  $region34: #{kdfpn_forward.1} parent=0 // pred_check
    _
  $region35: #{kdfpn_forward.1} parent=0 // pred_check_branch
    %5754 = sbr.rel (0) target = $region37
  $region36: #{kdfpn_forward.1} parent=0 // pred_region
    _
  $region37: #{kdfpn_forward.1} parent=0 // pred_fallthru
    _
  // Predicated region
  $region38: #{kdfpn_forward.1} parent=0 // pred_check
    _
  $region39: #{kdfpn_forward.1} parent=0 // pred_check_branch
    %5756 = sbr.rel (0) target = $region41
  $region40: #{kdfpn_forward.1} parent=0 // pred_region
    _
  $region41: #{kdfpn_forward.1} parent=0 // pred_fallthru
    _
  // Predicated region
  $region42: #{kdfpn_forward.1} parent=0 // pred_check
    _
  $region43: #{kdfpn_forward.1} parent=0 // pred_check_branch
    %5758 = sbr.rel (0) target = $region45
  $region44: #{kdfpn_forward.1} parent=0 // pred_region
    _
  $region45: #{kdfpn_forward.1} parent=0 // pred_fallthru
    _
  // Predicated region
  $region46: #{kdfpn_forward.1} parent=0 // pred_check
    _
  $region47: #{kdfpn_forward.1} parent=0 // pred_check_branch
    %5760 = sbr.rel (0) target = $region49
  $region48: #{kdfpn_forward.1} parent=0 // pred_region
    _
  $region49: #{kdfpn_forward.1} parent=0 // pred_fallthru
    _

</llo_original>
